<compile_context>
chip_gen: v7x
topology: tpu7x:2x2x1
jax: 0.10.0
libtpu: 0.0.40
codegen_flags: <defaults>
</compile_context>

<pallas_src>
import jax
import jax.numpy as jnp
from jax.experimental import pallas as pl
from jax.experimental.pallas import tpu as pltpu

# ----- small ViT configuration (structure of vit_b_16, scaled down) -----
IMG = 16
PATCH = 4
IN_CH = 3
HIDDEN = 32
NUM_HEADS = 4
HEAD_DIM = HIDDEN // NUM_HEADS
MLP_DIM = 64
NUM_LAYERS = 2
NUM_PATCHES = (IMG // PATCH) ** 2        # 16
SEQ_LEN = NUM_PATCHES + 1                # 17 (+1 class token)
T_PAD = 24                               # sequence padded to a multiple of 8 sublanes
PATCH_DIM = IN_CH * PATCH * PATCH        # 48
LN_EPS = 1e-6                            # torchvision ViT uses LayerNorm(eps=1e-6)
NEG_INF = -1e30                          # additive mask for padded key tokens


# =====================  in-kernel helpers  =====================

def _layernorm(x, g, b):
    mu = jnp.mean(x, axis=-1, keepdims=True)
    xc = x - mu
    var = jnp.mean(xc * xc, axis=-1, keepdims=True)
    return xc * jax.lax.rsqrt(var + LN_EPS) * g + b


def _erf(x):
    # TODO(synk): lax.erf lowering inside Mosaic is not guaranteed; exact-GELU's erf is
    # evaluated with the Abramowitz & Stegun 7.1.26 rational approximation (|err| <= 1.5e-7).
    a1, a2, a3, a4, a5 = 0.254829592, -0.284496736, 1.421413741, -1.453152027, 1.061405429
    p = 0.3275911
    ax = jnp.abs(x)
    t = 1.0 / (1.0 + p * ax)
    poly = ((((a5 * t + a4) * t + a3) * t + a2) * t + a1) * t
    y = 1.0 - poly * jnp.exp(-ax * ax)
    return jnp.where(x >= 0, y, -y)


def _gelu(x):  # exact (erf) GELU, matching torch.nn.GELU() default
    return 0.5 * x * (1.0 + _erf(x * 0.7071067811865475))


# =====================  the single fused Pallas kernel  =====================

def _vit_kernel(xp_ref, w_patch_ref, embed_add_ref,
                ln1_g_ref, ln1_b_ref, w_qkv_ref, b_qkv_ref, w_out_ref, b_out_ref,
                ln2_g_ref, ln2_b_ref, w1_ref, b1_ref, w2_ref, b2_ref,
                lnf_g_ref, lnf_b_ref, o_ref):
    """Full ViT backbone forward for one batch element, entirely in VMEM.

    xp_ref holds the patch pixels already scattered to rows 1..NUM_PATCHES of a zero-padded
    (T_PAD, PATCH_DIM) slab, so patch-embed is a single matmul; embed_add carries
    conv bias + class token + positional embedding (zeros at the padded rows).
    """
    # ---- patch embed (+cls/pos/bias, all folded into one additive constant)
    xp = xp_ref[...].astype(jnp.bfloat16)
    h = jnp.dot(xp, w_patch_ref[...], preferred_element_type=jnp.float32) + embed_add_ref[...]

    # additive key-padding mask: 0 for valid key positions, -1e30 for the padded tail
    key_ids = jax.lax.broadcasted_iota(jnp.int32, (1, T_PAD), 1)
    mask_row = jnp.where(key_ids < SEQ_LEN, jnp.float32(0.0), jnp.float32(NEG_INF))

    for l in range(NUM_LAYERS):                       # statically unrolled layer loop
        # ---- attention: LN1 -> fused QKV -> per-head softmax(QK^T)V -> out-proj -> +residual
        y = _layernorm(h, ln1_g_ref[l], ln1_b_ref[l]).astype(jnp.bfloat16)
        qkv = jnp.dot(y, w_qkv_ref[l], preferred_element_type=jnp.float32) + b_qkv_ref[l]
        pv_heads = []
        for hd in range(NUM_HEADS):                   # statically unrolled; Dh = 8
            q = qkv[:, hd * HEAD_DIM:(hd + 1) * HEAD_DIM]
            k = qkv[:, HIDDEN + hd * HEAD_DIM:HIDDEN + (hd + 1) * HEAD_DIM]
            v = qkv[:, 2 * HIDDEN + hd * HEAD_DIM:2 * HIDDEN + (hd + 1) * HEAD_DIM]
            # 1/sqrt(head_dim) is folded into w_qkv / b_qkv (Q part) at prepare_params time.
            s = jnp.einsum("qd,kd->qk", q.astype(jnp.bfloat16), k.astype(jnp.bfloat16),
                           preferred_element_type=jnp.float32) + mask_row
            m = jnp.max(s, axis=-1, keepdims=True)
            p = jnp.exp(s - m)
            p = p * pl.reciprocal(jnp.sum(p, axis=-1, keepdims=True), approx=True)
            pv_heads.append(jnp.dot(p.astype(jnp.bfloat16), v.astype(jnp.bfloat16),
                                    preferred_element_type=jnp.float32))
        pv = jnp.concatenate(pv_heads, axis=-1).astype(jnp.bfloat16)       # (T_PAD, HIDDEN)
        h = h + jnp.dot(pv, w_out_ref[l], preferred_element_type=jnp.float32) + b_out_ref[l]

        # ---- MLP: LN2 -> fc1 -> GELU -> fc2 -> +residual
        z = _layernorm(h, ln2_g_ref[l], ln2_b_ref[l]).astype(jnp.bfloat16)
        z = jnp.dot(z, w1_ref[l], preferred_element_type=jnp.float32) + b1_ref[l]
        z = _gelu(z).astype(jnp.bfloat16)
        z = jnp.dot(z, w2_ref[l], preferred_element_type=jnp.float32) + b2_ref[l]
        h = h + z

    # ---- final encoder LayerNorm (cls / padded rows are dropped by the wrapper slice)
    o_ref[...] = _layernorm(h, lnf_g_ref[...], lnf_b_ref[...])


# =====================  pallas_call wrapper  =====================

def _const_spec(shape):
    return pl.BlockSpec(shape, lambda b: (0,) * len(shape))


def _vit_forward_call(xp, prep, B):
    return pl.pallas_call(
        _vit_kernel,
        out_shape=jax.ShapeDtypeStruct((B * T_PAD, HIDDEN), jnp.float32),
        grid=(B,),
        in_specs=[
            pl.BlockSpec((T_PAD, PATCH_DIM), lambda b: (b, 0)),            # xp (per batch elem)
            _const_spec((PATCH_DIM, HIDDEN)),                              # w_patch
            _const_spec((T_PAD, HIDDEN)),                                  # embed_add
            _const_spec((NUM_LAYERS, 1, HIDDEN)),                          # ln1_g
            _const_spec((NUM_LAYERS, 1, HIDDEN)),                          # ln1_b
            _const_spec((NUM_LAYERS, HIDDEN, 3 * HIDDEN)),                 # w_qkv
            _const_spec((NUM_LAYERS, 1, 3 * HIDDEN)),                      # b_qkv
            _const_spec((NUM_LAYERS, HIDDEN, HIDDEN)),                     # w_out
            _const_spec((NUM_LAYERS, 1, HIDDEN)),                          # b_out
            _const_spec((NUM_LAYERS, 1, HIDDEN)),                          # ln2_g
            _const_spec((NUM_LAYERS, 1, HIDDEN)),                          # ln2_b
            _const_spec((NUM_LAYERS, HIDDEN, MLP_DIM)),                    # w1
            _const_spec((NUM_LAYERS, 1, MLP_DIM)),                         # b1
            _const_spec((NUM_LAYERS, MLP_DIM, HIDDEN)),                    # w2
            _const_spec((NUM_LAYERS, 1, HIDDEN)),                          # b2
            _const_spec((1, HIDDEN)),                                      # final ln_g
            _const_spec((1, HIDDEN)),                                      # final ln_b
        ],
        out_specs=pl.BlockSpec((T_PAD, HIDDEN), lambda b: (b, 0)),
        compiler_params=pltpu.CompilerParams(
            dimension_semantics=("parallel",)),                            # 2 TCs on v7x
    )(xp, prep["w_patch"], prep["embed_add"],
      prep["ln1_g"], prep["ln1_b"], prep["w_qkv"], prep["b_qkv"],
      prep["w_out"], prep["b_out"], prep["ln2_g"], prep["ln2_b"],
      prep["w1"], prep["b1"], prep["w2"], prep["b2"],
      prep["ln_g"], prep["ln_b"])


# =====================  parameters  =====================

def init_params(key):
    """Parameters in PyTorch / torchvision layout (Linear weights stored (out, in))."""
    def nrm(k, shape):
        return 0.02 * jax.random.normal(k, shape, jnp.float32)

    keys = iter(jax.random.split(key, 8 + 8 * NUM_LAYERS))
    params = {
        "conv_w": nrm(next(keys), (HIDDEN, IN_CH, PATCH, PATCH)),   # conv_proj.weight
        "conv_b": nrm(next(keys), (HIDDEN,)),                       # conv_proj.bias
        "cls_token": nrm(next(keys), (1, 1, HIDDEN)),
        "pos_embed": nrm(next(keys), (1, SEQ_LEN, HIDDEN)),
        "ln_g": jnp.ones((HIDDEN,), jnp.float32),                   # encoder.ln
        "ln_b": jnp.zeros((HIDDEN,), jnp.float32),
        "layers": [],
    }
    for _ in range(NUM_LAYERS):
        params["layers"].append({
            "ln1_g": jnp.ones((HIDDEN,), jnp.float32),
            "ln1_b": jnp.zeros((HIDDEN,), jnp.float32),
            "in_proj_w": nrm(next(keys), (3 * HIDDEN, HIDDEN)),     # MHA in_proj_weight
            "in_proj_b": nrm(next(keys), (3 * HIDDEN,)),
            "out_proj_w": nrm(next(keys), (HIDDEN, HIDDEN)),
            "out_proj_b": nrm(next(keys), (HIDDEN,)),
            "ln2_g": jnp.ones((HIDDEN,), jnp.float32),
            "ln2_b": jnp.zeros((HIDDEN,), jnp.float32),
            "fc1_w": nrm(next(keys), (MLP_DIM, HIDDEN)),
            "fc1_b": nrm(next(keys), (MLP_DIM,)),
            "fc2_w": nrm(next(keys), (HIDDEN, MLP_DIM)),
            "fc2_b": nrm(next(keys), (HIDDEN,)),
        })
    return params


def prepare_params(params):
    """One-time conversion of PyTorch-layout weights into kernel-ready layout:
    pre-transposed bf16 matmul weights, a fused (D, 3D) QKV weight / (1, 3D) bias
    (1/sqrt(Dh) folded into the Q columns), conv-bias + cls token + pos-embed folded into a
    single (T_PAD, D) additive constant, and all per-layer tensors stacked with a leading
    layer axis so the whole network is one pallas_call."""
    f32, bf16 = jnp.float32, jnp.bfloat16
    D = HIDDEN
    inv_sqrt = 1.0 / (HEAD_DIM ** 0.5)

    prep = {
        # conv(kernel=P, stride=P) == per-patch linear
        "w_patch": params["conv_w"].reshape(D, PATCH_DIM).T.astype(bf16),
        "ln_g": params["ln_g"].reshape(1, D).astype(f32),
        "ln_b": params["ln_b"].reshape(1, D).astype(f32),
    }
    # embed_add: row 0 = cls + pos[0]; rows 1..P^2 = pos + conv bias; padded tail = 0.
    pos = params["pos_embed"][0]                                    # (SEQ_LEN, D)
    embed_add = jnp.zeros((T_PAD, D), f32)
    embed_add = embed_add.at[0].set(params["cls_token"][0, 0] + pos[0])
    embed_add = embed_add.at[1:SEQ_LEN].set(pos[1:] + params["conv_b"][None, :])
    prep["embed_add"] = embed_add

    per_layer = {k: [] for k in ("ln1_g", "ln1_b", "w_qkv", "b_qkv", "w_out", "b_out",
                                 "ln2_g", "ln2_b", "w1", "b1", "w2", "b2")}
    for lyr in params["layers"]:
        wq, wk, wv = jnp.split(lyr["in_proj_w"], 3, axis=0)         # (D, D) torch (out, in)
        bq, bk, bv = jnp.split(lyr["in_proj_b"], 3, axis=0)
        per_layer["ln1_g"].append(lyr["ln1_g"].reshape(1, D).astype(f32))
        per_layer["ln1_b"].append(lyr["ln1_b"].reshape(1, D).astype(f32))
        per_layer["w_qkv"].append(
            jnp.concatenate([wq.T * inv_sqrt, wk.T, wv.T], axis=1).astype(bf16))   # (D, 3D)
        per_layer["b_qkv"].append(
            jnp.concatenate([bq * inv_sqrt, bk, bv]).reshape(1, 3 * D).astype(f32))
        per_layer["w_out"].append(lyr["out_proj_w"].T.astype(bf16))
        per_layer["b_out"].append(lyr["out_proj_b"].reshape(1, D).astype(f32))
        per_layer["ln2_g"].append(lyr["ln2_g"].reshape(1, D).astype(f32))
        per_layer["ln2_b"].append(lyr["ln2_b"].reshape(1, D).astype(f32))
        per_layer["w1"].append(lyr["fc1_w"].T.astype(bf16))
        per_layer["b1"].append(lyr["fc1_b"].reshape(1, MLP_DIM).astype(f32))
        per_layer["w2"].append(lyr["fc2_w"].T.astype(bf16))
        per_layer["b2"].append(lyr["fc2_b"].reshape(1, D).astype(f32))
    for k, v in per_layer.items():
        prep[k] = jnp.stack(v)                                       # leading NUM_LAYERS axis
    return prep


# =====================  forward  =====================

def vit_backbone_forward(x, prep):
    """x: (B, C, H, W) float32 (NCHW) -> (B, num_patches, HIDDEN).

    Note: ViTBackbone's `return x[:, 1:, :]` implies the backbone yields the full token
    sequence after the final encoder LayerNorm minus the class token; we return exactly that.
    """
    B = x.shape[0]
    Hp = Wp = IMG // PATCH

    # Patch extraction + scatter-to-token-rows is pure layout — plain-JAX glue.
    xp = x.reshape(B, IN_CH, Hp, PATCH, Wp, PATCH).transpose(0, 2, 4, 1, 3, 5)
    xp = xp.reshape(B, NUM_PATCHES, PATCH_DIM)
    # row 0 <- class-token slot (zeros), rows 1..P^2 <- patches, tail rows <- padding (zeros)
    xp = jnp.pad(xp, ((0, 0), (1, T_PAD - 1 - NUM_PATCHES), (0, 0)))
    xp = xp.reshape(B * T_PAD, PATCH_DIM)

    out = _vit_forward_call(xp, prep, B)                 # (B*T_PAD, D), single fused kernel
    out = out.reshape(B, T_PAD, HIDDEN)
    return out[:, 1:SEQ_LEN, :]                          # drop cls + padded rows


if __name__ == "__main__":
    key = jax.random.PRNGKey(0)
    x = jax.random.normal(key, (2, IN_CH, IMG, IMG), dtype=jnp.float32)
    params = init_params(jax.random.PRNGKey(42))
    prep = prepare_params(params)            # one-time weight re-layout (outside the hot path)

    fwd = jax.jit(vit_backbone_forward)
    out = jax.block_until_ready(fwd(x, prep))

    assert out.shape == (2, NUM_PATCHES, HIDDEN), out.shape
    assert bool(jnp.all(jnp.isfinite(out)))
    print("KERNEL_OK")
</pallas_src>

<mosaic_0001>
module attributes {stable_mosaic.version = 11 : i64} {
  func.func @_vit_kernel(%arg0: i32, %arg1: memref<24x48xf32, #tpu.memory_space<vmem>>, %arg2: memref<48x32xbf16, #tpu.memory_space<vmem>>, %arg3: memref<24x32xf32, #tpu.memory_space<vmem>>, %arg4: memref<2x1x32xf32, #tpu.memory_space<vmem>>, %arg5: memref<2x1x32xf32, #tpu.memory_space<vmem>>, %arg6: memref<2x32x96xbf16, #tpu.memory_space<vmem>>, %arg7: memref<2x1x96xf32, #tpu.memory_space<vmem>>, %arg8: memref<2x32x32xbf16, #tpu.memory_space<vmem>>, %arg9: memref<2x1x32xf32, #tpu.memory_space<vmem>>, %arg10: memref<2x1x32xf32, #tpu.memory_space<vmem>>, %arg11: memref<2x1x32xf32, #tpu.memory_space<vmem>>, %arg12: memref<2x32x64xbf16, #tpu.memory_space<vmem>>, %arg13: memref<2x1x64xf32, #tpu.memory_space<vmem>>, %arg14: memref<2x64x32xbf16, #tpu.memory_space<vmem>>, %arg15: memref<2x1x32xf32, #tpu.memory_space<vmem>>, %arg16: memref<1x32xf32, #tpu.memory_space<vmem>>, %arg17: memref<1x32xf32, #tpu.memory_space<vmem>>, %arg18: memref<24x32xf32, #tpu.memory_space<vmem>>) attributes {dimension_semantics = [#tpu.dimension_semantics<parallel>], iteration_bounds = array<i64: 2>, scalar_prefetch = 0 : i64, scratch_operands = 0 : i64, tpu.core_type = #tpu.core_type<tc>, window_params = [{transform_indices = @transform_0, window_bounds = array<i64: 24, 48>}, {pipeline_mode = #tpu.pipeline_mode<synchronous>, transform_indices = @transform_1, window_bounds = array<i64: 48, 32>}, {pipeline_mode = #tpu.pipeline_mode<synchronous>, transform_indices = @transform_2, window_bounds = array<i64: 24, 32>}, {pipeline_mode = #tpu.pipeline_mode<synchronous>, transform_indices = @transform_3, window_bounds = array<i64: 2, 1, 32>}, {pipeline_mode = #tpu.pipeline_mode<synchronous>, transform_indices = @transform_4, window_bounds = array<i64: 2, 1, 32>}, {pipeline_mode = #tpu.pipeline_mode<synchronous>, transform_indices = @transform_5, window_bounds = array<i64: 2, 32, 96>}, {pipeline_mode = #tpu.pipeline_mode<synchronous>, transform_indices = @transform_6, window_bounds = array<i64: 2, 1, 96>}, {pipeline_mode = #tpu.pipeline_mode<synchronous>, transform_indices = @transform_7, window_bounds = array<i64: 2, 32, 32>}, {pipeline_mode = #tpu.pipeline_mode<synchronous>, transform_indices = @transform_8, window_bounds = array<i64: 2, 1, 32>}, {pipeline_mode = #tpu.pipeline_mode<synchronous>, transform_indices = @transform_9, window_bounds = array<i64: 2, 1, 32>}, {pipeline_mode = #tpu.pipeline_mode<synchronous>, transform_indices = @transform_10, window_bounds = array<i64: 2, 1, 32>}, {pipeline_mode = #tpu.pipeline_mode<synchronous>, transform_indices = @transform_11, window_bounds = array<i64: 2, 32, 64>}, {pipeline_mode = #tpu.pipeline_mode<synchronous>, transform_indices = @transform_12, window_bounds = array<i64: 2, 1, 64>}, {pipeline_mode = #tpu.pipeline_mode<synchronous>, transform_indices = @transform_13, window_bounds = array<i64: 2, 64, 32>}, {pipeline_mode = #tpu.pipeline_mode<synchronous>, transform_indices = @transform_14, window_bounds = array<i64: 2, 1, 32>}, {pipeline_mode = #tpu.pipeline_mode<synchronous>, transform_indices = @transform_15, window_bounds = array<i64: 1, 32>}, {pipeline_mode = #tpu.pipeline_mode<synchronous>, transform_indices = @transform_16, window_bounds = array<i64: 1, 32>}, {transform_indices = @transform_17, window_bounds = array<i64: 24, 32>}]} {
    %c0 = arith.constant 0 : index
    %c0_0 = arith.constant 0 : index
    %0 = vector.load %arg1[%c0, %c0_0] : memref<24x48xf32, #tpu.memory_space<vmem>>, vector<24x48xf32>
    %1 = arith.truncf %0 : vector<24x48xf32> to vector<24x48xbf16>
    %c0_1 = arith.constant 0 : index
    %c0_2 = arith.constant 0 : index
    %2 = vector.load %arg2[%c0_1, %c0_2] : memref<48x32xbf16, #tpu.memory_space<vmem>>, vector<48x32xbf16>
    %cst = arith.constant dense<0.000000e+00> : vector<24x32xf32>
    %3 = tpu.matmul %1, %2, %cst {dimension_numbers = #tpu.dot_dimension_numbers<[1], [0], [0], [1], [0, 0, 1, 1], [], []>} : vector<24x48xbf16>, vector<48x32xbf16>, vector<24x32xf32> -> vector<24x32xf32>
    %c0_3 = arith.constant 0 : index
    %c0_4 = arith.constant 0 : index
    %4 = vector.load %arg3[%c0_3, %c0_4] : memref<24x32xf32, #tpu.memory_space<vmem>>, vector<24x32xf32>
    %5 = arith.addf %3, %4 : vector<24x32xf32>
    %6 = tpu.iota {dimensions = array<i32: 1>} : vector<1x24xi32>
    %c17_i32 = arith.constant 17 : i32
    %7 = vector.broadcast %c17_i32 : i32 to vector<1x24xi32>
    %8 = arith.cmpi slt, %6, %7 : vector<1x24xi32>
    %cst_5 = arith.constant 0.000000e+00 : f32
    %cst_6 = arith.constant -1.000000e+30 : f32
    %9 = vector.broadcast %cst_5 : f32 to vector<1x24xf32>
    %10 = vector.broadcast %cst_6 : f32 to vector<1x24xf32>
    %11 = arith.select %8, %9, %10 : vector<1x24xi1>, vector<1x24xf32>
    %c0_7 = arith.constant 0 : index
    %c0_8 = arith.constant 0 : index
    %c0_9 = arith.constant 0 : index
    %12 = vector.load %arg4[%c0_7, %c0_8, %c0_9] : memref<2x1x32xf32, #tpu.memory_space<vmem>>, vector<1x1x32xf32>
    %13 = vector.shape_cast %12 : vector<1x1x32xf32> to vector<1x32xf32>
    %c0_10 = arith.constant 0 : index
    %c0_11 = arith.constant 0 : index
    %c0_12 = arith.constant 0 : index
    %14 = vector.load %arg5[%c0_10, %c0_11, %c0_12] : memref<2x1x32xf32, #tpu.memory_space<vmem>>, vector<1x1x32xf32>
    %15 = vector.shape_cast %14 : vector<1x1x32xf32> to vector<1x32xf32>
    %cst_13 = arith.constant dense<0.000000e+00> : vector<24xf32>
    %16 = vector.multi_reduction <add>, %5, %cst_13 [1] : vector<24x32xf32> to vector<24xf32>
    %17 = vector.shape_cast %16 : vector<24xf32> to vector<24x1xf32>
    %cst_14 = arith.constant 3.200000e+01 : f32
    %18 = vector.broadcast %cst_14 : f32 to vector<24x1xf32>
    %19 = arith.divf %17, %18 : vector<24x1xf32>
    %20 = vector.broadcast %19 : vector<24x1xf32> to vector<24x32xf32>
    %21 = arith.subf %5, %20 : vector<24x32xf32>
    %22 = arith.mulf %21, %21 : vector<24x32xf32>
    %cst_15 = arith.constant dense<0.000000e+00> : vector<24xf32>
    %23 = vector.multi_reduction <add>, %22, %cst_15 [1] : vector<24x32xf32> to vector<24xf32>
    %24 = vector.shape_cast %23 : vector<24xf32> to vector<24x1xf32>
    %cst_16 = arith.constant 3.200000e+01 : f32
    %25 = vector.broadcast %cst_16 : f32 to vector<24x1xf32>
    %26 = arith.divf %24, %25 : vector<24x1xf32>
    %cst_17 = arith.constant 9.99999997E-7 : f32
    %27 = vector.broadcast %cst_17 : f32 to vector<24x1xf32>
    %28 = arith.addf %26, %27 : vector<24x1xf32>
    %29 = math.rsqrt %28 : vector<24x1xf32>
    %30 = vector.broadcast %29 : vector<24x1xf32> to vector<24x32xf32>
    %31 = arith.mulf %21, %30 : vector<24x32xf32>
    %32 = vector.broadcast %13 : vector<1x32xf32> to vector<24x32xf32>
    %33 = arith.mulf %31, %32 : vector<24x32xf32>
    %34 = vector.broadcast %15 : vector<1x32xf32> to vector<24x32xf32>
    %35 = arith.addf %33, %34 : vector<24x32xf32>
    %36 = arith.truncf %35 : vector<24x32xf32> to vector<24x32xbf16>
    %c0_18 = arith.constant 0 : index
    %c0_19 = arith.constant 0 : index
    %c0_20 = arith.constant 0 : index
    %37 = vector.load %arg6[%c0_18, %c0_19, %c0_20] : memref<2x32x96xbf16, #tpu.memory_space<vmem>>, vector<1x32x96xbf16>
    %38 = vector.shape_cast %37 : vector<1x32x96xbf16> to vector<32x96xbf16>
    %cst_21 = arith.constant dense<0.000000e+00> : vector<24x96xf32>
    %39 = tpu.matmul %36, %38, %cst_21 {dimension_numbers = #tpu.dot_dimension_numbers<[1], [0], [0], [1], [0, 0, 1, 1], [], []>} : vector<24x32xbf16>, vector<32x96xbf16>, vector<24x96xf32> -> vector<24x96xf32>
    %c0_22 = arith.constant 0 : index
    %c0_23 = arith.constant 0 : index
    %c0_24 = arith.constant 0 : index
    %40 = vector.load %arg7[%c0_22, %c0_23, %c0_24] : memref<2x1x96xf32, #tpu.memory_space<vmem>>, vector<1x1x96xf32>
    %41 = vector.shape_cast %40 : vector<1x1x96xf32> to vector<1x96xf32>
    %42 = vector.broadcast %41 : vector<1x96xf32> to vector<24x96xf32>
    %43 = arith.addf %39, %42 : vector<24x96xf32>
    %44 = vector.extract_strided_slice %43 {offsets = [0, 0], sizes = [24, 8], strides = [1, 1]} : vector<24x96xf32> to vector<24x8xf32>
    %45 = vector.extract_strided_slice %43 {offsets = [0, 32], sizes = [24, 8], strides = [1, 1]} : vector<24x96xf32> to vector<24x8xf32>
    %46 = vector.extract_strided_slice %43 {offsets = [0, 64], sizes = [24, 8], strides = [1, 1]} : vector<24x96xf32> to vector<24x8xf32>
    %47 = arith.truncf %44 : vector<24x8xf32> to vector<24x8xbf16>
    %48 = arith.truncf %45 : vector<24x8xf32> to vector<24x8xbf16>
    "tpu.trace_start"() <{level = 10 : i32, message = "qd,kd->qk"}> : () -> ()
    %cst_25 = arith.constant dense<0.000000e+00> : vector<24x24xf32>
    %49 = tpu.matmul %47, %48, %cst_25 {dimension_numbers = #tpu.dot_dimension_numbers<[1], [1], [0], [0], [0, 0, 1, 0], [], []>} : vector<24x8xbf16>, vector<24x8xbf16>, vector<24x24xf32> -> vector<24x24xf32>
    "tpu.trace_stop"() : () -> ()
    %50 = vector.broadcast %11 : vector<1x24xf32> to vector<24x24xf32>
    %51 = arith.addf %49, %50 : vector<24x24xf32>
    %cst_26 = arith.constant dense<0xFF800000> : vector<24xf32>
    %52 = vector.multi_reduction <maximumf>, %51, %cst_26 [1] : vector<24x24xf32> to vector<24xf32>
    %53 = vector.shape_cast %52 : vector<24xf32> to vector<24x1xf32>
    %54 = vector.broadcast %53 : vector<24x1xf32> to vector<24x24xf32>
    %55 = arith.subf %51, %54 : vector<24x24xf32>
    %56 = math.exp %55 : vector<24x24xf32>
    %cst_27 = arith.constant dense<0.000000e+00> : vector<24xf32>
    %57 = vector.multi_reduction <add>, %56, %cst_27 [1] : vector<24x24xf32> to vector<24xf32>
    %58 = vector.shape_cast %57 : vector<24xf32> to vector<24x1xf32>
    %59 = tpu.reciprocal %58 {approx = true} : vector<24x1xf32> -> vector<24x1xf32>
    %60 = vector.broadcast %59 : vector<24x1xf32> to vector<24x24xf32>
    %61 = arith.mulf %56, %60 : vector<24x24xf32>
    %62 = arith.truncf %61 : vector<24x24xf32> to vector<24x24xbf16>
    %63 = arith.truncf %46 : vector<24x8xf32> to vector<24x8xbf16>
    %cst_28 = arith.constant dense<0.000000e+00> : vector<24x8xf32>
    %64 = tpu.matmul %62, %63, %cst_28 {dimension_numbers = #tpu.dot_dimension_numbers<[1], [0], [0], [1], [0, 0, 1, 1], [], []>} : vector<24x24xbf16>, vector<24x8xbf16>, vector<24x8xf32> -> vector<24x8xf32>
    %65 = vector.extract_strided_slice %43 {offsets = [0, 8], sizes = [24, 8], strides = [1, 1]} : vector<24x96xf32> to vector<24x8xf32>
    %66 = vector.extract_strided_slice %43 {offsets = [0, 40], sizes = [24, 8], strides = [1, 1]} : vector<24x96xf32> to vector<24x8xf32>
    %67 = vector.extract_strided_slice %43 {offsets = [0, 72], sizes = [24, 8], strides = [1, 1]} : vector<24x96xf32> to vector<24x8xf32>
    %68 = arith.truncf %65 : vector<24x8xf32> to vector<24x8xbf16>
    %69 = arith.truncf %66 : vector<24x8xf32> to vector<24x8xbf16>
    "tpu.trace_start"() <{level = 10 : i32, message = "qd,kd->qk"}> : () -> ()
    %cst_29 = arith.constant dense<0.000000e+00> : vector<24x24xf32>
    %70 = tpu.matmul %68, %69, %cst_29 {dimension_numbers = #tpu.dot_dimension_numbers<[1], [1], [0], [0], [0, 0, 1, 0], [], []>} : vector<24x8xbf16>, vector<24x8xbf16>, vector<24x24xf32> -> vector<24x24xf32>
    "tpu.trace_stop"() : () -> ()
    %71 = vector.broadcast %11 : vector<1x24xf32> to vector<24x24xf32>
    %72 = arith.addf %70, %71 : vector<24x24xf32>
    %cst_30 = arith.constant dense<0xFF800000> : vector<24xf32>
    %73 = vector.multi_reduction <maximumf>, %72, %cst_30 [1] : vector<24x24xf32> to vector<24xf32>
    %74 = vector.shape_cast %73 : vector<24xf32> to vector<24x1xf32>
    %75 = vector.broadcast %74 : vector<24x1xf32> to vector<24x24xf32>
    %76 = arith.subf %72, %75 : vector<24x24xf32>
    %77 = math.exp %76 : vector<24x24xf32>
    %cst_31 = arith.constant dense<0.000000e+00> : vector<24xf32>
    %78 = vector.multi_reduction <add>, %77, %cst_31 [1] : vector<24x24xf32> to vector<24xf32>
    %79 = vector.shape_cast %78 : vector<24xf32> to vector<24x1xf32>
    %80 = tpu.reciprocal %79 {approx = true} : vector<24x1xf32> -> vector<24x1xf32>
    %81 = vector.broadcast %80 : vector<24x1xf32> to vector<24x24xf32>
    %82 = arith.mulf %77, %81 : vector<24x24xf32>
    %83 = arith.truncf %82 : vector<24x24xf32> to vector<24x24xbf16>
    %84 = arith.truncf %67 : vector<24x8xf32> to vector<24x8xbf16>
    %cst_32 = arith.constant dense<0.000000e+00> : vector<24x8xf32>
    %85 = tpu.matmul %83, %84, %cst_32 {dimension_numbers = #tpu.dot_dimension_numbers<[1], [0], [0], [1], [0, 0, 1, 1], [], []>} : vector<24x24xbf16>, vector<24x8xbf16>, vector<24x8xf32> -> vector<24x8xf32>
    %86 = vector.extract_strided_slice %43 {offsets = [0, 16], sizes = [24, 8], strides = [1, 1]} : vector<24x96xf32> to vector<24x8xf32>
    %87 = vector.extract_strided_slice %43 {offsets = [0, 48], sizes = [24, 8], strides = [1, 1]} : vector<24x96xf32> to vector<24x8xf32>
    %88 = vector.extract_strided_slice %43 {offsets = [0, 80], sizes = [24, 8], strides = [1, 1]} : vector<24x96xf32> to vector<24x8xf32>
    %89 = arith.truncf %86 : vector<24x8xf32> to vector<24x8xbf16>
    %90 = arith.truncf %87 : vector<24x8xf32> to vector<24x8xbf16>
    "tpu.trace_start"() <{level = 10 : i32, message = "qd,kd->qk"}> : () -> ()
    %cst_33 = arith.constant dense<0.000000e+00> : vector<24x24xf32>
    %91 = tpu.matmul %89, %90, %cst_33 {dimension_numbers = #tpu.dot_dimension_numbers<[1], [1], [0], [0], [0, 0, 1, 0], [], []>} : vector<24x8xbf16>, vector<24x8xbf16>, vector<24x24xf32> -> vector<24x24xf32>
    "tpu.trace_stop"() : () -> ()
    %92 = vector.broadcast %11 : vector<1x24xf32> to vector<24x24xf32>
    %93 = arith.addf %91, %92 : vector<24x24xf32>
    %cst_34 = arith.constant dense<0xFF800000> : vector<24xf32>
    %94 = vector.multi_reduction <maximumf>, %93, %cst_34 [1] : vector<24x24xf32> to vector<24xf32>
    %95 = vector.shape_cast %94 : vector<24xf32> to vector<24x1xf32>
    %96 = vector.broadcast %95 : vector<24x1xf32> to vector<24x24xf32>
    %97 = arith.subf %93, %96 : vector<24x24xf32>
    %98 = math.exp %97 : vector<24x24xf32>
    %cst_35 = arith.constant dense<0.000000e+00> : vector<24xf32>
    %99 = vector.multi_reduction <add>, %98, %cst_35 [1] : vector<24x24xf32> to vector<24xf32>
    %100 = vector.shape_cast %99 : vector<24xf32> to vector<24x1xf32>
    %101 = tpu.reciprocal %100 {approx = true} : vector<24x1xf32> -> vector<24x1xf32>
    %102 = vector.broadcast %101 : vector<24x1xf32> to vector<24x24xf32>
    %103 = arith.mulf %98, %102 : vector<24x24xf32>
    %104 = arith.truncf %103 : vector<24x24xf32> to vector<24x24xbf16>
    %105 = arith.truncf %88 : vector<24x8xf32> to vector<24x8xbf16>
    %cst_36 = arith.constant dense<0.000000e+00> : vector<24x8xf32>
    %106 = tpu.matmul %104, %105, %cst_36 {dimension_numbers = #tpu.dot_dimension_numbers<[1], [0], [0], [1], [0, 0, 1, 1], [], []>} : vector<24x24xbf16>, vector<24x8xbf16>, vector<24x8xf32> -> vector<24x8xf32>
    %107 = vector.extract_strided_slice %43 {offsets = [0, 24], sizes = [24, 8], strides = [1, 1]} : vector<24x96xf32> to vector<24x8xf32>
    %108 = vector.extract_strided_slice %43 {offsets = [0, 56], sizes = [24, 8], strides = [1, 1]} : vector<24x96xf32> to vector<24x8xf32>
    %109 = vector.extract_strided_slice %43 {offsets = [0, 88], sizes = [24, 8], strides = [1, 1]} : vector<24x96xf32> to vector<24x8xf32>
    %110 = arith.truncf %107 : vector<24x8xf32> to vector<24x8xbf16>
    %111 = arith.truncf %108 : vector<24x8xf32> to vector<24x8xbf16>
    "tpu.trace_start"() <{level = 10 : i32, message = "qd,kd->qk"}> : () -> ()
    %cst_37 = arith.constant dense<0.000000e+00> : vector<24x24xf32>
    %112 = tpu.matmul %110, %111, %cst_37 {dimension_numbers = #tpu.dot_dimension_numbers<[1], [1], [0], [0], [0, 0, 1, 0], [], []>} : vector<24x8xbf16>, vector<24x8xbf16>, vector<24x24xf32> -> vector<24x24xf32>
    "tpu.trace_stop"() : () -> ()
    %113 = vector.broadcast %11 : vector<1x24xf32> to vector<24x24xf32>
    %114 = arith.addf %112, %113 : vector<24x24xf32>
    %cst_38 = arith.constant dense<0xFF800000> : vector<24xf32>
    %115 = vector.multi_reduction <maximumf>, %114, %cst_38 [1] : vector<24x24xf32> to vector<24xf32>
    %116 = vector.shape_cast %115 : vector<24xf32> to vector<24x1xf32>
    %117 = vector.broadcast %116 : vector<24x1xf32> to vector<24x24xf32>
    %118 = arith.subf %114, %117 : vector<24x24xf32>
    %119 = math.exp %118 : vector<24x24xf32>
    %cst_39 = arith.constant dense<0.000000e+00> : vector<24xf32>
    %120 = vector.multi_reduction <add>, %119, %cst_39 [1] : vector<24x24xf32> to vector<24xf32>
    %121 = vector.shape_cast %120 : vector<24xf32> to vector<24x1xf32>
    %122 = tpu.reciprocal %121 {approx = true} : vector<24x1xf32> -> vector<24x1xf32>
    %123 = vector.broadcast %122 : vector<24x1xf32> to vector<24x24xf32>
    %124 = arith.mulf %119, %123 : vector<24x24xf32>
    %125 = arith.truncf %124 : vector<24x24xf32> to vector<24x24xbf16>
    %126 = arith.truncf %109 : vector<24x8xf32> to vector<24x8xbf16>
    %cst_40 = arith.constant dense<0.000000e+00> : vector<24x8xf32>
    %127 = tpu.matmul %125, %126, %cst_40 {dimension_numbers = #tpu.dot_dimension_numbers<[1], [0], [0], [1], [0, 0, 1, 1], [], []>} : vector<24x24xbf16>, vector<24x8xbf16>, vector<24x8xf32> -> vector<24x8xf32>
    %128 = tpu.concatenate %64, %85, %106, %127 in 1 : vector<24x8xf32>, vector<24x8xf32>, vector<24x8xf32>, vector<24x8xf32> -> vector<24x32xf32>
    %129 = arith.truncf %128 : vector<24x32xf32> to vector<24x32xbf16>
    %c0_41 = arith.constant 0 : index
    %c0_42 = arith.constant 0 : index
    %c0_43 = arith.constant 0 : index
    %130 = vector.load %arg8[%c0_41, %c0_42, %c0_43] : memref<2x32x32xbf16, #tpu.memory_space<vmem>>, vector<1x32x32xbf16>
    %131 = vector.shape_cast %130 : vector<1x32x32xbf16> to vector<32x32xbf16>
    %cst_44 = arith.constant dense<0.000000e+00> : vector<24x32xf32>
    %132 = tpu.matmul %129, %131, %cst_44 {dimension_numbers = #tpu.dot_dimension_numbers<[1], [0], [0], [1], [0, 0, 1, 1], [], []>} : vector<24x32xbf16>, vector<32x32xbf16>, vector<24x32xf32> -> vector<24x32xf32>
    %133 = arith.addf %5, %132 : vector<24x32xf32>
    %c0_45 = arith.constant 0 : index
    %c0_46 = arith.constant 0 : index
    %c0_47 = arith.constant 0 : index
    %134 = vector.load %arg9[%c0_45, %c0_46, %c0_47] : memref<2x1x32xf32, #tpu.memory_space<vmem>>, vector<1x1x32xf32>
    %135 = vector.shape_cast %134 : vector<1x1x32xf32> to vector<1x32xf32>
    %136 = vector.broadcast %135 : vector<1x32xf32> to vector<24x32xf32>
    %137 = arith.addf %133, %136 : vector<24x32xf32>
    %c0_48 = arith.constant 0 : index
    %c0_49 = arith.constant 0 : index
    %c0_50 = arith.constant 0 : index
    %138 = vector.load %arg10[%c0_48, %c0_49, %c0_50] : memref<2x1x32xf32, #tpu.memory_space<vmem>>, vector<1x1x32xf32>
    %139 = vector.shape_cast %138 : vector<1x1x32xf32> to vector<1x32xf32>
    %c0_51 = arith.constant 0 : index
    %c0_52 = arith.constant 0 : index
    %c0_53 = arith.constant 0 : index
    %140 = vector.load %arg11[%c0_51, %c0_52, %c0_53] : memref<2x1x32xf32, #tpu.memory_space<vmem>>, vector<1x1x32xf32>
    %141 = vector.shape_cast %140 : vector<1x1x32xf32> to vector<1x32xf32>
    %cst_54 = arith.constant dense<0.000000e+00> : vector<24xf32>
    %142 = vector.multi_reduction <add>, %137, %cst_54 [1] : vector<24x32xf32> to vector<24xf32>
    %143 = vector.shape_cast %142 : vector<24xf32> to vector<24x1xf32>
    %cst_55 = arith.constant 3.200000e+01 : f32
    %144 = vector.broadcast %cst_55 : f32 to vector<24x1xf32>
    %145 = arith.divf %143, %144 : vector<24x1xf32>
    %146 = vector.broadcast %145 : vector<24x1xf32> to vector<24x32xf32>
    %147 = arith.subf %137, %146 : vector<24x32xf32>
    %148 = arith.mulf %147, %147 : vector<24x32xf32>
    %cst_56 = arith.constant dense<0.000000e+00> : vector<24xf32>
    %149 = vector.multi_reduction <add>, %148, %cst_56 [1] : vector<24x32xf32> to vector<24xf32>
    %150 = vector.shape_cast %149 : vector<24xf32> to vector<24x1xf32>
    %cst_57 = arith.constant 3.200000e+01 : f32
    %151 = vector.broadcast %cst_57 : f32 to vector<24x1xf32>
    %152 = arith.divf %150, %151 : vector<24x1xf32>
    %cst_58 = arith.constant 9.99999997E-7 : f32
    %153 = vector.broadcast %cst_58 : f32 to vector<24x1xf32>
    %154 = arith.addf %152, %153 : vector<24x1xf32>
    %155 = math.rsqrt %154 : vector<24x1xf32>
    %156 = vector.broadcast %155 : vector<24x1xf32> to vector<24x32xf32>
    %157 = arith.mulf %147, %156 : vector<24x32xf32>
    %158 = vector.broadcast %139 : vector<1x32xf32> to vector<24x32xf32>
    %159 = arith.mulf %157, %158 : vector<24x32xf32>
    %160 = vector.broadcast %141 : vector<1x32xf32> to vector<24x32xf32>
    %161 = arith.addf %159, %160 : vector<24x32xf32>
    %162 = arith.truncf %161 : vector<24x32xf32> to vector<24x32xbf16>
    %c0_59 = arith.constant 0 : index
    %c0_60 = arith.constant 0 : index
    %c0_61 = arith.constant 0 : index
    %163 = vector.load %arg12[%c0_59, %c0_60, %c0_61] : memref<2x32x64xbf16, #tpu.memory_space<vmem>>, vector<1x32x64xbf16>
    %164 = vector.shape_cast %163 : vector<1x32x64xbf16> to vector<32x64xbf16>
    %cst_62 = arith.constant dense<0.000000e+00> : vector<24x64xf32>
    %165 = tpu.matmul %162, %164, %cst_62 {dimension_numbers = #tpu.dot_dimension_numbers<[1], [0], [0], [1], [0, 0, 1, 1], [], []>} : vector<24x32xbf16>, vector<32x64xbf16>, vector<24x64xf32> -> vector<24x64xf32>
    %c0_63 = arith.constant 0 : index
    %c0_64 = arith.constant 0 : index
    %c0_65 = arith.constant 0 : index
    %166 = vector.load %arg13[%c0_63, %c0_64, %c0_65] : memref<2x1x64xf32, #tpu.memory_space<vmem>>, vector<1x1x64xf32>
    %167 = vector.shape_cast %166 : vector<1x1x64xf32> to vector<1x64xf32>
    %168 = vector.broadcast %167 : vector<1x64xf32> to vector<24x64xf32>
    %169 = arith.addf %165, %168 : vector<24x64xf32>
    %cst_66 = arith.constant 5.000000e-01 : f32
    %170 = vector.broadcast %cst_66 : f32 to vector<24x64xf32>
    %171 = arith.mulf %170, %169 : vector<24x64xf32>
    %cst_67 = arith.constant 0.707106769 : f32
    %172 = vector.broadcast %cst_67 : f32 to vector<24x64xf32>
    %173 = arith.mulf %169, %172 : vector<24x64xf32>
    %174 = math.absf %173 : vector<24x64xf32>
    %cst_68 = arith.constant 0.327591091 : f32
    %175 = vector.broadcast %cst_68 : f32 to vector<24x64xf32>
    %176 = arith.mulf %175, %174 : vector<24x64xf32>
    %cst_69 = arith.constant 1.000000e+00 : f32
    %177 = vector.broadcast %cst_69 : f32 to vector<24x64xf32>
    %178 = arith.addf %177, %176 : vector<24x64xf32>
    %cst_70 = arith.constant 1.000000e+00 : f32
    %179 = vector.broadcast %cst_70 : f32 to vector<24x64xf32>
    %180 = arith.divf %179, %178 : vector<24x64xf32>
    %cst_71 = arith.constant 1.06140542 : f32
    %181 = vector.broadcast %cst_71 : f32 to vector<24x64xf32>
    %182 = arith.mulf %181, %180 : vector<24x64xf32>
    %cst_72 = arith.constant -1.45315206 : f32
    %183 = vector.broadcast %cst_72 : f32 to vector<24x64xf32>
    %184 = arith.addf %182, %183 : vector<24x64xf32>
    %185 = arith.mulf %184, %180 : vector<24x64xf32>
    %cst_73 = arith.constant 1.42141378 : f32
    %186 = vector.broadcast %cst_73 : f32 to vector<24x64xf32>
    %187 = arith.addf %185, %186 : vector<24x64xf32>
    %188 = arith.mulf %187, %180 : vector<24x64xf32>
    %cst_74 = arith.constant -0.284496725 : f32
    %189 = vector.broadcast %cst_74 : f32 to vector<24x64xf32>
    %190 = arith.addf %188, %189 : vector<24x64xf32>
    %191 = arith.mulf %190, %180 : vector<24x64xf32>
    %cst_75 = arith.constant 0.254829586 : f32
    %192 = vector.broadcast %cst_75 : f32 to vector<24x64xf32>
    %193 = arith.addf %191, %192 : vector<24x64xf32>
    %194 = arith.mulf %193, %180 : vector<24x64xf32>
    %cst_76 = arith.constant 0.000000e+00 : f32
    %195 = vector.broadcast %cst_76 : f32 to vector<24x64xf32>
    %196 = arith.subf %195, %174 : vector<24x64xf32>
    %197 = arith.mulf %196, %174 : vector<24x64xf32>
    %198 = math.exp %197 : vector<24x64xf32>
    %199 = arith.mulf %194, %198 : vector<24x64xf32>
    %cst_77 = arith.constant 1.000000e+00 : f32
    %200 = vector.broadcast %cst_77 : f32 to vector<24x64xf32>
    %201 = arith.subf %200, %199 : vector<24x64xf32>
    %cst_78 = arith.constant 0.000000e+00 : f32
    %202 = vector.broadcast %cst_78 : f32 to vector<24x64xf32>
    %203 = arith.cmpf oge, %173, %202 : vector<24x64xf32>
    %cst_79 = arith.constant 0.000000e+00 : f32
    %204 = vector.broadcast %cst_79 : f32 to vector<24x64xf32>
    %205 = arith.subf %204, %201 : vector<24x64xf32>
    %206 = arith.select %203, %201, %205 : vector<24x64xi1>, vector<24x64xf32>
    %cst_80 = arith.constant 1.000000e+00 : f32
    %207 = vector.broadcast %cst_80 : f32 to vector<24x64xf32>
    %208 = arith.addf %207, %206 : vector<24x64xf32>
    %209 = arith.mulf %171, %208 : vector<24x64xf32>
    %210 = arith.truncf %209 : vector<24x64xf32> to vector<24x64xbf16>
    %c0_81 = arith.constant 0 : index
    %c0_82 = arith.constant 0 : index
    %c0_83 = arith.constant 0 : index
    %211 = vector.load %arg14[%c0_81, %c0_82, %c0_83] : memref<2x64x32xbf16, #tpu.memory_space<vmem>>, vector<1x64x32xbf16>
    %212 = vector.shape_cast %211 : vector<1x64x32xbf16> to vector<64x32xbf16>
    %cst_84 = arith.constant dense<0.000000e+00> : vector<24x32xf32>
    %213 = tpu.matmul %210, %212, %cst_84 {dimension_numbers = #tpu.dot_dimension_numbers<[1], [0], [0], [1], [0, 0, 1, 1], [], []>} : vector<24x64xbf16>, vector<64x32xbf16>, vector<24x32xf32> -> vector<24x32xf32>
    %c0_85 = arith.constant 0 : index
    %c0_86 = arith.constant 0 : index
    %c0_87 = arith.constant 0 : index
    %214 = vector.load %arg15[%c0_85, %c0_86, %c0_87] : memref<2x1x32xf32, #tpu.memory_space<vmem>>, vector<1x1x32xf32>
    %215 = vector.shape_cast %214 : vector<1x1x32xf32> to vector<1x32xf32>
    %216 = vector.broadcast %215 : vector<1x32xf32> to vector<24x32xf32>
    %217 = arith.addf %213, %216 : vector<24x32xf32>
    %218 = arith.addf %137, %217 : vector<24x32xf32>
    %c1 = arith.constant 1 : index
    %c0_88 = arith.constant 0 : index
    %c0_89 = arith.constant 0 : index
    %219 = vector.load %arg4[%c1, %c0_88, %c0_89] : memref<2x1x32xf32, #tpu.memory_space<vmem>>, vector<1x1x32xf32>
    %220 = vector.shape_cast %219 : vector<1x1x32xf32> to vector<1x32xf32>
    %c1_90 = arith.constant 1 : index
    %c0_91 = arith.constant 0 : index
    %c0_92 = arith.constant 0 : index
    %221 = vector.load %arg5[%c1_90, %c0_91, %c0_92] : memref<2x1x32xf32, #tpu.memory_space<vmem>>, vector<1x1x32xf32>
    %222 = vector.shape_cast %221 : vector<1x1x32xf32> to vector<1x32xf32>
    %cst_93 = arith.constant dense<0.000000e+00> : vector<24xf32>
    %223 = vector.multi_reduction <add>, %218, %cst_93 [1] : vector<24x32xf32> to vector<24xf32>
    %224 = vector.shape_cast %223 : vector<24xf32> to vector<24x1xf32>
    %cst_94 = arith.constant 3.200000e+01 : f32
    %225 = vector.broadcast %cst_94 : f32 to vector<24x1xf32>
    %226 = arith.divf %224, %225 : vector<24x1xf32>
    %227 = vector.broadcast %226 : vector<24x1xf32> to vector<24x32xf32>
    %228 = arith.subf %218, %227 : vector<24x32xf32>
    %229 = arith.mulf %228, %228 : vector<24x32xf32>
    %cst_95 = arith.constant dense<0.000000e+00> : vector<24xf32>
    %230 = vector.multi_reduction <add>, %229, %cst_95 [1] : vector<24x32xf32> to vector<24xf32>
    %231 = vector.shape_cast %230 : vector<24xf32> to vector<24x1xf32>
    %cst_96 = arith.constant 3.200000e+01 : f32
    %232 = vector.broadcast %cst_96 : f32 to vector<24x1xf32>
    %233 = arith.divf %231, %232 : vector<24x1xf32>
    %cst_97 = arith.constant 9.99999997E-7 : f32
    %234 = vector.broadcast %cst_97 : f32 to vector<24x1xf32>
    %235 = arith.addf %233, %234 : vector<24x1xf32>
    %236 = math.rsqrt %235 : vector<24x1xf32>
    %237 = vector.broadcast %236 : vector<24x1xf32> to vector<24x32xf32>
    %238 = arith.mulf %228, %237 : vector<24x32xf32>
    %239 = vector.broadcast %220 : vector<1x32xf32> to vector<24x32xf32>
    %240 = arith.mulf %238, %239 : vector<24x32xf32>
    %241 = vector.broadcast %222 : vector<1x32xf32> to vector<24x32xf32>
    %242 = arith.addf %240, %241 : vector<24x32xf32>
    %243 = arith.truncf %242 : vector<24x32xf32> to vector<24x32xbf16>
    %c1_98 = arith.constant 1 : index
    %c0_99 = arith.constant 0 : index
    %c0_100 = arith.constant 0 : index
    %244 = vector.load %arg6[%c1_98, %c0_99, %c0_100] : memref<2x32x96xbf16, #tpu.memory_space<vmem>>, vector<1x32x96xbf16>
    %245 = vector.shape_cast %244 : vector<1x32x96xbf16> to vector<32x96xbf16>
    %cst_101 = arith.constant dense<0.000000e+00> : vector<24x96xf32>
    %246 = tpu.matmul %243, %245, %cst_101 {dimension_numbers = #tpu.dot_dimension_numbers<[1], [0], [0], [1], [0, 0, 1, 1], [], []>} : vector<24x32xbf16>, vector<32x96xbf16>, vector<24x96xf32> -> vector<24x96xf32>
    %c1_102 = arith.constant 1 : index
    %c0_103 = arith.constant 0 : index
    %c0_104 = arith.constant 0 : index
    %247 = vector.load %arg7[%c1_102, %c0_103, %c0_104] : memref<2x1x96xf32, #tpu.memory_space<vmem>>, vector<1x1x96xf32>
    %248 = vector.shape_cast %247 : vector<1x1x96xf32> to vector<1x96xf32>
    %249 = vector.broadcast %248 : vector<1x96xf32> to vector<24x96xf32>
    %250 = arith.addf %246, %249 : vector<24x96xf32>
    %251 = vector.extract_strided_slice %250 {offsets = [0, 0], sizes = [24, 8], strides = [1, 1]} : vector<24x96xf32> to vector<24x8xf32>
    %252 = vector.extract_strided_slice %250 {offsets = [0, 32], sizes = [24, 8], strides = [1, 1]} : vector<24x96xf32> to vector<24x8xf32>
    %253 = vector.extract_strided_slice %250 {offsets = [0, 64], sizes = [24, 8], strides = [1, 1]} : vector<24x96xf32> to vector<24x8xf32>
    %254 = arith.truncf %251 : vector<24x8xf32> to vector<24x8xbf16>
    %255 = arith.truncf %252 : vector<24x8xf32> to vector<24x8xbf16>
    "tpu.trace_start"() <{level = 10 : i32, message = "qd,kd->qk"}> : () -> ()
    %cst_105 = arith.constant dense<0.000000e+00> : vector<24x24xf32>
    %256 = tpu.matmul %254, %255, %cst_105 {dimension_numbers = #tpu.dot_dimension_numbers<[1], [1], [0], [0], [0, 0, 1, 0], [], []>} : vector<24x8xbf16>, vector<24x8xbf16>, vector<24x24xf32> -> vector<24x24xf32>
    "tpu.trace_stop"() : () -> ()
    %257 = vector.broadcast %11 : vector<1x24xf32> to vector<24x24xf32>
    %258 = arith.addf %256, %257 : vector<24x24xf32>
    %cst_106 = arith.constant dense<0xFF800000> : vector<24xf32>
    %259 = vector.multi_reduction <maximumf>, %258, %cst_106 [1] : vector<24x24xf32> to vector<24xf32>
    %260 = vector.shape_cast %259 : vector<24xf32> to vector<24x1xf32>
    %261 = vector.broadcast %260 : vector<24x1xf32> to vector<24x24xf32>
    %262 = arith.subf %258, %261 : vector<24x24xf32>
    %263 = math.exp %262 : vector<24x24xf32>
    %cst_107 = arith.constant dense<0.000000e+00> : vector<24xf32>
    %264 = vector.multi_reduction <add>, %263, %cst_107 [1] : vector<24x24xf32> to vector<24xf32>
    %265 = vector.shape_cast %264 : vector<24xf32> to vector<24x1xf32>
    %266 = tpu.reciprocal %265 {approx = true} : vector<24x1xf32> -> vector<24x1xf32>
    %267 = vector.broadcast %266 : vector<24x1xf32> to vector<24x24xf32>
    %268 = arith.mulf %263, %267 : vector<24x24xf32>
    %269 = arith.truncf %268 : vector<24x24xf32> to vector<24x24xbf16>
    %270 = arith.truncf %253 : vector<24x8xf32> to vector<24x8xbf16>
    %cst_108 = arith.constant dense<0.000000e+00> : vector<24x8xf32>
    %271 = tpu.matmul %269, %270, %cst_108 {dimension_numbers = #tpu.dot_dimension_numbers<[1], [0], [0], [1], [0, 0, 1, 1], [], []>} : vector<24x24xbf16>, vector<24x8xbf16>, vector<24x8xf32> -> vector<24x8xf32>
    %272 = vector.extract_strided_slice %250 {offsets = [0, 8], sizes = [24, 8], strides = [1, 1]} : vector<24x96xf32> to vector<24x8xf32>
    %273 = vector.extract_strided_slice %250 {offsets = [0, 40], sizes = [24, 8], strides = [1, 1]} : vector<24x96xf32> to vector<24x8xf32>
    %274 = vector.extract_strided_slice %250 {offsets = [0, 72], sizes = [24, 8], strides = [1, 1]} : vector<24x96xf32> to vector<24x8xf32>
    %275 = arith.truncf %272 : vector<24x8xf32> to vector<24x8xbf16>
    %276 = arith.truncf %273 : vector<24x8xf32> to vector<24x8xbf16>
    "tpu.trace_start"() <{level = 10 : i32, message = "qd,kd->qk"}> : () -> ()
    %cst_109 = arith.constant dense<0.000000e+00> : vector<24x24xf32>
    %277 = tpu.matmul %275, %276, %cst_109 {dimension_numbers = #tpu.dot_dimension_numbers<[1], [1], [0], [0], [0, 0, 1, 0], [], []>} : vector<24x8xbf16>, vector<24x8xbf16>, vector<24x24xf32> -> vector<24x24xf32>
    "tpu.trace_stop"() : () -> ()
    %278 = vector.broadcast %11 : vector<1x24xf32> to vector<24x24xf32>
    %279 = arith.addf %277, %278 : vector<24x24xf32>
    %cst_110 = arith.constant dense<0xFF800000> : vector<24xf32>
    %280 = vector.multi_reduction <maximumf>, %279, %cst_110 [1] : vector<24x24xf32> to vector<24xf32>
    %281 = vector.shape_cast %280 : vector<24xf32> to vector<24x1xf32>
    %282 = vector.broadcast %281 : vector<24x1xf32> to vector<24x24xf32>
    %283 = arith.subf %279, %282 : vector<24x24xf32>
    %284 = math.exp %283 : vector<24x24xf32>
    %cst_111 = arith.constant dense<0.000000e+00> : vector<24xf32>
    %285 = vector.multi_reduction <add>, %284, %cst_111 [1] : vector<24x24xf32> to vector<24xf32>
    %286 = vector.shape_cast %285 : vector<24xf32> to vector<24x1xf32>
    %287 = tpu.reciprocal %286 {approx = true} : vector<24x1xf32> -> vector<24x1xf32>
    %288 = vector.broadcast %287 : vector<24x1xf32> to vector<24x24xf32>
    %289 = arith.mulf %284, %288 : vector<24x24xf32>
    %290 = arith.truncf %289 : vector<24x24xf32> to vector<24x24xbf16>
    %291 = arith.truncf %274 : vector<24x8xf32> to vector<24x8xbf16>
    %cst_112 = arith.constant dense<0.000000e+00> : vector<24x8xf32>
    %292 = tpu.matmul %290, %291, %cst_112 {dimension_numbers = #tpu.dot_dimension_numbers<[1], [0], [0], [1], [0, 0, 1, 1], [], []>} : vector<24x24xbf16>, vector<24x8xbf16>, vector<24x8xf32> -> vector<24x8xf32>
    %293 = vector.extract_strided_slice %250 {offsets = [0, 16], sizes = [24, 8], strides = [1, 1]} : vector<24x96xf32> to vector<24x8xf32>
    %294 = vector.extract_strided_slice %250 {offsets = [0, 48], sizes = [24, 8], strides = [1, 1]} : vector<24x96xf32> to vector<24x8xf32>
    %295 = vector.extract_strided_slice %250 {offsets = [0, 80], sizes = [24, 8], strides = [1, 1]} : vector<24x96xf32> to vector<24x8xf32>
    %296 = arith.truncf %293 : vector<24x8xf32> to vector<24x8xbf16>
    %297 = arith.truncf %294 : vector<24x8xf32> to vector<24x8xbf16>
    "tpu.trace_start"() <{level = 10 : i32, message = "qd,kd->qk"}> : () -> ()
    %cst_113 = arith.constant dense<0.000000e+00> : vector<24x24xf32>
    %298 = tpu.matmul %296, %297, %cst_113 {dimension_numbers = #tpu.dot_dimension_numbers<[1], [1], [0], [0], [0, 0, 1, 0], [], []>} : vector<24x8xbf16>, vector<24x8xbf16>, vector<24x24xf32> -> vector<24x24xf32>
    "tpu.trace_stop"() : () -> ()
    %299 = vector.broadcast %11 : vector<1x24xf32> to vector<24x24xf32>
    %300 = arith.addf %298, %299 : vector<24x24xf32>
    %cst_114 = arith.constant dense<0xFF800000> : vector<24xf32>
    %301 = vector.multi_reduction <maximumf>, %300, %cst_114 [1] : vector<24x24xf32> to vector<24xf32>
    %302 = vector.shape_cast %301 : vector<24xf32> to vector<24x1xf32>
    %303 = vector.broadcast %302 : vector<24x1xf32> to vector<24x24xf32>
    %304 = arith.subf %300, %303 : vector<24x24xf32>
    %305 = math.exp %304 : vector<24x24xf32>
    %cst_115 = arith.constant dense<0.000000e+00> : vector<24xf32>
    %306 = vector.multi_reduction <add>, %305, %cst_115 [1] : vector<24x24xf32> to vector<24xf32>
    %307 = vector.shape_cast %306 : vector<24xf32> to vector<24x1xf32>
    %308 = tpu.reciprocal %307 {approx = true} : vector<24x1xf32> -> vector<24x1xf32>
    %309 = vector.broadcast %308 : vector<24x1xf32> to vector<24x24xf32>
    %310 = arith.mulf %305, %309 : vector<24x24xf32>
    %311 = arith.truncf %310 : vector<24x24xf32> to vector<24x24xbf16>
    %312 = arith.truncf %295 : vector<24x8xf32> to vector<24x8xbf16>
    %cst_116 = arith.constant dense<0.000000e+00> : vector<24x8xf32>
    %313 = tpu.matmul %311, %312, %cst_116 {dimension_numbers = #tpu.dot_dimension_numbers<[1], [0], [0], [1], [0, 0, 1, 1], [], []>} : vector<24x24xbf16>, vector<24x8xbf16>, vector<24x8xf32> -> vector<24x8xf32>
    %314 = vector.extract_strided_slice %250 {offsets = [0, 24], sizes = [24, 8], strides = [1, 1]} : vector<24x96xf32> to vector<24x8xf32>
    %315 = vector.extract_strided_slice %250 {offsets = [0, 56], sizes = [24, 8], strides = [1, 1]} : vector<24x96xf32> to vector<24x8xf32>
    %316 = vector.extract_strided_slice %250 {offsets = [0, 88], sizes = [24, 8], strides = [1, 1]} : vector<24x96xf32> to vector<24x8xf32>
    %317 = arith.truncf %314 : vector<24x8xf32> to vector<24x8xbf16>
    %318 = arith.truncf %315 : vector<24x8xf32> to vector<24x8xbf16>
    "tpu.trace_start"() <{level = 10 : i32, message = "qd,kd->qk"}> : () -> ()
    %cst_117 = arith.constant dense<0.000000e+00> : vector<24x24xf32>
    %319 = tpu.matmul %317, %318, %cst_117 {dimension_numbers = #tpu.dot_dimension_numbers<[1], [1], [0], [0], [0, 0, 1, 0], [], []>} : vector<24x8xbf16>, vector<24x8xbf16>, vector<24x24xf32> -> vector<24x24xf32>
    "tpu.trace_stop"() : () -> ()
    %320 = vector.broadcast %11 : vector<1x24xf32> to vector<24x24xf32>
    %321 = arith.addf %319, %320 : vector<24x24xf32>
    %cst_118 = arith.constant dense<0xFF800000> : vector<24xf32>
    %322 = vector.multi_reduction <maximumf>, %321, %cst_118 [1] : vector<24x24xf32> to vector<24xf32>
    %323 = vector.shape_cast %322 : vector<24xf32> to vector<24x1xf32>
    %324 = vector.broadcast %323 : vector<24x1xf32> to vector<24x24xf32>
    %325 = arith.subf %321, %324 : vector<24x24xf32>
    %326 = math.exp %325 : vector<24x24xf32>
    %cst_119 = arith.constant dense<0.000000e+00> : vector<24xf32>
    %327 = vector.multi_reduction <add>, %326, %cst_119 [1] : vector<24x24xf32> to vector<24xf32>
    %328 = vector.shape_cast %327 : vector<24xf32> to vector<24x1xf32>
    %329 = tpu.reciprocal %328 {approx = true} : vector<24x1xf32> -> vector<24x1xf32>
    %330 = vector.broadcast %329 : vector<24x1xf32> to vector<24x24xf32>
    %331 = arith.mulf %326, %330 : vector<24x24xf32>
    %332 = arith.truncf %331 : vector<24x24xf32> to vector<24x24xbf16>
    %333 = arith.truncf %316 : vector<24x8xf32> to vector<24x8xbf16>
    %cst_120 = arith.constant dense<0.000000e+00> : vector<24x8xf32>
    %334 = tpu.matmul %332, %333, %cst_120 {dimension_numbers = #tpu.dot_dimension_numbers<[1], [0], [0], [1], [0, 0, 1, 1], [], []>} : vector<24x24xbf16>, vector<24x8xbf16>, vector<24x8xf32> -> vector<24x8xf32>
    %335 = tpu.concatenate %271, %292, %313, %334 in 1 : vector<24x8xf32>, vector<24x8xf32>, vector<24x8xf32>, vector<24x8xf32> -> vector<24x32xf32>
    %336 = arith.truncf %335 : vector<24x32xf32> to vector<24x32xbf16>
    %c1_121 = arith.constant 1 : index
    %c0_122 = arith.constant 0 : index
    %c0_123 = arith.constant 0 : index
    %337 = vector.load %arg8[%c1_121, %c0_122, %c0_123] : memref<2x32x32xbf16, #tpu.memory_space<vmem>>, vector<1x32x32xbf16>
    %338 = vector.shape_cast %337 : vector<1x32x32xbf16> to vector<32x32xbf16>
    %cst_124 = arith.constant dense<0.000000e+00> : vector<24x32xf32>
    %339 = tpu.matmul %336, %338, %cst_124 {dimension_numbers = #tpu.dot_dimension_numbers<[1], [0], [0], [1], [0, 0, 1, 1], [], []>} : vector<24x32xbf16>, vector<32x32xbf16>, vector<24x32xf32> -> vector<24x32xf32>
    %340 = arith.addf %218, %339 : vector<24x32xf32>
    %c1_125 = arith.constant 1 : index
    %c0_126 = arith.constant 0 : index
    %c0_127 = arith.constant 0 : index
    %341 = vector.load %arg9[%c1_125, %c0_126, %c0_127] : memref<2x1x32xf32, #tpu.memory_space<vmem>>, vector<1x1x32xf32>
    %342 = vector.shape_cast %341 : vector<1x1x32xf32> to vector<1x32xf32>
    %343 = vector.broadcast %342 : vector<1x32xf32> to vector<24x32xf32>
    %344 = arith.addf %340, %343 : vector<24x32xf32>
    %c1_128 = arith.constant 1 : index
    %c0_129 = arith.constant 0 : index
    %c0_130 = arith.constant 0 : index
    %345 = vector.load %arg10[%c1_128, %c0_129, %c0_130] : memref<2x1x32xf32, #tpu.memory_space<vmem>>, vector<1x1x32xf32>
    %346 = vector.shape_cast %345 : vector<1x1x32xf32> to vector<1x32xf32>
    %c1_131 = arith.constant 1 : index
    %c0_132 = arith.constant 0 : index
    %c0_133 = arith.constant 0 : index
    %347 = vector.load %arg11[%c1_131, %c0_132, %c0_133] : memref<2x1x32xf32, #tpu.memory_space<vmem>>, vector<1x1x32xf32>
    %348 = vector.shape_cast %347 : vector<1x1x32xf32> to vector<1x32xf32>
    %cst_134 = arith.constant dense<0.000000e+00> : vector<24xf32>
    %349 = vector.multi_reduction <add>, %344, %cst_134 [1] : vector<24x32xf32> to vector<24xf32>
    %350 = vector.shape_cast %349 : vector<24xf32> to vector<24x1xf32>
    %cst_135 = arith.constant 3.200000e+01 : f32
    %351 = vector.broadcast %cst_135 : f32 to vector<24x1xf32>
    %352 = arith.divf %350, %351 : vector<24x1xf32>
    %353 = vector.broadcast %352 : vector<24x1xf32> to vector<24x32xf32>
    %354 = arith.subf %344, %353 : vector<24x32xf32>
    %355 = arith.mulf %354, %354 : vector<24x32xf32>
    %cst_136 = arith.constant dense<0.000000e+00> : vector<24xf32>
    %356 = vector.multi_reduction <add>, %355, %cst_136 [1] : vector<24x32xf32> to vector<24xf32>
    %357 = vector.shape_cast %356 : vector<24xf32> to vector<24x1xf32>
    %cst_137 = arith.constant 3.200000e+01 : f32
    %358 = vector.broadcast %cst_137 : f32 to vector<24x1xf32>
    %359 = arith.divf %357, %358 : vector<24x1xf32>
    %cst_138 = arith.constant 9.99999997E-7 : f32
    %360 = vector.broadcast %cst_138 : f32 to vector<24x1xf32>
    %361 = arith.addf %359, %360 : vector<24x1xf32>
    %362 = math.rsqrt %361 : vector<24x1xf32>
    %363 = vector.broadcast %362 : vector<24x1xf32> to vector<24x32xf32>
    %364 = arith.mulf %354, %363 : vector<24x32xf32>
    %365 = vector.broadcast %346 : vector<1x32xf32> to vector<24x32xf32>
    %366 = arith.mulf %364, %365 : vector<24x32xf32>
    %367 = vector.broadcast %348 : vector<1x32xf32> to vector<24x32xf32>
    %368 = arith.addf %366, %367 : vector<24x32xf32>
    %369 = arith.truncf %368 : vector<24x32xf32> to vector<24x32xbf16>
    %c1_139 = arith.constant 1 : index
    %c0_140 = arith.constant 0 : index
    %c0_141 = arith.constant 0 : index
    %370 = vector.load %arg12[%c1_139, %c0_140, %c0_141] : memref<2x32x64xbf16, #tpu.memory_space<vmem>>, vector<1x32x64xbf16>
    %371 = vector.shape_cast %370 : vector<1x32x64xbf16> to vector<32x64xbf16>
    %cst_142 = arith.constant dense<0.000000e+00> : vector<24x64xf32>
    %372 = tpu.matmul %369, %371, %cst_142 {dimension_numbers = #tpu.dot_dimension_numbers<[1], [0], [0], [1], [0, 0, 1, 1], [], []>} : vector<24x32xbf16>, vector<32x64xbf16>, vector<24x64xf32> -> vector<24x64xf32>
    %c1_143 = arith.constant 1 : index
    %c0_144 = arith.constant 0 : index
    %c0_145 = arith.constant 0 : index
    %373 = vector.load %arg13[%c1_143, %c0_144, %c0_145] : memref<2x1x64xf32, #tpu.memory_space<vmem>>, vector<1x1x64xf32>
    %374 = vector.shape_cast %373 : vector<1x1x64xf32> to vector<1x64xf32>
    %375 = vector.broadcast %374 : vector<1x64xf32> to vector<24x64xf32>
    %376 = arith.addf %372, %375 : vector<24x64xf32>
    %cst_146 = arith.constant 5.000000e-01 : f32
    %377 = vector.broadcast %cst_146 : f32 to vector<24x64xf32>
    %378 = arith.mulf %377, %376 : vector<24x64xf32>
    %cst_147 = arith.constant 0.707106769 : f32
    %379 = vector.broadcast %cst_147 : f32 to vector<24x64xf32>
    %380 = arith.mulf %376, %379 : vector<24x64xf32>
    %381 = math.absf %380 : vector<24x64xf32>
    %cst_148 = arith.constant 0.327591091 : f32
    %382 = vector.broadcast %cst_148 : f32 to vector<24x64xf32>
    %383 = arith.mulf %382, %381 : vector<24x64xf32>
    %cst_149 = arith.constant 1.000000e+00 : f32
    %384 = vector.broadcast %cst_149 : f32 to vector<24x64xf32>
    %385 = arith.addf %384, %383 : vector<24x64xf32>
    %cst_150 = arith.constant 1.000000e+00 : f32
    %386 = vector.broadcast %cst_150 : f32 to vector<24x64xf32>
    %387 = arith.divf %386, %385 : vector<24x64xf32>
    %cst_151 = arith.constant 1.06140542 : f32
    %388 = vector.broadcast %cst_151 : f32 to vector<24x64xf32>
    %389 = arith.mulf %388, %387 : vector<24x64xf32>
    %cst_152 = arith.constant -1.45315206 : f32
    %390 = vector.broadcast %cst_152 : f32 to vector<24x64xf32>
    %391 = arith.addf %389, %390 : vector<24x64xf32>
    %392 = arith.mulf %391, %387 : vector<24x64xf32>
    %cst_153 = arith.constant 1.42141378 : f32
    %393 = vector.broadcast %cst_153 : f32 to vector<24x64xf32>
    %394 = arith.addf %392, %393 : vector<24x64xf32>
    %395 = arith.mulf %394, %387 : vector<24x64xf32>
    %cst_154 = arith.constant -0.284496725 : f32
    %396 = vector.broadcast %cst_154 : f32 to vector<24x64xf32>
    %397 = arith.addf %395, %396 : vector<24x64xf32>
    %398 = arith.mulf %397, %387 : vector<24x64xf32>
    %cst_155 = arith.constant 0.254829586 : f32
    %399 = vector.broadcast %cst_155 : f32 to vector<24x64xf32>
    %400 = arith.addf %398, %399 : vector<24x64xf32>
    %401 = arith.mulf %400, %387 : vector<24x64xf32>
    %cst_156 = arith.constant 0.000000e+00 : f32
    %402 = vector.broadcast %cst_156 : f32 to vector<24x64xf32>
    %403 = arith.subf %402, %381 : vector<24x64xf32>
    %404 = arith.mulf %403, %381 : vector<24x64xf32>
    %405 = math.exp %404 : vector<24x64xf32>
    %406 = arith.mulf %401, %405 : vector<24x64xf32>
    %cst_157 = arith.constant 1.000000e+00 : f32
    %407 = vector.broadcast %cst_157 : f32 to vector<24x64xf32>
    %408 = arith.subf %407, %406 : vector<24x64xf32>
    %cst_158 = arith.constant 0.000000e+00 : f32
    %409 = vector.broadcast %cst_158 : f32 to vector<24x64xf32>
    %410 = arith.cmpf oge, %380, %409 : vector<24x64xf32>
    %cst_159 = arith.constant 0.000000e+00 : f32
    %411 = vector.broadcast %cst_159 : f32 to vector<24x64xf32>
    %412 = arith.subf %411, %408 : vector<24x64xf32>
    %413 = arith.select %410, %408, %412 : vector<24x64xi1>, vector<24x64xf32>
    %cst_160 = arith.constant 1.000000e+00 : f32
    %414 = vector.broadcast %cst_160 : f32 to vector<24x64xf32>
    %415 = arith.addf %414, %413 : vector<24x64xf32>
    %416 = arith.mulf %378, %415 : vector<24x64xf32>
    %417 = arith.truncf %416 : vector<24x64xf32> to vector<24x64xbf16>
    %c1_161 = arith.constant 1 : index
    %c0_162 = arith.constant 0 : index
    %c0_163 = arith.constant 0 : index
    %418 = vector.load %arg14[%c1_161, %c0_162, %c0_163] : memref<2x64x32xbf16, #tpu.memory_space<vmem>>, vector<1x64x32xbf16>
    %419 = vector.shape_cast %418 : vector<1x64x32xbf16> to vector<64x32xbf16>
    %cst_164 = arith.constant dense<0.000000e+00> : vector<24x32xf32>
    %420 = tpu.matmul %417, %419, %cst_164 {dimension_numbers = #tpu.dot_dimension_numbers<[1], [0], [0], [1], [0, 0, 1, 1], [], []>} : vector<24x64xbf16>, vector<64x32xbf16>, vector<24x32xf32> -> vector<24x32xf32>
    %c1_165 = arith.constant 1 : index
    %c0_166 = arith.constant 0 : index
    %c0_167 = arith.constant 0 : index
    %421 = vector.load %arg15[%c1_165, %c0_166, %c0_167] : memref<2x1x32xf32, #tpu.memory_space<vmem>>, vector<1x1x32xf32>
    %422 = vector.shape_cast %421 : vector<1x1x32xf32> to vector<1x32xf32>
    %423 = vector.broadcast %422 : vector<1x32xf32> to vector<24x32xf32>
    %424 = arith.addf %420, %423 : vector<24x32xf32>
    %425 = arith.addf %344, %424 : vector<24x32xf32>
    %c0_168 = arith.constant 0 : index
    %c0_169 = arith.constant 0 : index
    %426 = vector.load %arg16[%c0_168, %c0_169] : memref<1x32xf32, #tpu.memory_space<vmem>>, vector<1x32xf32>
    %c0_170 = arith.constant 0 : index
    %c0_171 = arith.constant 0 : index
    %427 = vector.load %arg17[%c0_170, %c0_171] : memref<1x32xf32, #tpu.memory_space<vmem>>, vector<1x32xf32>
    %cst_172 = arith.constant dense<0.000000e+00> : vector<24xf32>
    %428 = vector.multi_reduction <add>, %425, %cst_172 [1] : vector<24x32xf32> to vector<24xf32>
    %429 = vector.shape_cast %428 : vector<24xf32> to vector<24x1xf32>
    %cst_173 = arith.constant 3.200000e+01 : f32
    %430 = vector.broadcast %cst_173 : f32 to vector<24x1xf32>
    %431 = arith.divf %429, %430 : vector<24x1xf32>
    %432 = vector.broadcast %431 : vector<24x1xf32> to vector<24x32xf32>
    %433 = arith.subf %425, %432 : vector<24x32xf32>
    %434 = arith.mulf %433, %433 : vector<24x32xf32>
    %cst_174 = arith.constant dense<0.000000e+00> : vector<24xf32>
    %435 = vector.multi_reduction <add>, %434, %cst_174 [1] : vector<24x32xf32> to vector<24xf32>
    %436 = vector.shape_cast %435 : vector<24xf32> to vector<24x1xf32>
    %cst_175 = arith.constant 3.200000e+01 : f32
    %437 = vector.broadcast %cst_175 : f32 to vector<24x1xf32>
    %438 = arith.divf %436, %437 : vector<24x1xf32>
    %cst_176 = arith.constant 9.99999997E-7 : f32
    %439 = vector.broadcast %cst_176 : f32 to vector<24x1xf32>
    %440 = arith.addf %438, %439 : vector<24x1xf32>
    %441 = math.rsqrt %440 : vector<24x1xf32>
    %442 = vector.broadcast %441 : vector<24x1xf32> to vector<24x32xf32>
    %443 = arith.mulf %433, %442 : vector<24x32xf32>
    %444 = vector.broadcast %426 : vector<1x32xf32> to vector<24x32xf32>
    %445 = arith.mulf %443, %444 : vector<24x32xf32>
    %446 = vector.broadcast %427 : vector<1x32xf32> to vector<24x32xf32>
    %447 = arith.addf %445, %446 : vector<24x32xf32>
    %c0_177 = arith.constant 0 : index
    %c0_178 = arith.constant 0 : index
    %448 = vector.load %arg18[%c0_177, %c0_178] : memref<24x32xf32, #tpu.memory_space<vmem>>, vector<24x32xf32>
    tpu.vector_store %arg18[%c0_177, %c0_178], %447 {strides = array<i32>} : memref<24x32xf32, #tpu.memory_space<vmem>>, vector<24x32xf32>,
    return
  }
  func.func @transform_0(%arg0: i32) -> (i32, i32) {
    %c0_i32 = arith.constant 0 : i32
    %c0_i32_0 = arith.constant 0 : i32
    return %arg0, %c0_i32 : i32, i32
  }
  func.func @transform_1(%arg0: i32) -> (i32, i32) {
    %c0_i32 = arith.constant 0 : i32
    %c0_i32_0 = arith.constant 0 : i32
    %c0_i32_1 = arith.constant 0 : i32
    return %c0_i32, %c0_i32_0 : i32, i32
  }
  func.func @transform_2(%arg0: i32) -> (i32, i32) {
    %c0_i32 = arith.constant 0 : i32
    %c0_i32_0 = arith.constant 0 : i32
    %c0_i32_1 = arith.constant 0 : i32
    return %c0_i32, %c0_i32_0 : i32, i32
  }
  func.func @transform_3(%arg0: i32) -> (i32, i32, i32) {
    %c0_i32 = arith.constant 0 : i32
    %c0_i32_0 = arith.constant 0 : i32
    %c0_i32_1 = arith.constant 0 : i32
    %c0_i32_2 = arith.constant 0 : i32
    return %c0_i32, %c0_i32_0, %c0_i32_1 : i32, i32, i32
  }
  func.func @transform_4(%arg0: i32) -> (i32, i32, i32) {
    %c0_i32 = arith.constant 0 : i32
    %c0_i32_0 = arith.constant 0 : i32
    %c0_i32_1 = arith.constant 0 : i32
    %c0_i32_2 = arith.constant 0 : i32
    return %c0_i32, %c0_i32_0, %c0_i32_1 : i32, i32, i32
  }
  func.func @transform_5(%arg0: i32) -> (i32, i32, i32) {
    %c0_i32 = arith.constant 0 : i32
    %c0_i32_0 = arith.constant 0 : i32
    %c0_i32_1 = arith.constant 0 : i32
    %c0_i32_2 = arith.constant 0 : i32
    return %c0_i32, %c0_i32_0, %c0_i32_1 : i32, i32, i32
  }
  func.func @transform_6(%arg0: i32) -> (i32, i32, i32) {
    %c0_i32 = arith.constant 0 : i32
    %c0_i32_0 = arith.constant 0 : i32
    %c0_i32_1 = arith.constant 0 : i32
    %c0_i32_2 = arith.constant 0 : i32
    return %c0_i32, %c0_i32_0, %c0_i32_1 : i32, i32, i32
  }
  func.func @transform_7(%arg0: i32) -> (i32, i32, i32) {
    %c0_i32 = arith.constant 0 : i32
    %c0_i32_0 = arith.constant 0 : i32
    %c0_i32_1 = arith.constant 0 : i32
    %c0_i32_2 = arith.constant 0 : i32
    return %c0_i32, %c0_i32_0, %c0_i32_1 : i32, i32, i32
  }
  func.func @transform_8(%arg0: i32) -> (i32, i32, i32) {
    %c0_i32 = arith.constant 0 : i32
    %c0_i32_0 = arith.constant 0 : i32
    %c0_i32_1 = arith.constant 0 : i32
    %c0_i32_2 = arith.constant 0 : i32
    return %c0_i32, %c0_i32_0, %c0_i32_1 : i32, i32, i32
  }
  func.func @transform_9(%arg0: i32) -> (i32, i32, i32) {
    %c0_i32 = arith.constant 0 : i32
    %c0_i32_0 = arith.constant 0 : i32
    %c0_i32_1 = arith.constant 0 : i32
    %c0_i32_2 = arith.constant 0 : i32
    return %c0_i32, %c0_i32_0, %c0_i32_1 : i32, i32, i32
  }
  func.func @transform_10(%arg0: i32) -> (i32, i32, i32) {
    %c0_i32 = arith.constant 0 : i32
    %c0_i32_0 = arith.constant 0 : i32
    %c0_i32_1 = arith.constant 0 : i32
    %c0_i32_2 = arith.constant 0 : i32
    return %c0_i32, %c0_i32_0, %c0_i32_1 : i32, i32, i32
  }
  func.func @transform_11(%arg0: i32) -> (i32, i32, i32) {
    %c0_i32 = arith.constant 0 : i32
    %c0_i32_0 = arith.constant 0 : i32
    %c0_i32_1 = arith.constant 0 : i32
    %c0_i32_2 = arith.constant 0 : i32
    return %c0_i32, %c0_i32_0, %c0_i32_1 : i32, i32, i32
  }
  func.func @transform_12(%arg0: i32) -> (i32, i32, i32) {
    %c0_i32 = arith.constant 0 : i32
    %c0_i32_0 = arith.constant 0 : i32
    %c0_i32_1 = arith.constant 0 : i32
    %c0_i32_2 = arith.constant 0 : i32
    return %c0_i32, %c0_i32_0, %c0_i32_1 : i32, i32, i32
  }
  func.func @transform_13(%arg0: i32) -> (i32, i32, i32) {
    %c0_i32 = arith.constant 0 : i32
    %c0_i32_0 = arith.constant 0 : i32
    %c0_i32_1 = arith.constant 0 : i32
    %c0_i32_2 = arith.constant 0 : i32
    return %c0_i32, %c0_i32_0, %c0_i32_1 : i32, i32, i32
  }
  func.func @transform_14(%arg0: i32) -> (i32, i32, i32) {
    %c0_i32 = arith.constant 0 : i32
    %c0_i32_0 = arith.constant 0 : i32
    %c0_i32_1 = arith.constant 0 : i32
    %c0_i32_2 = arith.constant 0 : i32
    return %c0_i32, %c0_i32_0, %c0_i32_1 : i32, i32, i32
  }
  func.func @transform_15(%arg0: i32) -> (i32, i32) {
    %c0_i32 = arith.constant 0 : i32
    %c0_i32_0 = arith.constant 0 : i32
    %c0_i32_1 = arith.constant 0 : i32
    return %c0_i32, %c0_i32_0 : i32, i32
  }
  func.func @transform_16(%arg0: i32) -> (i32, i32) {
    %c0_i32 = arith.constant 0 : i32
    %c0_i32_0 = arith.constant 0 : i32
    %c0_i32_1 = arith.constant 0 : i32
    return %c0_i32, %c0_i32_0 : i32, i32
  }
  func.func @transform_17(%arg0: i32) -> (i32, i32) {
    %c0_i32 = arith.constant 0 : i32
    %c0_i32_0 = arith.constant 0 : i32
    return %arg0, %c0_i32 : i32, i32
  }
}

</mosaic_0001>

<llo_original>
// kernel: vit_backbone_forward.1
$region0: #{vit_backbone_forward.1}
  #allocation0 [shape = 'u32[]', space=smem, size = 0x4, offset = 0x4, fixed_abs, tag = 'smem constant byte address 0x4 - core index']
  #allocation1 [shape = 'u32[144,128]{1,0:T(1,128)}', space=vmem, size = 0x12000, scoped, tag = 'internal scratch']
  %s0 = inlined_call_operand.vmem [shape: f32[48,48], index: 0, kind: input, shape index: {}]
  %s1 = inlined_call_operand.vmem [shape: bf16[48,32], index: 1, kind: input, shape index: {}]
  %s2 = inlined_call_operand.vmem [shape: f32[24,32], index: 2, kind: input, shape index: {}]
  %s3 = inlined_call_operand.vmem [shape: f32[2,1,32], index: 3, kind: input, shape index: {}]
  %s4 = inlined_call_operand.vmem [shape: f32[2,1,32], index: 4, kind: input, shape index: {}]
  %s5 = inlined_call_operand.vmem [shape: bf16[2,32,96], index: 5, kind: input, shape index: {}]
  %s6 = inlined_call_operand.vmem [shape: f32[2,1,96], index: 6, kind: input, shape index: {}]
  %s7 = inlined_call_operand.vmem [shape: bf16[2,32,32], index: 7, kind: input, shape index: {}]
  %s8 = inlined_call_operand.vmem [shape: f32[2,1,32], index: 8, kind: input, shape index: {}]
  %s9 = inlined_call_operand.vmem [shape: f32[2,1,32], index: 9, kind: input, shape index: {}]
  %s10 = inlined_call_operand.vmem [shape: f32[2,1,32], index: 10, kind: input, shape index: {}]
  %s11 = inlined_call_operand.vmem [shape: bf16[2,32,64], index: 11, kind: input, shape index: {}]
  %s12 = inlined_call_operand.vmem [shape: f32[2,1,64], index: 12, kind: input, shape index: {}]
  %s13 = inlined_call_operand.vmem [shape: bf16[2,64,32], index: 13, kind: input, shape index: {}]
  %s14 = inlined_call_operand.vmem [shape: f32[2,1,32], index: 14, kind: input, shape index: {}]
  %s15 = inlined_call_operand.vmem [shape: f32[1,32], index: 15, kind: input, shape index: {}]
  %s16 = inlined_call_operand.vmem [shape: f32[1,32], index: 16, kind: input, shape index: {}]
  %s17 = inlined_call_operand.vmem [shape: f32[48,32], index: 17, kind: output, shape index: {}]
  %s18 = sld [smem:[#allocation0]]
  $region101: #{vit_backbone_forward.1} parent=0
    _
  %s20 = ssub.s32 1, %s18
  %s21 = scalar_select 0, %s20, %s18
  loop: start=0, step=1, limit=4
  $region2: #{vit_backbone_forward.1} parent=0 // loop_pre_header
    _
  $region3: #{vit_backbone_forward.1} parent=0 // loop_header
    %s23 = sphi 0, %s27
    %p24 = scmp.ge.s32.totalorder %s23, 4
    %s33 = sphi 0, %s35
    %s36 = sphi 0, %s33
    %s37 = sphi 0, %s36
    %s53 = sphi 0, %s37
    %s57 = sphi 0, %s57
    %s59 = sphi 0, %s57
    %s60 = sphi 0, %s59
    %s74 = sphi 0, %s60
    %s78 = sphi 0, %s78
    %s80 = sphi 0, %s78
    %s81 = sphi 0, %s80
    %s95 = sphi 0, %s81
    %s99 = sphi 0, %s99
    %s101 = sphi 0, %s99
    %s102 = sphi 0, %s101
    %s116 = sphi 0, %s102
    %s120 = sphi 0, %s120
    %s122 = sphi 0, %s120
    %s123 = sphi 0, %s122
    %s137 = sphi 0, %s123
    %s141 = sphi 0, %s141
    %s143 = sphi 0, %s141
    %s144 = sphi 0, %s143
    %s158 = sphi 0, %s144
    %s162 = sphi 0, %s162
    %s164 = sphi 0, %s162
    %s165 = sphi 0, %s164
    %s179 = sphi 0, %s165
    %s183 = sphi 0, %s183
    %s185 = sphi 0, %s183
    %s186 = sphi 0, %s185
    %s200 = sphi 0, %s186
    %s204 = sphi 0, %s204
    %s206 = sphi 0, %s204
    %s207 = sphi 0, %s206
    %s221 = sphi 0, %s207
    %s225 = sphi 0, %s225
    %s227 = sphi 0, %s225
    %s228 = sphi 0, %s227
    %s242 = sphi 0, %s228
    %s246 = sphi 0, %s246
    %s248 = sphi 0, %s246
    %s249 = sphi 0, %s248
    %s263 = sphi 0, %s249
    %s267 = sphi 0, %s267
    %s269 = sphi 0, %s267
    %s270 = sphi 0, %s269
    %s284 = sphi 0, %s270
    %s288 = sphi 0, %s288
    %s290 = sphi 0, %s288
    %s291 = sphi 0, %s290
    %s305 = sphi 0, %s291
    %s309 = sphi 0, %s309
    %s311 = sphi 0, %s309
    %s312 = sphi 0, %s311
    %s326 = sphi 0, %s312
    %s330 = sphi 0, %s330
    %s332 = sphi 0, %s330
    %s333 = sphi 0, %s332
    %s347 = sphi 0, %s333
    %s351 = sphi 0, %s351
    %s353 = sphi 0, %s351
    %s354 = sphi 0, %s353
    %s368 = sphi 0, %s354
    %s372 = sphi 0, %s372
    %s374 = sphi 0, %s372
    %s375 = sphi 0, %s374
    %s389 = sphi 0, %s375
    %s395 = sphi 0, %s397
    %s398 = sphi 0, %s395
    %s399 = sphi 0, %s398
    %s415 = sphi 0, %s399
  $region4: #{vit_backbone_forward.1} parent=0 // loop_header_branch
    %26 = sbr.rel (%p24) target = $region8
  $region5: #{vit_backbone_forward.1} parent=0 // loop_body
    %s28 = ssub.s32 %s23, 1
    %s29 = ssub.s32 %s23, 2
    %s30 = sadd.s32 %s23, 1
    %s31 = ssub.s32 %s23, %s30
    %p32 = scmp.eq.s32.totalorder %s31, 0
    %s34 = sadd.s32 %s33, 1
    %s35 = scalar_select %p32, %s33, %s34
    %p38 = pneg %p32
    %p39 = scmp.eq.s32.totalorder %s23, 1
    %p40 = por %p38, %p39
    %p41 = scmp.ne.s32.totalorder %s33, %s36
    %p42 = scmp.eq.s32.totalorder %s23, 0
    %p43 = por %p41, %p42
    %p44 = scmp.ne.s32.totalorder %s33, %s36
    %p45 = scmp.eq.s32.totalorder %s28, 1
    %p46 = por %p44, %p45
    %p47 = scmp.ne.s32.totalorder %s36, %s37
    %p48 = scmp.eq.s32.totalorder %s28, 0
    %p49 = por %p47, %p48
    %p50 = scmp.ne.s32.totalorder %s36, %s37
    %p51 = scmp.eq.s32.totalorder %s29, 1
    %p52 = por %p50, %p51
    %p54 = scmp.ne.s32.totalorder %s37, %s53
    %p55 = scmp.eq.s32.totalorder %s29, 0
    %p56 = por %p54, %p55
    %s58 = sadd.s32 %s57, 1
    %p61 = scmp.eq.s32.totalorder %s23, 1
    %p62 = scmp.ne.s32.totalorder %s57, %s59
    %p63 = scmp.eq.s32.totalorder %s23, 0
    %p64 = por %p62, %p63
    %p65 = scmp.ne.s32.totalorder %s57, %s59
    %p66 = scmp.eq.s32.totalorder %s28, 1
    %p67 = por %p65, %p66
    %p68 = scmp.ne.s32.totalorder %s59, %s60
    %p69 = scmp.eq.s32.totalorder %s28, 0
    %p70 = por %p68, %p69
    %p71 = scmp.ne.s32.totalorder %s59, %s60
    %p72 = scmp.eq.s32.totalorder %s29, 1
    %p73 = por %p71, %p72
    %p75 = scmp.ne.s32.totalorder %s60, %s74
    %p76 = scmp.eq.s32.totalorder %s29, 0
    %p77 = por %p75, %p76
    %s79 = sadd.s32 %s78, 1
    %p82 = scmp.eq.s32.totalorder %s23, 1
    %p83 = scmp.ne.s32.totalorder %s78, %s80
    %p84 = scmp.eq.s32.totalorder %s23, 0
    %p85 = por %p83, %p84
    %p86 = scmp.ne.s32.totalorder %s78, %s80
    %p87 = scmp.eq.s32.totalorder %s28, 1
    %p88 = por %p86, %p87
    %p89 = scmp.ne.s32.totalorder %s80, %s81
    %p90 = scmp.eq.s32.totalorder %s28, 0
    %p91 = por %p89, %p90
    %p92 = scmp.ne.s32.totalorder %s80, %s81
    %p93 = scmp.eq.s32.totalorder %s29, 1
    %p94 = por %p92, %p93
    %p96 = scmp.ne.s32.totalorder %s81, %s95
    %p97 = scmp.eq.s32.totalorder %s29, 0
    %p98 = por %p96, %p97
    %s100 = sadd.s32 %s99, 1
    %p103 = scmp.eq.s32.totalorder %s23, 1
    %p104 = scmp.ne.s32.totalorder %s99, %s101
    %p105 = scmp.eq.s32.totalorder %s23, 0
    %p106 = por %p104, %p105
    %p107 = scmp.ne.s32.totalorder %s99, %s101
    %p108 = scmp.eq.s32.totalorder %s28, 1
    %p109 = por %p107, %p108
    %p110 = scmp.ne.s32.totalorder %s101, %s102
    %p111 = scmp.eq.s32.totalorder %s28, 0
    %p112 = por %p110, %p111
    %p113 = scmp.ne.s32.totalorder %s101, %s102
    %p114 = scmp.eq.s32.totalorder %s29, 1
    %p115 = por %p113, %p114
    %p117 = scmp.ne.s32.totalorder %s102, %s116
    %p118 = scmp.eq.s32.totalorder %s29, 0
    %p119 = por %p117, %p118
    %s121 = sadd.s32 %s120, 1
    %p124 = scmp.eq.s32.totalorder %s23, 1
    %p125 = scmp.ne.s32.totalorder %s120, %s122
    %p126 = scmp.eq.s32.totalorder %s23, 0
    %p127 = por %p125, %p126
    %p128 = scmp.ne.s32.totalorder %s120, %s122
    %p129 = scmp.eq.s32.totalorder %s28, 1
    %p130 = por %p128, %p129
    %p131 = scmp.ne.s32.totalorder %s122, %s123
    %p132 = scmp.eq.s32.totalorder %s28, 0
    %p133 = por %p131, %p132
    %p134 = scmp.ne.s32.totalorder %s122, %s123
    %p135 = scmp.eq.s32.totalorder %s29, 1
    %p136 = por %p134, %p135
    %p138 = scmp.ne.s32.totalorder %s123, %s137
    %p139 = scmp.eq.s32.totalorder %s29, 0
    %p140 = por %p138, %p139
    %s142 = sadd.s32 %s141, 1
    %p145 = scmp.eq.s32.totalorder %s23, 1
    %p146 = scmp.ne.s32.totalorder %s141, %s143
    %p147 = scmp.eq.s32.totalorder %s23, 0
    %p148 = por %p146, %p147
    %p149 = scmp.ne.s32.totalorder %s141, %s143
    %p150 = scmp.eq.s32.totalorder %s28, 1
    %p151 = por %p149, %p150
    %p152 = scmp.ne.s32.totalorder %s143, %s144
    %p153 = scmp.eq.s32.totalorder %s28, 0
    %p154 = por %p152, %p153
    %p155 = scmp.ne.s32.totalorder %s143, %s144
    %p156 = scmp.eq.s32.totalorder %s29, 1
    %p157 = por %p155, %p156
    %p159 = scmp.ne.s32.totalorder %s144, %s158
    %p160 = scmp.eq.s32.totalorder %s29, 0
    %p161 = por %p159, %p160
    %s163 = sadd.s32 %s162, 1
    %p166 = scmp.eq.s32.totalorder %s23, 1
    %p167 = scmp.ne.s32.totalorder %s162, %s164
    %p168 = scmp.eq.s32.totalorder %s23, 0
    %p169 = por %p167, %p168
    %p170 = scmp.ne.s32.totalorder %s162, %s164
    %p171 = scmp.eq.s32.totalorder %s28, 1
    %p172 = por %p170, %p171
    %p173 = scmp.ne.s32.totalorder %s164, %s165
    %p174 = scmp.eq.s32.totalorder %s28, 0
    %p175 = por %p173, %p174
    %p176 = scmp.ne.s32.totalorder %s164, %s165
    %p177 = scmp.eq.s32.totalorder %s29, 1
    %p178 = por %p176, %p177
    %p180 = scmp.ne.s32.totalorder %s165, %s179
    %p181 = scmp.eq.s32.totalorder %s29, 0
    %p182 = por %p180, %p181
    %s184 = sadd.s32 %s183, 1
    %p187 = scmp.eq.s32.totalorder %s23, 1
    %p188 = scmp.ne.s32.totalorder %s183, %s185
    %p189 = scmp.eq.s32.totalorder %s23, 0
    %p190 = por %p188, %p189
    %p191 = scmp.ne.s32.totalorder %s183, %s185
    %p192 = scmp.eq.s32.totalorder %s28, 1
    %p193 = por %p191, %p192
    %p194 = scmp.ne.s32.totalorder %s185, %s186
    %p195 = scmp.eq.s32.totalorder %s28, 0
    %p196 = por %p194, %p195
    %p197 = scmp.ne.s32.totalorder %s185, %s186
    %p198 = scmp.eq.s32.totalorder %s29, 1
    %p199 = por %p197, %p198
    %p201 = scmp.ne.s32.totalorder %s186, %s200
    %p202 = scmp.eq.s32.totalorder %s29, 0
    %p203 = por %p201, %p202
    %s205 = sadd.s32 %s204, 1
    %p208 = scmp.eq.s32.totalorder %s23, 1
    %p209 = scmp.ne.s32.totalorder %s204, %s206
    %p210 = scmp.eq.s32.totalorder %s23, 0
    %p211 = por %p209, %p210
    %p212 = scmp.ne.s32.totalorder %s204, %s206
    %p213 = scmp.eq.s32.totalorder %s28, 1
    %p214 = por %p212, %p213
    %p215 = scmp.ne.s32.totalorder %s206, %s207
    %p216 = scmp.eq.s32.totalorder %s28, 0
    %p217 = por %p215, %p216
    %p218 = scmp.ne.s32.totalorder %s206, %s207
    %p219 = scmp.eq.s32.totalorder %s29, 1
    %p220 = por %p218, %p219
    %p222 = scmp.ne.s32.totalorder %s207, %s221
    %p223 = scmp.eq.s32.totalorder %s29, 0
    %p224 = por %p222, %p223
    %s226 = sadd.s32 %s225, 1
    %p229 = scmp.eq.s32.totalorder %s23, 1
    %p230 = scmp.ne.s32.totalorder %s225, %s227
    %p231 = scmp.eq.s32.totalorder %s23, 0
    %p232 = por %p230, %p231
    %p233 = scmp.ne.s32.totalorder %s225, %s227
    %p234 = scmp.eq.s32.totalorder %s28, 1
    %p235 = por %p233, %p234
    %p236 = scmp.ne.s32.totalorder %s227, %s228
    %p237 = scmp.eq.s32.totalorder %s28, 0
    %p238 = por %p236, %p237
    %p239 = scmp.ne.s32.totalorder %s227, %s228
    %p240 = scmp.eq.s32.totalorder %s29, 1
    %p241 = por %p239, %p240
    %p243 = scmp.ne.s32.totalorder %s228, %s242
    %p244 = scmp.eq.s32.totalorder %s29, 0
    %p245 = por %p243, %p244
    %s247 = sadd.s32 %s246, 1
    %p250 = scmp.eq.s32.totalorder %s23, 1
    %p251 = scmp.ne.s32.totalorder %s246, %s248
    %p252 = scmp.eq.s32.totalorder %s23, 0
    %p253 = por %p251, %p252
    %p254 = scmp.ne.s32.totalorder %s246, %s248
    %p255 = scmp.eq.s32.totalorder %s28, 1
    %p256 = por %p254, %p255
    %p257 = scmp.ne.s32.totalorder %s248, %s249
    %p258 = scmp.eq.s32.totalorder %s28, 0
    %p259 = por %p257, %p258
    %p260 = scmp.ne.s32.totalorder %s248, %s249
    %p261 = scmp.eq.s32.totalorder %s29, 1
    %p262 = por %p260, %p261
    %p264 = scmp.ne.s32.totalorder %s249, %s263
    %p265 = scmp.eq.s32.totalorder %s29, 0
    %p266 = por %p264, %p265
    %s268 = sadd.s32 %s267, 1
    %p271 = scmp.eq.s32.totalorder %s23, 1
    %p272 = scmp.ne.s32.totalorder %s267, %s269
    %p273 = scmp.eq.s32.totalorder %s23, 0
    %p274 = por %p272, %p273
    %p275 = scmp.ne.s32.totalorder %s267, %s269
    %p276 = scmp.eq.s32.totalorder %s28, 1
    %p277 = por %p275, %p276
    %p278 = scmp.ne.s32.totalorder %s269, %s270
    %p279 = scmp.eq.s32.totalorder %s28, 0
    %p280 = por %p278, %p279
    %p281 = scmp.ne.s32.totalorder %s269, %s270
    %p282 = scmp.eq.s32.totalorder %s29, 1
    %p283 = por %p281, %p282
    %p285 = scmp.ne.s32.totalorder %s270, %s284
    %p286 = scmp.eq.s32.totalorder %s29, 0
    %p287 = por %p285, %p286
    %s289 = sadd.s32 %s288, 1
    %p292 = scmp.eq.s32.totalorder %s23, 1
    %p293 = scmp.ne.s32.totalorder %s288, %s290
    %p294 = scmp.eq.s32.totalorder %s23, 0
    %p295 = por %p293, %p294
    %p296 = scmp.ne.s32.totalorder %s288, %s290
    %p297 = scmp.eq.s32.totalorder %s28, 1
    %p298 = por %p296, %p297
    %p299 = scmp.ne.s32.totalorder %s290, %s291
    %p300 = scmp.eq.s32.totalorder %s28, 0
    %p301 = por %p299, %p300
    %p302 = scmp.ne.s32.totalorder %s290, %s291
    %p303 = scmp.eq.s32.totalorder %s29, 1
    %p304 = por %p302, %p303
    %p306 = scmp.ne.s32.totalorder %s291, %s305
    %p307 = scmp.eq.s32.totalorder %s29, 0
    %p308 = por %p306, %p307
    %s310 = sadd.s32 %s309, 1
    %p313 = scmp.eq.s32.totalorder %s23, 1
    %p314 = scmp.ne.s32.totalorder %s309, %s311
    %p315 = scmp.eq.s32.totalorder %s23, 0
    %p316 = por %p314, %p315
    %p317 = scmp.ne.s32.totalorder %s309, %s311
    %p318 = scmp.eq.s32.totalorder %s28, 1
    %p319 = por %p317, %p318
    %p320 = scmp.ne.s32.totalorder %s311, %s312
    %p321 = scmp.eq.s32.totalorder %s28, 0
    %p322 = por %p320, %p321
    %p323 = scmp.ne.s32.totalorder %s311, %s312
    %p324 = scmp.eq.s32.totalorder %s29, 1
    %p325 = por %p323, %p324
    %p327 = scmp.ne.s32.totalorder %s312, %s326
    %p328 = scmp.eq.s32.totalorder %s29, 0
    %p329 = por %p327, %p328
    %s331 = sadd.s32 %s330, 1
    %p334 = scmp.eq.s32.totalorder %s23, 1
    %p335 = scmp.ne.s32.totalorder %s330, %s332
    %p336 = scmp.eq.s32.totalorder %s23, 0
    %p337 = por %p335, %p336
    %p338 = scmp.ne.s32.totalorder %s330, %s332
    %p339 = scmp.eq.s32.totalorder %s28, 1
    %p340 = por %p338, %p339
    %p341 = scmp.ne.s32.totalorder %s332, %s333
    %p342 = scmp.eq.s32.totalorder %s28, 0
    %p343 = por %p341, %p342
    %p344 = scmp.ne.s32.totalorder %s332, %s333
    %p345 = scmp.eq.s32.totalorder %s29, 1
    %p346 = por %p344, %p345
    %p348 = scmp.ne.s32.totalorder %s333, %s347
    %p349 = scmp.eq.s32.totalorder %s29, 0
    %p350 = por %p348, %p349
    %s352 = sadd.s32 %s351, 1
    %p355 = scmp.eq.s32.totalorder %s23, 1
    %p356 = scmp.ne.s32.totalorder %s351, %s353
    %p357 = scmp.eq.s32.totalorder %s23, 0
    %p358 = por %p356, %p357
    %p359 = scmp.ne.s32.totalorder %s351, %s353
    %p360 = scmp.eq.s32.totalorder %s28, 1
    %p361 = por %p359, %p360
    %p362 = scmp.ne.s32.totalorder %s353, %s354
    %p363 = scmp.eq.s32.totalorder %s28, 0
    %p364 = por %p362, %p363
    %p365 = scmp.ne.s32.totalorder %s353, %s354
    %p366 = scmp.eq.s32.totalorder %s29, 1
    %p367 = por %p365, %p366
    %p369 = scmp.ne.s32.totalorder %s354, %s368
    %p370 = scmp.eq.s32.totalorder %s29, 0
    %p371 = por %p369, %p370
    %s373 = sadd.s32 %s372, 1
    %p376 = scmp.eq.s32.totalorder %s23, 1
    %p377 = scmp.ne.s32.totalorder %s372, %s374
    %p378 = scmp.eq.s32.totalorder %s23, 0
    %p379 = por %p377, %p378
    %p380 = scmp.ne.s32.totalorder %s372, %s374
    %p381 = scmp.eq.s32.totalorder %s28, 1
    %p382 = por %p380, %p381
    %p383 = scmp.ne.s32.totalorder %s374, %s375
    %p384 = scmp.eq.s32.totalorder %s28, 0
    %p385 = por %p383, %p384
    %p386 = scmp.ne.s32.totalorder %s374, %s375
    %p387 = scmp.eq.s32.totalorder %s29, 1
    %p388 = por %p386, %p387
    %p390 = scmp.ne.s32.totalorder %s375, %s389
    %p391 = scmp.eq.s32.totalorder %s29, 0
    %p392 = por %p390, %p391
    %s393 = ssub.s32 %s23, %s30
    %p394 = scmp.eq.s32.totalorder %s393, 0
    %s396 = sadd.s32 %s395, 1
    %s397 = scalar_select %p394, %s395, %s396
    %p400 = pneg %p394
    %p401 = scmp.eq.s32.totalorder %s23, 1
    %p402 = por %p400, %p401
    %p403 = scmp.ne.s32.totalorder %s395, %s398
    %p404 = scmp.eq.s32.totalorder %s23, 0
    %p405 = por %p403, %p404
    %p406 = scmp.ne.s32.totalorder %s395, %s398
    %p407 = scmp.eq.s32.totalorder %s28, 1
    %p408 = por %p406, %p407
    %p409 = scmp.ne.s32.totalorder %s398, %s399
    %p410 = scmp.eq.s32.totalorder %s28, 0
    %p411 = por %p409, %p410
    %p412 = scmp.ne.s32.totalorder %s398, %s399
    %p413 = scmp.eq.s32.totalorder %s29, 1
    %p414 = por %p412, %p413
    %p416 = scmp.ne.s32.totalorder %s399, %s415
    %p417 = scmp.eq.s32.totalorder %s29, 0
    %p418 = por %p416, %p417
    %p419 = scmp.le.s32.totalorder 1, %s23
    %p420 = scmp.lt.s32.totalorder %s23, 3
    %p421 = pnand %p419, %p420
    %p422 = pneg %p421
    // Predicated region
    $region9: #{vit_backbone_forward.1} parent=5 // pred_check
      _
    $region10: #{vit_backbone_forward.1} parent=5 // pred_check_branch
      %424 = sbr.rel (%p421) target = $region12
    $region11: #{vit_backbone_forward.1} parent=5 // pred_region
      %s425 = ssub.s32 %s23, 1
      // Predicated region
      $region13: #{vit_backbone_forward.1} parent=11 // pred_check
        %p426 = pneg %p70
      $region14: #{vit_backbone_forward.1} parent=11 // pred_check_branch
        %428 = sbr.rel (%p426) target = $region16
      $region15: #{vit_backbone_forward.1} parent=11 // pred_region
        _
      $region16: #{vit_backbone_forward.1} parent=11 // pred_fallthru
        _
      // Predicated region
      $region17: #{vit_backbone_forward.1} parent=11 // pred_check
        %p429 = pneg %p91
      $region18: #{vit_backbone_forward.1} parent=11 // pred_check_branch
        %431 = sbr.rel (%p429) target = $region20
      $region19: #{vit_backbone_forward.1} parent=11 // pred_region
        _
      $region20: #{vit_backbone_forward.1} parent=11 // pred_fallthru
        _
      // Predicated region
      $region21: #{vit_backbone_forward.1} parent=11 // pred_check
        %p432 = pneg %p112
      $region22: #{vit_backbone_forward.1} parent=11 // pred_check_branch
        %434 = sbr.rel (%p432) target = $region24
      $region23: #{vit_backbone_forward.1} parent=11 // pred_region
        _
      $region24: #{vit_backbone_forward.1} parent=11 // pred_fallthru
        _
      // Predicated region
      $region25: #{vit_backbone_forward.1} parent=11 // pred_check
        %p435 = pneg %p133
      $region26: #{vit_backbone_forward.1} parent=11 // pred_check_branch
        %437 = sbr.rel (%p435) target = $region28
      $region27: #{vit_backbone_forward.1} parent=11 // pred_region
        _
      $region28: #{vit_backbone_forward.1} parent=11 // pred_fallthru
        _
      // Predicated region
      $region29: #{vit_backbone_forward.1} parent=11 // pred_check
        %p438 = pneg %p154
      $region30: #{vit_backbone_forward.1} parent=11 // pred_check_branch
        %440 = sbr.rel (%p438) target = $region32
      $region31: #{vit_backbone_forward.1} parent=11 // pred_region
        _
      $region32: #{vit_backbone_forward.1} parent=11 // pred_fallthru
        _
      // Predicated region
      $region33: #{vit_backbone_forward.1} parent=11 // pred_check
        %p441 = pneg %p175
      $region34: #{vit_backbone_forward.1} parent=11 // pred_check_branch
        %443 = sbr.rel (%p441) target = $region36
      $region35: #{vit_backbone_forward.1} parent=11 // pred_region
        _
      $region36: #{vit_backbone_forward.1} parent=11 // pred_fallthru
        _
      // Predicated region
      $region37: #{vit_backbone_forward.1} parent=11 // pred_check
        %p444 = pneg %p196
      $region38: #{vit_backbone_forward.1} parent=11 // pred_check_branch
        %446 = sbr.rel (%p444) target = $region40
      $region39: #{vit_backbone_forward.1} parent=11 // pred_region
        _
      $region40: #{vit_backbone_forward.1} parent=11 // pred_fallthru
        _
      // Predicated region
      $region41: #{vit_backbone_forward.1} parent=11 // pred_check
        %p447 = pneg %p217
      $region42: #{vit_backbone_forward.1} parent=11 // pred_check_branch
        %449 = sbr.rel (%p447) target = $region44
      $region43: #{vit_backbone_forward.1} parent=11 // pred_region
        _
      $region44: #{vit_backbone_forward.1} parent=11 // pred_fallthru
        _
      // Predicated region
      $region45: #{vit_backbone_forward.1} parent=11 // pred_check
        %p450 = pneg %p238
      $region46: #{vit_backbone_forward.1} parent=11 // pred_check_branch
        %452 = sbr.rel (%p450) target = $region48
      $region47: #{vit_backbone_forward.1} parent=11 // pred_region
        _
      $region48: #{vit_backbone_forward.1} parent=11 // pred_fallthru
        _
      // Predicated region
      $region49: #{vit_backbone_forward.1} parent=11 // pred_check
        %p453 = pneg %p259
      $region50: #{vit_backbone_forward.1} parent=11 // pred_check_branch
        %455 = sbr.rel (%p453) target = $region52
      $region51: #{vit_backbone_forward.1} parent=11 // pred_region
        _
      $region52: #{vit_backbone_forward.1} parent=11 // pred_fallthru
        _
      // Predicated region
      $region53: #{vit_backbone_forward.1} parent=11 // pred_check
        %p456 = pneg %p280
      $region54: #{vit_backbone_forward.1} parent=11 // pred_check_branch
        %458 = sbr.rel (%p456) target = $region56
      $region55: #{vit_backbone_forward.1} parent=11 // pred_region
        _
      $region56: #{vit_backbone_forward.1} parent=11 // pred_fallthru
        _
      // Predicated region
      $region57: #{vit_backbone_forward.1} parent=11 // pred_check
        %p459 = pneg %p301
      $region58: #{vit_backbone_forward.1} parent=11 // pred_check_branch
        %461 = sbr.rel (%p459) target = $region60
      $region59: #{vit_backbone_forward.1} parent=11 // pred_region
        _
      $region60: #{vit_backbone_forward.1} parent=11 // pred_fallthru
        _
      // Predicated region
      $region61: #{vit_backbone_forward.1} parent=11 // pred_check
        %p462 = pneg %p322
      $region62: #{vit_backbone_forward.1} parent=11 // pred_check_branch
        %464 = sbr.rel (%p462) target = $region64
      $region63: #{vit_backbone_forward.1} parent=11 // pred_region
        _
      $region64: #{vit_backbone_forward.1} parent=11 // pred_fallthru
        _
      // Predicated region
      $region65: #{vit_backbone_forward.1} parent=11 // pred_check
        %p465 = pneg %p343
      $region66: #{vit_backbone_forward.1} parent=11 // pred_check_branch
        %467 = sbr.rel (%p465) target = $region68
      $region67: #{vit_backbone_forward.1} parent=11 // pred_region
        _
      $region68: #{vit_backbone_forward.1} parent=11 // pred_fallthru
        _
      // Predicated region
      $region69: #{vit_backbone_forward.1} parent=11 // pred_check
        %p468 = pneg %p364
      $region70: #{vit_backbone_forward.1} parent=11 // pred_check_branch
        %470 = sbr.rel (%p468) target = $region72
      $region71: #{vit_backbone_forward.1} parent=11 // pred_region
        _
      $region72: #{vit_backbone_forward.1} parent=11 // pred_fallthru
        _
      // Predicated region
      $region73: #{vit_backbone_forward.1} parent=11 // pred_check
        %p471 = pneg %p385
      $region74: #{vit_backbone_forward.1} parent=11 // pred_check_branch
        %473 = sbr.rel (%p471) target = $region76
      $region75: #{vit_backbone_forward.1} parent=11 // pred_region
        _
      $region76: #{vit_backbone_forward.1} parent=11 // pred_fallthru
        _
    $region12: #{vit_backbone_forward.1} parent=5 // pred_fallthru
      _
    %p474 = scmp.lt.s32.totalorder %s23, 2
    // Predicated region
    $region77: #{vit_backbone_forward.1} parent=5 // pred_check
      %p475 = pneg %p474
    $region78: #{vit_backbone_forward.1} parent=5 // pred_check_branch
      %477 = sbr.rel (%p475) target = $region80
    $region79: #{vit_backbone_forward.1} parent=5 // pred_region
      // Predicated region
      $region81: #{vit_backbone_forward.1} parent=79 // pred_check
        %p478 = pneg %p43
      $region82: #{vit_backbone_forward.1} parent=79 // pred_check_branch
        %480 = sbr.rel (%p478) target = $region84
      $region83: #{vit_backbone_forward.1} parent=79 // pred_region
        %s481 = smul.u32 3, %s23
        %p482 = scmp.lt.s32.totalorder %s481, 5
        %s483 = scalar_select %p482, %s481, 5
        %s484 = smul.addr %s483, 8
        %s485 = scalar_lea.vmem %s0, %s484
        %s486 = smul.u32 3, %s23
      $region84: #{vit_backbone_forward.1} parent=79 // pred_fallthru
        _
    $region80: #{vit_backbone_forward.1} parent=5 // pred_fallthru
      _
    %p487 = scmp.le.s32.totalorder 1, %s23
    %p488 = scmp.lt.s32.totalorder %s23, 3
    %p489 = pnand %p487, %p488
    %p490 = pneg %p489
    // Predicated region
    $region85: #{vit_backbone_forward.1} parent=5 // pred_check
      _
    $region86: #{vit_backbone_forward.1} parent=5 // pred_check_branch
      %492 = sbr.rel (%p489) target = $region88
    $region87: #{vit_backbone_forward.1} parent=5 // pred_region
      %s493 = ssub.s32 %s23, 1
      %s494 = smul.u32 3, %s28
      %p495 = scmp.lt.s32.totalorder %s494, 5
      %s496 = scalar_select %p495, %s494, 5
      %s497 = smul.addr %s496, 8
      %s498 = scalar_lea.vmem %s0, %s497
      %p499 = pneg %p49
      %p500 = pneg %p46
      %p501 = pneg %p70
      %p502 = pneg %p67
      %p503 = pneg %p91
      %p504 = pneg %p88
      %p505 = pneg %p112
      %p506 = pneg %p109
      %p507 = pneg %p133
      %p508 = pneg %p130
      %p509 = pneg %p154
      %p510 = pneg %p151
      %p511 = pneg %p175
      %p512 = pneg %p172
      %p513 = pneg %p196
      %p514 = pneg %p193
      %p515 = pneg %p217
      %p516 = pneg %p214
      %p517 = pneg %p238
      %p518 = pneg %p235
      %p519 = pneg %p259
      %p520 = pneg %p256
      %p521 = pneg %p280
      %p522 = pneg %p277
      %p523 = pneg %p301
      %p524 = pneg %p298
      %p525 = pneg %p322
      %p526 = pneg %p319
      %p527 = pneg %p343
      %p528 = pneg %p340
      %p529 = pneg %p364
      %p530 = pneg %p361
      %p531 = pneg %p385
      %p532 = pneg %p382
      %p533 = pneg %p411
      %p534 = pneg %p408
      %s535 = smul.u32 3, %s28
      %p536 = scmp.lt.s32.totalorder %s535, 5
      %s537 = scalar_select %p536, %s535, 5
      %s538 = smul.addr %s537, 8
      %s539 = scalar_lea.vmem %s17, %s538
      %s540 = smul.u32 3, %s28
      %p541 = scmp.lt.s32.totalorder %s540, 5
      %s542 = scalar_select %p541, %s540, 5
      %s543 = smul.addr %s542, 8
      %s544 = scalar_lea.vmem %s0, %s543
      %s545 = smul.u32 3, %s28
      %s546 = smul.u32 3, %s28
      %p547 = scmp.lt.s32.totalorder %s546, 5
      %s548 = scalar_select %p547, %s546, 5
      %s549 = smul.addr %s548, 8
      %s550 = scalar_lea.vmem %s17, %s549
      %s551 = smul.u32 3, %s28
      %v553 = vld [vmem:[%s544] sm:$0xff]
      %v554 = vld [vmem:[%s544 + $0x8] sm:$0xff]
      %v555 = vld [vmem:[%s544 + $0x10] sm:$0xff]
      %v556 = vpack.c.bf16 %v554, %v553
      %v557 = vpack.c.bf16 %v555, %v555
      %v558 = vld [vmem:[%s1] sm:$0xf]
      %v559 = vld [vmem:[%s1 + $0x4] sm:$0xf]
      %v560 = vld [vmem:[%s1 + $0x8] sm:$0xf]
      %v561 = vld [vmem:[%s1 + $0xc] sm:$0xf]
      %v562 = vld [vmem:[%s1 + $0x10] sm:$0xf]
      %v563 = vld [vmem:[%s1 + $0x14] sm:$0xf]
      %v564 = vld [vmem:[%s2] sm:$0xff]
      %v565 = vld [vmem:[%s2 + $0x8] sm:$0xff]
      %v566 = vld [vmem:[%s2 + $0x10] sm:$0xff]
      %v573 = vunpack.c.l.b16 %v558
      %v574 = vunpack.c.l.b16 %v559
      %v575 = vunpack.c.l.b16 %v560
      %v576 = vunpack.c.l.b16 %v561
      %v577 = vunpack.c.l.b16 %v562
      %v578 = vunpack.c.l.b16 %v563
      %v579 = vpack.c.b16 %v574, %v573
      %v580 = vpack.c.b16 %v576, %v575
      %v581 = vpack.c.b16 %v578, %v577
      %vm585 = vcmask 392192
      %v587 = vsel %vm585, %v556, 0
      %v590 = vsel %vm585, %v557, 0
      %592 = vmatprep.subr.bf16.mxu0 0
      %593 = vmatpush1.bf16.msra.mxu0 %v579
      %594 = vmatprep.subr.bf16.mxu0 0
      %595 = vmatpush1.bf16.msra.mxu0 %v580
      %596 = vmatprep.subr.bf16.mxu0 0
      %597 = vmatpush1.bf16.msra.mxu0 %v581
      %598 = vmatprep.subr.bf16.mxu0 0
      %599 = vmatpush1.bf16.msra.mxu0 0
      %600 = vmatprep.subr.bf16.mxu0 0
      %601 = vmatpush1.bf16.msra.mxu0 0
      %602 = vmatprep.subr.bf16.mxu0 0
      %603 = vmatpush1.bf16.msra.mxu0 0
      %604 = vmatprep.subr.bf16.mxu0 0
      %605 = vmatpush1.bf16.msra.mxu0 0
      %606 = vmatprep.subr.bf16.mxu0 0
      %607 = vmatpush1.bf16.msra.mxu0 0
      %608 = vmatprep.subr.bf16.mxu0 0
      %609 = vmatpush1.bf16.msra.mxu0 0
      %610 = vmatprep.subr.bf16.mxu0 0
      %611 = vmatpush1.bf16.msra.mxu0 0
      %612 = vmatprep.subr.bf16.mxu0 0
      %613 = vmatpush1.bf16.msra.mxu0 0
      %614 = vmatprep.subr.bf16.mxu0 0
      %615 = vmatpush1.bf16.msra.mxu0 0
      %616 = vmatprep.subr.bf16.mxu0 0
      %617 = vmatpush1.bf16.msra.mxu0 0
      %618 = vmatprep.subr.bf16.mxu0 0
      %619 = vmatpush1.bf16.msra.mxu0 0
      %620 = vmatprep.subr.bf16.mxu0 0
      %621 = vmatpush1.bf16.msra.mxu0 0
      %622 = vmatprep.subr.bf16.mxu0 0
      %623 = vmatpush1.bf16.msra.mxu0 0
      %624 = vmatprep.mubr.bf16.mxu0 0
      %625 = vmatmul.mubr.bf16.gmra.mrb[0].mxu0 %v587
      %v626 = vpop.f32.mrb[0].mxu0
      %v627 = vadd.f32 %v564, %v626
      %v628 = vpop.f32.mrb[0].mxu0
      %v629 = vpop.f32.mrb[0].mxu0
      %v630 = vadd.f32 %v565, %v629
      %v631 = vpop.f32.mrb[0].mxu0
      %632 = vmatprep.mubr.bf16.mxu0 0
      %633 = vmatmul.mubr.bf16.gmra.mrb[0].mxu0 %v590
      %v634 = vpop.f32.mrb[0].mxu0
      %v635 = vadd.f32 %v566, %v634
      %v636 = vpop.f32.mrb[0].mxu0
      %v637 = vpop.f32.mrb[0].mxu0
      %v638 = vpop.f32.mrb[0].mxu0
      %639 = vdwg.mxu0
      %v640 = vlaneseq
      %v641 = vand.u32 %v640, 127
      %vm642 = vcmp.lt.s32.totalorder %v641, 17
      %v643 = vsel %vm642, 0.0, -1e+30
      %v644 = vld [vmem:[%s3] sm:$0x1]
      %v645 = vld [vmem:[%s4] sm:$0x1]
      %vm646 = vcmask 261120
      %v647 = vsel %vm646, %v627, 0.0
      %648 = vadd.xlane.f32.xlu0 %v647
      %v649 = vpop.xlane.xlu0 %648
      %v650 = vsel %vm646, %v630, 0.0
      %651 = vadd.xlane.f32.xlu0 %v650
      %v652 = vpop.xlane.xlu0 %651
      %v653 = vsel %vm646, %v635, 0.0
      %654 = vadd.xlane.f32.xlu0 %v653
      %v655 = vpop.xlane.xlu0 %654
      %v656 = vrcp.pop 32.0
      %v657 = vmul.f32 %v649, %v656
      %v658 = vmul.f32 %v652, %v656
      %v659 = vmul.f32 %v655, %v656
      %v660 = vsub.f32 %v627, %v657
      %v661 = vsub.f32 %v630, %v658
      %v662 = vsub.f32 %v635, %v659
      %v663 = vmul.f32 %v660, %v660
      %v664 = vmul.f32 %v661, %v661
      %v665 = vmul.f32 %v662, %v662
      %v666 = vsel %vm646, %v663, 0.0
      %667 = vadd.xlane.f32.xlu0 %v666
      %v668 = vpop.xlane.xlu0 %667
      %v669 = vsel %vm646, %v664, 0.0
      %670 = vadd.xlane.f32.xlu0 %v669
      %v671 = vpop.xlane.xlu0 %670
      %v672 = vsel %vm646, %v665, 0.0
      %673 = vadd.xlane.f32.xlu0 %v672
      %v674 = vpop.xlane.xlu0 %673
      %v675 = vmul.f32 %v668, %v656
      %v676 = vmul.f32 %v671, %v656
      %v677 = vmul.f32 %v674, %v656
      %v678 = vadd.f32 %v675, 1e-06
      %v679 = vadd.f32 %v676, 1e-06
      %v680 = vadd.f32 %v677, 1e-06
      %v681 = vrsqrt.pop %v678
      %v682 = vrsqrt.pop %v679
      %v683 = vrsqrt.pop %v680
      %v684 = vmul.f32 %v660, %v681
      %v685 = vmul.f32 %v661, %v682
      %v686 = vmul.f32 %v662, %v683
      %v688 = vlaneseq
      %v689 = vshrl.u32 %v688, 7
      %v690 = vsub.s32 0, %v689
      %v691 = vrot.slane %v644, %v690
      %v693 = vmul.f32 %v684, %v691
      %v694 = vmul.f32 %v685, %v691
      %v695 = vmul.f32 %v686, %v691
      %v697 = vlaneseq
      %v698 = vshrl.u32 %v697, 7
      %v699 = vsub.s32 0, %v698
      %v700 = vrot.slane %v645, %v699
      %v702 = vadd.f32 %v693, %v700
      %v703 = vadd.f32 %v694, %v700
      %v704 = vadd.f32 %v695, %v700
      %v705 = vpack.c.bf16 %v703, %v702
      %v706 = vpack.c.bf16 %v704, %v704
      %v707 = vld [vmem:[%s5] sm:$0xf]
      %v708 = vld [vmem:[%s5 + $0x4] sm:$0xf]
      %v709 = vld [vmem:[%s5 + $0x8] sm:$0xf]
      %v710 = vld [vmem:[%s5 + $0xc] sm:$0xf]
      %v711 = vld [vmem:[%s6] sm:$0x1]
      %v713 = vlaneseq
      %v714 = vshrl.u32 %v713, 7
      %v715 = vsub.s32 0, %v714
      %v716 = vrot.slane %v711, %v715
      %v722 = vunpack.c.l.b16 %v707
      %v723 = vunpack.c.l.b16 %v708
      %v724 = vunpack.c.l.b16 %v709
      %v725 = vunpack.c.l.b16 %v710
      %v726 = vpack.c.b16 %v723, %v722
      %v727 = vpack.c.b16 %v725, %v724
      %v731 = vsel %vm646, %v705, 0
      %v734 = vsel %vm646, %v706, 0
      %736 = vmatprep.subr.bf16.mxu0 0
      %737 = vmatpush1.bf16.msra.mxu0 %v726
      %738 = vmatprep.subr.bf16.mxu0 0
      %739 = vmatpush1.bf16.msra.mxu0 %v727
      %740 = vmatprep.subr.bf16.mxu0 0
      %741 = vmatpush1.bf16.msra.mxu0 0
      %742 = vmatprep.subr.bf16.mxu0 0
      %743 = vmatpush1.bf16.msra.mxu0 0
      %744 = vmatprep.subr.bf16.mxu0 0
      %745 = vmatpush1.bf16.msra.mxu0 0
      %746 = vmatprep.subr.bf16.mxu0 0
      %747 = vmatpush1.bf16.msra.mxu0 0
      %748 = vmatprep.subr.bf16.mxu0 0
      %749 = vmatpush1.bf16.msra.mxu0 0
      %750 = vmatprep.subr.bf16.mxu0 0
      %751 = vmatpush1.bf16.msra.mxu0 0
      %752 = vmatprep.subr.bf16.mxu0 0
      %753 = vmatpush1.bf16.msra.mxu0 0
      %754 = vmatprep.subr.bf16.mxu0 0
      %755 = vmatpush1.bf16.msra.mxu0 0
      %756 = vmatprep.subr.bf16.mxu0 0
      %757 = vmatpush1.bf16.msra.mxu0 0
      %758 = vmatprep.subr.bf16.mxu0 0
      %759 = vmatpush1.bf16.msra.mxu0 0
      %760 = vmatprep.subr.bf16.mxu0 0
      %761 = vmatpush1.bf16.msra.mxu0 0
      %762 = vmatprep.subr.bf16.mxu0 0
      %763 = vmatpush1.bf16.msra.mxu0 0
      %764 = vmatprep.subr.bf16.mxu0 0
      %765 = vmatpush1.bf16.msra.mxu0 0
      %766 = vmatprep.subr.bf16.mxu0 0
      %767 = vmatpush1.bf16.msra.mxu0 0
      %768 = vmatprep.mubr.bf16.mxu0 0
      %769 = vmatmul.mubr.bf16.gmra.mrb[0].mxu0 %v731
      %v770 = vpop.f32.mrb[0].mxu0
      %v771 = vadd.f32 %v716, %v770
      %v772 = vpop.f32.mrb[0].mxu0
      %v773 = vpop.f32.mrb[0].mxu0
      %v774 = vadd.f32 %v716, %v773
      %v775 = vpop.f32.mrb[0].mxu0
      %776 = vmatprep.mubr.bf16.mxu0 0
      %777 = vmatmul.mubr.bf16.gmra.mrb[0].mxu0 %v734
      %v778 = vpop.f32.mrb[0].mxu0
      %v779 = vadd.f32 %v716, %v778
      %v780 = vpop.f32.mrb[0].mxu0
      %v781 = vpop.f32.mrb[0].mxu0
      %v782 = vpop.f32.mrb[0].mxu0
      %783 = vdwg.mxu0
      %v784 = vpack.c.bf16 %v774, %v771
      %v785 = vpack.c.bf16 %v779, %v779
      %788 = vrot.lane.b32.xlu0 %v784, 96
      %v789 = vpop.permute.xlu0 %788
      %790 = vrot.lane.b32.xlu0 %v785, 96
      %v791 = vpop.permute.xlu0 %790
      %vm792 = vcmask 64512
      %v794 = vsel %vm792, %v784, 0
      %v797 = vsel %vm792, %v785, 0
      %v800 = vsel %vm792, %v789, 0
      %v803 = vsel %vm792, %v791, 0
      %805 = vmatprep.subr.bf16.mxu0 0
      %806 = vmatpush1.bf16.xpose.msra.mxu0 %v800
      %807 = vmatprep.subr.bf16.mxu0 0
      %808 = vmatpush1.bf16.xpose.msra.mxu0 %v803
      %809 = vmatprep.subr.bf16.mxu0 0
      %810 = vmatpush1.bf16.xpose.msra.mxu0 0
      %811 = vmatprep.subr.bf16.mxu0 0
      %812 = vmatpush1.bf16.xpose.msra.mxu0 0
      %813 = vmatprep.subr.bf16.mxu0 0
      %814 = vmatpush1.bf16.xpose.msra.mxu0 0
      %815 = vmatprep.subr.bf16.mxu0 0
      %816 = vmatpush1.bf16.xpose.msra.mxu0 0
      %817 = vmatprep.subr.bf16.mxu0 0
      %818 = vmatpush1.bf16.xpose.msra.mxu0 0
      %819 = vmatprep.subr.bf16.mxu0 0
      %820 = vmatpush1.bf16.xpose.msra.mxu0 0
      %821 = vmatprep.subr.bf16.mxu0 0
      %822 = vmatpush1.bf16.xpose.msra.mxu0 0
      %823 = vmatprep.subr.bf16.mxu0 0
      %824 = vmatpush1.bf16.xpose.msra.mxu0 0
      %825 = vmatprep.subr.bf16.mxu0 0
      %826 = vmatpush1.bf16.xpose.msra.mxu0 0
      %827 = vmatprep.subr.bf16.mxu0 0
      %828 = vmatpush1.bf16.xpose.msra.mxu0 0
      %829 = vmatprep.subr.bf16.mxu0 0
      %830 = vmatpush1.bf16.xpose.msra.mxu0 0
      %831 = vmatprep.subr.bf16.mxu0 0
      %832 = vmatpush1.bf16.xpose.msra.mxu0 0
      %833 = vmatprep.subr.bf16.mxu0 0
      %834 = vmatpush1.bf16.xpose.msra.mxu0 0
      %835 = vmatprep.subr.bf16.mxu0 0
      %836 = vmatpush1.bf16.xpose.msra.mxu0 0
      %837 = vmatprep.mubr.bf16.mxu0 0
      %838 = vmatmul.mubr.bf16.gmra.mrb[0].mxu0 %v794
      %v839 = vpop.f32.mrb[0].mxu0
      %v840 = vadd.f32 %v643, %v839
      %v841 = vpop.f32.mrb[0].mxu0
      %v842 = vpop.f32.mrb[0].mxu0
      %v843 = vadd.f32 %v643, %v842
      %v844 = vpop.f32.mrb[0].mxu0
      %845 = vmatprep.mubr.bf16.mxu0 0
      %846 = vmatmul.mubr.bf16.gmra.mrb[0].mxu0 %v797
      %v847 = vpop.f32.mrb[0].mxu0
      %v848 = vadd.f32 %v643, %v847
      %v849 = vpop.f32.mrb[0].mxu0
      %v850 = vpop.f32.mrb[0].mxu0
      %v851 = vpop.f32.mrb[0].mxu0
      %852 = vdwg.mxu0
      %vm853 = vcmask 195584
      %v854 = vsel %vm853, %v840, -inf
      %855 = vmax.xlane.f32.xlu0 %v854
      %v856 = vpop.xlane.xlu0 %855
      %v857 = vsel %vm853, %v843, -inf
      %858 = vmax.xlane.f32.xlu0 %v857
      %v859 = vpop.xlane.xlu0 %858
      %v860 = vsel %vm853, %v848, -inf
      %861 = vmax.xlane.f32.xlu0 %v860
      %v862 = vpop.xlane.xlu0 %861
      %v863 = vsub.f32 %v840, %v856
      %v864 = vsub.f32 %v843, %v859
      %v865 = vsub.f32 %v848, %v862
      %v866 = vmul.f32 %v863, 1.442695
      %v867 = vpow.pop %v866
      %v868 = vmul.f32 %v864, 1.442695
      %v869 = vpow.pop %v868
      %v870 = vmul.f32 %v865, 1.442695
      %v871 = vpow.pop %v870
      %v872 = vsel %vm853, %v867, 0.0
      %873 = vadd.xlane.f32.xlu0 %v872
      %v874 = vpop.xlane.xlu0 %873
      %v875 = vsel %vm853, %v869, 0.0
      %876 = vadd.xlane.f32.xlu0 %v875
      %v877 = vpop.xlane.xlu0 %876
      %v878 = vsel %vm853, %v871, 0.0
      %879 = vadd.xlane.f32.xlu0 %v878
      %v880 = vpop.xlane.xlu0 %879
      %v881 = vrcp.pop %v874
      %v882 = vrcp.pop %v877
      %v883 = vrcp.pop %v880
      %v884 = vmul.f32 %v867, %v881
      %v885 = vmul.f32 %v869, %v882
      %v886 = vmul.f32 %v871, %v883
      %v887 = vpack.c.bf16 %v885, %v884
      %v888 = vpack.c.bf16 %v886, %v886
      %889 = vrot.lane.b32.xlu0 %v784, 64
      %v890 = vpop.permute.xlu0 %889
      %891 = vrot.lane.b32.xlu0 %v785, 64
      %v892 = vpop.permute.xlu0 %891
      %v895 = vsel %vm853, %v887, 0
      %v898 = vsel %vm853, %v888, 0
      %vm900 = vcmask 1043456
      %v902 = vsel %vm900, %v892, 0
      %904 = vmatprep.subr.bf16.mxu0 0
      %905 = vmatpush1.bf16.msra.mxu0 %v890
      %906 = vmatprep.subr.bf16.mxu0 0
      %907 = vmatpush1.bf16.msra.mxu0 %v902
      %908 = vmatprep.subr.bf16.mxu0 0
      %909 = vmatpush1.bf16.msra.mxu0 0
      %910 = vmatprep.subr.bf16.mxu0 0
      %911 = vmatpush1.bf16.msra.mxu0 0
      %912 = vmatprep.subr.bf16.mxu0 0
      %913 = vmatpush1.bf16.msra.mxu0 0
      %914 = vmatprep.subr.bf16.mxu0 0
      %915 = vmatpush1.bf16.msra.mxu0 0
      %916 = vmatprep.subr.bf16.mxu0 0
      %917 = vmatpush1.bf16.msra.mxu0 0
      %918 = vmatprep.subr.bf16.mxu0 0
      %919 = vmatpush1.bf16.msra.mxu0 0
      %920 = vmatprep.subr.bf16.mxu0 0
      %921 = vmatpush1.bf16.msra.mxu0 0
      %922 = vmatprep.subr.bf16.mxu0 0
      %923 = vmatpush1.bf16.msra.mxu0 0
      %924 = vmatprep.subr.bf16.mxu0 0
      %925 = vmatpush1.bf16.msra.mxu0 0
      %926 = vmatprep.subr.bf16.mxu0 0
      %927 = vmatpush1.bf16.msra.mxu0 0
      %928 = vmatprep.subr.bf16.mxu0 0
      %929 = vmatpush1.bf16.msra.mxu0 0
      %930 = vmatprep.subr.bf16.mxu0 0
      %931 = vmatpush1.bf16.msra.mxu0 0
      %932 = vmatprep.subr.bf16.mxu0 0
      %933 = vmatpush1.bf16.msra.mxu0 0
      %934 = vmatprep.subr.bf16.mxu0 0
      %935 = vmatpush1.bf16.msra.mxu0 0
      %936 = vmatprep.mubr.bf16.mxu0 0
      %937 = vmatmul.mubr.bf16.gmra.mrb[0].mxu0 %v895
      %v938 = vpop.f32.mrb[0].mxu0
      %v939 = vadd.f32 0.0, %v938
      %v940 = vpop.f32.mrb[0].mxu0
      %v941 = vpop.f32.mrb[0].mxu0
      %v942 = vadd.f32 0.0, %v941
      %v943 = vpop.f32.mrb[0].mxu0
      %944 = vmatprep.mubr.bf16.mxu0 0
      %945 = vmatmul.mubr.bf16.gmra.mrb[0].mxu0 %v898
      %v946 = vpop.f32.mrb[0].mxu0
      %v947 = vadd.f32 0.0, %v946
      %v948 = vpop.f32.mrb[0].mxu0
      %v949 = vpop.f32.mrb[0].mxu0
      %v950 = vpop.f32.mrb[0].mxu0
      %951 = vdwg.mxu0
      %952 = vrot.lane.b32.xlu0 %v784, 120
      %v953 = vpop.permute.xlu0 %952
      %954 = vrot.lane.b32.xlu0 %v785, 120
      %v955 = vpop.permute.xlu0 %954
      %956 = vrot.lane.b32.xlu0 %v784, 88
      %v957 = vpop.permute.xlu0 %956
      %958 = vrot.lane.b32.xlu0 %v785, 88
      %v959 = vpop.permute.xlu0 %958
      %v961 = vsel %vm792, %v953, 0
      %v964 = vsel %vm792, %v955, 0
      %v967 = vsel %vm792, %v957, 0
      %v970 = vsel %vm792, %v959, 0
      %972 = vmatprep.subr.bf16.mxu0 0
      %973 = vmatpush1.bf16.xpose.msra.mxu0 %v967
      %974 = vmatprep.subr.bf16.mxu0 0
      %975 = vmatpush1.bf16.xpose.msra.mxu0 %v970
      %976 = vmatprep.subr.bf16.mxu0 0
      %977 = vmatpush1.bf16.xpose.msra.mxu0 0
      %978 = vmatprep.subr.bf16.mxu0 0
      %979 = vmatpush1.bf16.xpose.msra.mxu0 0
      %980 = vmatprep.subr.bf16.mxu0 0
      %981 = vmatpush1.bf16.xpose.msra.mxu0 0
      %982 = vmatprep.subr.bf16.mxu0 0
      %983 = vmatpush1.bf16.xpose.msra.mxu0 0
      %984 = vmatprep.subr.bf16.mxu0 0
      %985 = vmatpush1.bf16.xpose.msra.mxu0 0
      %986 = vmatprep.subr.bf16.mxu0 0
      %987 = vmatpush1.bf16.xpose.msra.mxu0 0
      %988 = vmatprep.subr.bf16.mxu0 0
      %989 = vmatpush1.bf16.xpose.msra.mxu0 0
      %990 = vmatprep.subr.bf16.mxu0 0
      %991 = vmatpush1.bf16.xpose.msra.mxu0 0
      %992 = vmatprep.subr.bf16.mxu0 0
      %993 = vmatpush1.bf16.xpose.msra.mxu0 0
      %994 = vmatprep.subr.bf16.mxu0 0
      %995 = vmatpush1.bf16.xpose.msra.mxu0 0
      %996 = vmatprep.subr.bf16.mxu0 0
      %997 = vmatpush1.bf16.xpose.msra.mxu0 0
      %998 = vmatprep.subr.bf16.mxu0 0
      %999 = vmatpush1.bf16.xpose.msra.mxu0 0
      %1000 = vmatprep.subr.bf16.mxu0 0
      %1001 = vmatpush1.bf16.xpose.msra.mxu0 0
      %1002 = vmatprep.subr.bf16.mxu0 0
      %1003 = vmatpush1.bf16.xpose.msra.mxu0 0
      %1004 = vmatprep.mubr.bf16.mxu0 0
      %1005 = vmatmul.mubr.bf16.gmra.mrb[0].mxu0 %v961
      %v1006 = vpop.f32.mrb[0].mxu0
      %v1007 = vadd.f32 %v643, %v1006
      %v1008 = vpop.f32.mrb[0].mxu0
      %v1009 = vpop.f32.mrb[0].mxu0
      %v1010 = vadd.f32 %v643, %v1009
      %v1011 = vpop.f32.mrb[0].mxu0
      %1012 = vmatprep.mubr.bf16.mxu0 0
      %1013 = vmatmul.mubr.bf16.gmra.mrb[0].mxu0 %v964
      %v1014 = vpop.f32.mrb[0].mxu0
      %v1015 = vadd.f32 %v643, %v1014
      %v1016 = vpop.f32.mrb[0].mxu0
      %v1017 = vpop.f32.mrb[0].mxu0
      %v1018 = vpop.f32.mrb[0].mxu0
      %1019 = vdwg.mxu0
      %v1020 = vsel %vm853, %v1007, -inf
      %1021 = vmax.xlane.f32.xlu0 %v1020
      %v1022 = vpop.xlane.xlu0 %1021
      %v1023 = vsel %vm853, %v1010, -inf
      %1024 = vmax.xlane.f32.xlu0 %v1023
      %v1025 = vpop.xlane.xlu0 %1024
      %v1026 = vsel %vm853, %v1015, -inf
      %1027 = vmax.xlane.f32.xlu0 %v1026
      %v1028 = vpop.xlane.xlu0 %1027
      %v1029 = vsub.f32 %v1007, %v1022
      %v1030 = vsub.f32 %v1010, %v1025
      %v1031 = vsub.f32 %v1015, %v1028
      %v1032 = vmul.f32 %v1029, 1.442695
      %v1033 = vpow.pop %v1032
      %v1034 = vmul.f32 %v1030, 1.442695
      %v1035 = vpow.pop %v1034
      %v1036 = vmul.f32 %v1031, 1.442695
      %v1037 = vpow.pop %v1036
      %v1038 = vsel %vm853, %v1033, 0.0
      %1039 = vadd.xlane.f32.xlu0 %v1038
      %v1040 = vpop.xlane.xlu0 %1039
      %v1041 = vsel %vm853, %v1035, 0.0
      %1042 = vadd.xlane.f32.xlu0 %v1041
      %v1043 = vpop.xlane.xlu0 %1042
      %v1044 = vsel %vm853, %v1037, 0.0
      %1045 = vadd.xlane.f32.xlu0 %v1044
      %v1046 = vpop.xlane.xlu0 %1045
      %v1047 = vrcp.pop %v1040
      %v1048 = vrcp.pop %v1043
      %v1049 = vrcp.pop %v1046
      %v1050 = vmul.f32 %v1033, %v1047
      %v1051 = vmul.f32 %v1035, %v1048
      %v1052 = vmul.f32 %v1037, %v1049
      %v1053 = vpack.c.bf16 %v1051, %v1050
      %v1054 = vpack.c.bf16 %v1052, %v1052
      %1055 = vrot.lane.b32.xlu0 %v784, 56
      %v1056 = vpop.permute.xlu0 %1055
      %1057 = vrot.lane.b32.xlu0 %v785, 56
      %v1058 = vpop.permute.xlu0 %1057
      %v1061 = vsel %vm853, %v1053, 0
      %v1064 = vsel %vm853, %v1054, 0
      %v1067 = vsel %vm900, %v1058, 0
      %1069 = vmatprep.subr.bf16.mxu0 0
      %1070 = vmatpush1.bf16.msra.mxu0 %v1056
      %1071 = vmatprep.subr.bf16.mxu0 0
      %1072 = vmatpush1.bf16.msra.mxu0 %v1067
      %1073 = vmatprep.subr.bf16.mxu0 0
      %1074 = vmatpush1.bf16.msra.mxu0 0
      %1075 = vmatprep.subr.bf16.mxu0 0
      %1076 = vmatpush1.bf16.msra.mxu0 0
      %1077 = vmatprep.subr.bf16.mxu0 0
      %1078 = vmatpush1.bf16.msra.mxu0 0
      %1079 = vmatprep.subr.bf16.mxu0 0
      %1080 = vmatpush1.bf16.msra.mxu0 0
      %1081 = vmatprep.subr.bf16.mxu0 0
      %1082 = vmatpush1.bf16.msra.mxu0 0
      %1083 = vmatprep.subr.bf16.mxu0 0
      %1084 = vmatpush1.bf16.msra.mxu0 0
      %1085 = vmatprep.subr.bf16.mxu0 0
      %1086 = vmatpush1.bf16.msra.mxu0 0
      %1087 = vmatprep.subr.bf16.mxu0 0
      %1088 = vmatpush1.bf16.msra.mxu0 0
      %1089 = vmatprep.subr.bf16.mxu0 0
      %1090 = vmatpush1.bf16.msra.mxu0 0
      %1091 = vmatprep.subr.bf16.mxu0 0
      %1092 = vmatpush1.bf16.msra.mxu0 0
      %1093 = vmatprep.subr.bf16.mxu0 0
      %1094 = vmatpush1.bf16.msra.mxu0 0
      %1095 = vmatprep.subr.bf16.mxu0 0
      %1096 = vmatpush1.bf16.msra.mxu0 0
      %1097 = vmatprep.subr.bf16.mxu0 0
      %1098 = vmatpush1.bf16.msra.mxu0 0
      %1099 = vmatprep.subr.bf16.mxu0 0
      %1100 = vmatpush1.bf16.msra.mxu0 0
      %1101 = vmatprep.mubr.bf16.mxu0 0
      %1102 = vmatmul.mubr.bf16.gmra.mrb[0].mxu0 %v1061
      %v1103 = vpop.f32.mrb[0].mxu0
      %v1104 = vadd.f32 0.0, %v1103
      %v1105 = vpop.f32.mrb[0].mxu0
      %v1106 = vpop.f32.mrb[0].mxu0
      %v1107 = vadd.f32 0.0, %v1106
      %v1108 = vpop.f32.mrb[0].mxu0
      %1109 = vmatprep.mubr.bf16.mxu0 0
      %1110 = vmatmul.mubr.bf16.gmra.mrb[0].mxu0 %v1064
      %v1111 = vpop.f32.mrb[0].mxu0
      %v1112 = vadd.f32 0.0, %v1111
      %v1113 = vpop.f32.mrb[0].mxu0
      %v1114 = vpop.f32.mrb[0].mxu0
      %v1115 = vpop.f32.mrb[0].mxu0
      %1116 = vdwg.mxu0
      %1117 = vrot.lane.b32.xlu0 %v784, 112
      %v1118 = vpop.permute.xlu0 %1117
      %1119 = vrot.lane.b32.xlu0 %v785, 112
      %v1120 = vpop.permute.xlu0 %1119
      %1121 = vrot.lane.b32.xlu0 %v784, 80
      %v1122 = vpop.permute.xlu0 %1121
      %1123 = vrot.lane.b32.xlu0 %v785, 80
      %v1124 = vpop.permute.xlu0 %1123
      %v1126 = vsel %vm792, %v1118, 0
      %v1129 = vsel %vm792, %v1120, 0
      %v1132 = vsel %vm792, %v1122, 0
      %v1135 = vsel %vm792, %v1124, 0
      %1137 = vmatprep.subr.bf16.mxu0 0
      %1138 = vmatpush1.bf16.xpose.msra.mxu0 %v1132
      %1139 = vmatprep.subr.bf16.mxu0 0
      %1140 = vmatpush1.bf16.xpose.msra.mxu0 %v1135
      %1141 = vmatprep.subr.bf16.mxu0 0
      %1142 = vmatpush1.bf16.xpose.msra.mxu0 0
      %1143 = vmatprep.subr.bf16.mxu0 0
      %1144 = vmatpush1.bf16.xpose.msra.mxu0 0
      %1145 = vmatprep.subr.bf16.mxu0 0
      %1146 = vmatpush1.bf16.xpose.msra.mxu0 0
      %1147 = vmatprep.subr.bf16.mxu0 0
      %1148 = vmatpush1.bf16.xpose.msra.mxu0 0
      %1149 = vmatprep.subr.bf16.mxu0 0
      %1150 = vmatpush1.bf16.xpose.msra.mxu0 0
      %1151 = vmatprep.subr.bf16.mxu0 0
      %1152 = vmatpush1.bf16.xpose.msra.mxu0 0
      %1153 = vmatprep.subr.bf16.mxu0 0
      %1154 = vmatpush1.bf16.xpose.msra.mxu0 0
      %1155 = vmatprep.subr.bf16.mxu0 0
      %1156 = vmatpush1.bf16.xpose.msra.mxu0 0
      %1157 = vmatprep.subr.bf16.mxu0 0
      %1158 = vmatpush1.bf16.xpose.msra.mxu0 0
      %1159 = vmatprep.subr.bf16.mxu0 0
      %1160 = vmatpush1.bf16.xpose.msra.mxu0 0
      %1161 = vmatprep.subr.bf16.mxu0 0
      %1162 = vmatpush1.bf16.xpose.msra.mxu0 0
      %1163 = vmatprep.subr.bf16.mxu0 0
      %1164 = vmatpush1.bf16.xpose.msra.mxu0 0
      %1165 = vmatprep.subr.bf16.mxu0 0
      %1166 = vmatpush1.bf16.xpose.msra.mxu0 0
      %1167 = vmatprep.subr.bf16.mxu0 0
      %1168 = vmatpush1.bf16.xpose.msra.mxu0 0
      %1169 = vmatprep.mubr.bf16.mxu0 0
      %1170 = vmatmul.mubr.bf16.gmra.mrb[0].mxu0 %v1126
      %v1171 = vpop.f32.mrb[0].mxu0
      %v1172 = vadd.f32 %v643, %v1171
      %v1173 = vpop.f32.mrb[0].mxu0
      %v1174 = vpop.f32.mrb[0].mxu0
      %v1175 = vadd.f32 %v643, %v1174
      %v1176 = vpop.f32.mrb[0].mxu0
      %1177 = vmatprep.mubr.bf16.mxu0 0
      %1178 = vmatmul.mubr.bf16.gmra.mrb[0].mxu0 %v1129
      %v1179 = vpop.f32.mrb[0].mxu0
      %v1180 = vadd.f32 %v643, %v1179
      %v1181 = vpop.f32.mrb[0].mxu0
      %v1182 = vpop.f32.mrb[0].mxu0
      %v1183 = vpop.f32.mrb[0].mxu0
      %1184 = vdwg.mxu0
      %v1185 = vsel %vm853, %v1172, -inf
      %1186 = vmax.xlane.f32.xlu0 %v1185
      %v1187 = vpop.xlane.xlu0 %1186
      %v1188 = vsel %vm853, %v1175, -inf
      %1189 = vmax.xlane.f32.xlu0 %v1188
      %v1190 = vpop.xlane.xlu0 %1189
      %v1191 = vsel %vm853, %v1180, -inf
      %1192 = vmax.xlane.f32.xlu0 %v1191
      %v1193 = vpop.xlane.xlu0 %1192
      %v1194 = vsub.f32 %v1172, %v1187
      %v1195 = vsub.f32 %v1175, %v1190
      %v1196 = vsub.f32 %v1180, %v1193
      %v1197 = vmul.f32 %v1194, 1.442695
      %v1198 = vpow.pop %v1197
      %v1199 = vmul.f32 %v1195, 1.442695
      %v1200 = vpow.pop %v1199
      %v1201 = vmul.f32 %v1196, 1.442695
      %v1202 = vpow.pop %v1201
      %v1203 = vsel %vm853, %v1198, 0.0
      %1204 = vadd.xlane.f32.xlu0 %v1203
      %v1205 = vpop.xlane.xlu0 %1204
      %v1206 = vsel %vm853, %v1200, 0.0
      %1207 = vadd.xlane.f32.xlu0 %v1206
      %v1208 = vpop.xlane.xlu0 %1207
      %v1209 = vsel %vm853, %v1202, 0.0
      %1210 = vadd.xlane.f32.xlu0 %v1209
      %v1211 = vpop.xlane.xlu0 %1210
      %v1212 = vrcp.pop %v1205
      %v1213 = vrcp.pop %v1208
      %v1214 = vrcp.pop %v1211
      %v1215 = vmul.f32 %v1198, %v1212
      %v1216 = vmul.f32 %v1200, %v1213
      %v1217 = vmul.f32 %v1202, %v1214
      %v1218 = vpack.c.bf16 %v1216, %v1215
      %v1219 = vpack.c.bf16 %v1217, %v1217
      %1220 = vrot.lane.b32.xlu0 %v784, 48
      %v1221 = vpop.permute.xlu0 %1220
      %1222 = vrot.lane.b32.xlu0 %v785, 48
      %v1223 = vpop.permute.xlu0 %1222
      %v1226 = vsel %vm853, %v1218, 0
      %v1229 = vsel %vm853, %v1219, 0
      %v1232 = vsel %vm900, %v1223, 0
      %1234 = vmatprep.subr.bf16.mxu0 0
      %1235 = vmatpush1.bf16.msra.mxu0 %v1221
      %1236 = vmatprep.subr.bf16.mxu0 0
      %1237 = vmatpush1.bf16.msra.mxu0 %v1232
      %1238 = vmatprep.subr.bf16.mxu0 0
      %1239 = vmatpush1.bf16.msra.mxu0 0
      %1240 = vmatprep.subr.bf16.mxu0 0
      %1241 = vmatpush1.bf16.msra.mxu0 0
      %1242 = vmatprep.subr.bf16.mxu0 0
      %1243 = vmatpush1.bf16.msra.mxu0 0
      %1244 = vmatprep.subr.bf16.mxu0 0
      %1245 = vmatpush1.bf16.msra.mxu0 0
      %1246 = vmatprep.subr.bf16.mxu0 0
      %1247 = vmatpush1.bf16.msra.mxu0 0
      %1248 = vmatprep.subr.bf16.mxu0 0
      %1249 = vmatpush1.bf16.msra.mxu0 0
      %1250 = vmatprep.subr.bf16.mxu0 0
      %1251 = vmatpush1.bf16.msra.mxu0 0
      %1252 = vmatprep.subr.bf16.mxu0 0
      %1253 = vmatpush1.bf16.msra.mxu0 0
      %1254 = vmatprep.subr.bf16.mxu0 0
      %1255 = vmatpush1.bf16.msra.mxu0 0
      %1256 = vmatprep.subr.bf16.mxu0 0
      %1257 = vmatpush1.bf16.msra.mxu0 0
      %1258 = vmatprep.subr.bf16.mxu0 0
      %1259 = vmatpush1.bf16.msra.mxu0 0
      %1260 = vmatprep.subr.bf16.mxu0 0
      %1261 = vmatpush1.bf16.msra.mxu0 0
      %1262 = vmatprep.subr.bf16.mxu0 0
      %1263 = vmatpush1.bf16.msra.mxu0 0
      %1264 = vmatprep.subr.bf16.mxu0 0
      %1265 = vmatpush1.bf16.msra.mxu0 0
      %1266 = vmatprep.mubr.bf16.mxu0 0
      %1267 = vmatmul.mubr.bf16.gmra.mrb[0].mxu0 %v1226
      %v1268 = vpop.f32.mrb[0].mxu0
      %v1269 = vadd.f32 0.0, %v1268
      %v1270 = vpop.f32.mrb[0].mxu0
      %v1271 = vpop.f32.mrb[0].mxu0
      %v1272 = vadd.f32 0.0, %v1271
      %v1273 = vpop.f32.mrb[0].mxu0
      %1274 = vmatprep.mubr.bf16.mxu0 0
      %1275 = vmatmul.mubr.bf16.gmra.mrb[0].mxu0 %v1229
      %v1276 = vpop.f32.mrb[0].mxu0
      %v1277 = vadd.f32 0.0, %v1276
      %v1278 = vpop.f32.mrb[0].mxu0
      %v1279 = vpop.f32.mrb[0].mxu0
      %v1280 = vpop.f32.mrb[0].mxu0
      %1281 = vdwg.mxu0
      %1282 = vrot.lane.b32.xlu0 %v784, 104
      %v1283 = vpop.permute.xlu0 %1282
      %1284 = vrot.lane.b32.xlu0 %v785, 104
      %v1285 = vpop.permute.xlu0 %1284
      %1286 = vrot.lane.b32.xlu0 %v784, 72
      %v1287 = vpop.permute.xlu0 %1286
      %1288 = vrot.lane.b32.xlu0 %v785, 72
      %v1289 = vpop.permute.xlu0 %1288
      %v1291 = vsel %vm792, %v1283, 0
      %v1294 = vsel %vm792, %v1285, 0
      %v1297 = vsel %vm792, %v1287, 0
      %v1300 = vsel %vm792, %v1289, 0
      %1302 = vmatprep.subr.bf16.mxu0 0
      %1303 = vmatpush1.bf16.xpose.msra.mxu0 %v1297
      %1304 = vmatprep.subr.bf16.mxu0 0
      %1305 = vmatpush1.bf16.xpose.msra.mxu0 %v1300
      %1306 = vmatprep.subr.bf16.mxu0 0
      %1307 = vmatpush1.bf16.xpose.msra.mxu0 0
      %1308 = vmatprep.subr.bf16.mxu0 0
      %1309 = vmatpush1.bf16.xpose.msra.mxu0 0
      %1310 = vmatprep.subr.bf16.mxu0 0
      %1311 = vmatpush1.bf16.xpose.msra.mxu0 0
      %1312 = vmatprep.subr.bf16.mxu0 0
      %1313 = vmatpush1.bf16.xpose.msra.mxu0 0
      %1314 = vmatprep.subr.bf16.mxu0 0
      %1315 = vmatpush1.bf16.xpose.msra.mxu0 0
      %1316 = vmatprep.subr.bf16.mxu0 0
      %1317 = vmatpush1.bf16.xpose.msra.mxu0 0
      %1318 = vmatprep.subr.bf16.mxu0 0
      %1319 = vmatpush1.bf16.xpose.msra.mxu0 0
      %1320 = vmatprep.subr.bf16.mxu0 0
      %1321 = vmatpush1.bf16.xpose.msra.mxu0 0
      %1322 = vmatprep.subr.bf16.mxu0 0
      %1323 = vmatpush1.bf16.xpose.msra.mxu0 0
      %1324 = vmatprep.subr.bf16.mxu0 0
      %1325 = vmatpush1.bf16.xpose.msra.mxu0 0
      %1326 = vmatprep.subr.bf16.mxu0 0
      %1327 = vmatpush1.bf16.xpose.msra.mxu0 0
      %1328 = vmatprep.subr.bf16.mxu0 0
      %1329 = vmatpush1.bf16.xpose.msra.mxu0 0
      %1330 = vmatprep.subr.bf16.mxu0 0
      %1331 = vmatpush1.bf16.xpose.msra.mxu0 0
      %1332 = vmatprep.subr.bf16.mxu0 0
      %1333 = vmatpush1.bf16.xpose.msra.mxu0 0
      %1334 = vmatprep.mubr.bf16.mxu0 0
      %1335 = vmatmul.mubr.bf16.gmra.mrb[0].mxu0 %v1291
      %v1336 = vpop.f32.mrb[0].mxu0
      %v1337 = vadd.f32 %v643, %v1336
      %v1338 = vpop.f32.mrb[0].mxu0
      %v1339 = vpop.f32.mrb[0].mxu0
      %v1340 = vadd.f32 %v643, %v1339
      %v1341 = vpop.f32.mrb[0].mxu0
      %1342 = vmatprep.mubr.bf16.mxu0 0
      %1343 = vmatmul.mubr.bf16.gmra.mrb[0].mxu0 %v1294
      %v1344 = vpop.f32.mrb[0].mxu0
      %v1345 = vadd.f32 %v643, %v1344
      %v1346 = vpop.f32.mrb[0].mxu0
      %v1347 = vpop.f32.mrb[0].mxu0
      %v1348 = vpop.f32.mrb[0].mxu0
      %1349 = vdwg.mxu0
      %v1350 = vsel %vm853, %v1337, -inf
      %1351 = vmax.xlane.f32.xlu0 %v1350
      %v1352 = vpop.xlane.xlu0 %1351
      %v1353 = vsel %vm853, %v1340, -inf
      %1354 = vmax.xlane.f32.xlu0 %v1353
      %v1355 = vpop.xlane.xlu0 %1354
      %v1356 = vsel %vm853, %v1345, -inf
      %1357 = vmax.xlane.f32.xlu0 %v1356
      %v1358 = vpop.xlane.xlu0 %1357
      %v1359 = vsub.f32 %v1337, %v1352
      %v1360 = vsub.f32 %v1340, %v1355
      %v1361 = vsub.f32 %v1345, %v1358
      %v1362 = vmul.f32 %v1359, 1.442695
      %v1363 = vpow.pop %v1362
      %v1364 = vmul.f32 %v1360, 1.442695
      %v1365 = vpow.pop %v1364
      %v1366 = vmul.f32 %v1361, 1.442695
      %v1367 = vpow.pop %v1366
      %v1368 = vsel %vm853, %v1363, 0.0
      %1369 = vadd.xlane.f32.xlu0 %v1368
      %v1370 = vpop.xlane.xlu0 %1369
      %v1371 = vsel %vm853, %v1365, 0.0
      %1372 = vadd.xlane.f32.xlu0 %v1371
      %v1373 = vpop.xlane.xlu0 %1372
      %v1374 = vsel %vm853, %v1367, 0.0
      %1375 = vadd.xlane.f32.xlu0 %v1374
      %v1376 = vpop.xlane.xlu0 %1375
      %v1377 = vrcp.pop %v1370
      %v1378 = vrcp.pop %v1373
      %v1379 = vrcp.pop %v1376
      %v1380 = vmul.f32 %v1363, %v1377
      %v1381 = vmul.f32 %v1365, %v1378
      %v1382 = vmul.f32 %v1367, %v1379
      %v1383 = vpack.c.bf16 %v1381, %v1380
      %v1384 = vpack.c.bf16 %v1382, %v1382
      %1385 = vrot.lane.b32.xlu0 %v784, 40
      %v1386 = vpop.permute.xlu0 %1385
      %1387 = vrot.lane.b32.xlu0 %v785, 40
      %v1388 = vpop.permute.xlu0 %1387
      %v1391 = vsel %vm853, %v1383, 0
      %v1394 = vsel %vm853, %v1384, 0
      %v1397 = vsel %vm900, %v1388, 0
      %1399 = vmatprep.subr.bf16.mxu0 0
      %1400 = vmatpush1.bf16.msra.mxu0 %v1386
      %1401 = vmatprep.subr.bf16.mxu0 0
      %1402 = vmatpush1.bf16.msra.mxu0 %v1397
      %1403 = vmatprep.subr.bf16.mxu0 0
      %1404 = vmatpush1.bf16.msra.mxu0 0
      %1405 = vmatprep.subr.bf16.mxu0 0
      %1406 = vmatpush1.bf16.msra.mxu0 0
      %1407 = vmatprep.subr.bf16.mxu0 0
      %1408 = vmatpush1.bf16.msra.mxu0 0
      %1409 = vmatprep.subr.bf16.mxu0 0
      %1410 = vmatpush1.bf16.msra.mxu0 0
      %1411 = vmatprep.subr.bf16.mxu0 0
      %1412 = vmatpush1.bf16.msra.mxu0 0
      %1413 = vmatprep.subr.bf16.mxu0 0
      %1414 = vmatpush1.bf16.msra.mxu0 0
      %1415 = vmatprep.subr.bf16.mxu0 0
      %1416 = vmatpush1.bf16.msra.mxu0 0
      %1417 = vmatprep.subr.bf16.mxu0 0
      %1418 = vmatpush1.bf16.msra.mxu0 0
      %1419 = vmatprep.subr.bf16.mxu0 0
      %1420 = vmatpush1.bf16.msra.mxu0 0
      %1421 = vmatprep.subr.bf16.mxu0 0
      %1422 = vmatpush1.bf16.msra.mxu0 0
      %1423 = vmatprep.subr.bf16.mxu0 0
      %1424 = vmatpush1.bf16.msra.mxu0 0
      %1425 = vmatprep.subr.bf16.mxu0 0
      %1426 = vmatpush1.bf16.msra.mxu0 0
      %1427 = vmatprep.subr.bf16.mxu0 0
      %1428 = vmatpush1.bf16.msra.mxu0 0
      %1429 = vmatprep.subr.bf16.mxu0 0
      %1430 = vmatpush1.bf16.msra.mxu0 0
      %1431 = vmatprep.mubr.bf16.mxu0 0
      %1432 = vmatmul.mubr.bf16.gmra.mrb[0].mxu0 %v1391
      %v1433 = vpop.f32.mrb[0].mxu0
      %v1434 = vadd.f32 0.0, %v1433
      %v1435 = vpop.f32.mrb[0].mxu0
      %v1436 = vpop.f32.mrb[0].mxu0
      %v1437 = vadd.f32 0.0, %v1436
      %v1438 = vpop.f32.mrb[0].mxu0
      %1439 = vmatprep.mubr.bf16.mxu0 0
      %1440 = vmatmul.mubr.bf16.gmra.mrb[0].mxu0 %v1394
      %v1441 = vpop.f32.mrb[0].mxu0
      %v1442 = vadd.f32 0.0, %v1441
      %v1443 = vpop.f32.mrb[0].mxu0
      %v1444 = vpop.f32.mrb[0].mxu0
      %v1445 = vpop.f32.mrb[0].mxu0
      %1446 = vdwg.mxu0
      %1450 = vrot.lane.b32.xlu0 %v1104, 8
      %v1451 = vpop.permute.xlu0 %1450
      %1452 = vrot.lane.b32.xlu0 %v1107, 8
      %v1453 = vpop.permute.xlu0 %1452
      %1454 = vrot.lane.b32.xlu0 %v1112, 8
      %v1455 = vpop.permute.xlu0 %1454
      %1462 = vrot.lane.b32.xlu0 %v1269, 16
      %v1463 = vpop.permute.xlu0 %1462
      %1464 = vrot.lane.b32.xlu0 %v1272, 16
      %v1465 = vpop.permute.xlu0 %1464
      %1466 = vrot.lane.b32.xlu0 %v1277, 16
      %v1467 = vpop.permute.xlu0 %1466
      %1474 = vrot.lane.b32.xlu0 %v1434, 24
      %v1475 = vpop.permute.xlu0 %1474
      %1476 = vrot.lane.b32.xlu0 %v1437, 24
      %v1477 = vpop.permute.xlu0 %1476
      %1478 = vrot.lane.b32.xlu0 %v1442, 24
      %v1479 = vpop.permute.xlu0 %1478
      %v1483 = vsel %vm792, %v939, %v1451
      %v1484 = vsel %vm792, %v942, %v1453
      %v1485 = vsel %vm792, %v947, %v1455
      %vm1486 = vcmask 130048
      %v1487 = vsel %vm1486, %v1483, %v1463
      %v1488 = vsel %vm1486, %v1484, %v1465
      %v1489 = vsel %vm1486, %v1485, %v1467
      %v1490 = vsel %vm853, %v1487, %v1475
      %v1491 = vsel %vm853, %v1488, %v1477
      %v1492 = vsel %vm853, %v1489, %v1479
      %v1493 = vpack.c.bf16 %v1491, %v1490
      %v1494 = vpack.c.bf16 %v1492, %v1492
      %v1495 = vld [vmem:[%s7] sm:$0xf]
      %v1496 = vld [vmem:[%s7 + $0x4] sm:$0xf]
      %v1497 = vld [vmem:[%s7 + $0x8] sm:$0xf]
      %v1498 = vld [vmem:[%s7 + $0xc] sm:$0xf]
      %v1503 = vunpack.c.l.b16 %v1495
      %v1504 = vunpack.c.l.b16 %v1496
      %v1505 = vunpack.c.l.b16 %v1497
      %v1506 = vunpack.c.l.b16 %v1498
      %v1507 = vpack.c.b16 %v1504, %v1503
      %v1508 = vpack.c.b16 %v1506, %v1505
      %v1512 = vsel %vm646, %v1493, 0
      %v1515 = vsel %vm646, %v1494, 0
      %1517 = vmatprep.subr.bf16.mxu0 0
      %1518 = vmatpush1.bf16.msra.mxu0 %v1507
      %1519 = vmatprep.subr.bf16.mxu0 0
      %1520 = vmatpush1.bf16.msra.mxu0 %v1508
      %1521 = vmatprep.subr.bf16.mxu0 0
      %1522 = vmatpush1.bf16.msra.mxu0 0
      %1523 = vmatprep.subr.bf16.mxu0 0
      %1524 = vmatpush1.bf16.msra.mxu0 0
      %1525 = vmatprep.subr.bf16.mxu0 0
      %1526 = vmatpush1.bf16.msra.mxu0 0
      %1527 = vmatprep.subr.bf16.mxu0 0
      %1528 = vmatpush1.bf16.msra.mxu0 0
      %1529 = vmatprep.subr.bf16.mxu0 0
      %1530 = vmatpush1.bf16.msra.mxu0 0
      %1531 = vmatprep.subr.bf16.mxu0 0
      %1532 = vmatpush1.bf16.msra.mxu0 0
      %1533 = vmatprep.subr.bf16.mxu0 0
      %1534 = vmatpush1.bf16.msra.mxu0 0
      %1535 = vmatprep.subr.bf16.mxu0 0
      %1536 = vmatpush1.bf16.msra.mxu0 0
      %1537 = vmatprep.subr.bf16.mxu0 0
      %1538 = vmatpush1.bf16.msra.mxu0 0
      %1539 = vmatprep.subr.bf16.mxu0 0
      %1540 = vmatpush1.bf16.msra.mxu0 0
      %1541 = vmatprep.subr.bf16.mxu0 0
      %1542 = vmatpush1.bf16.msra.mxu0 0
      %1543 = vmatprep.subr.bf16.mxu0 0
      %1544 = vmatpush1.bf16.msra.mxu0 0
      %1545 = vmatprep.subr.bf16.mxu0 0
      %1546 = vmatpush1.bf16.msra.mxu0 0
      %1547 = vmatprep.subr.bf16.mxu0 0
      %1548 = vmatpush1.bf16.msra.mxu0 0
      %1549 = vmatprep.mubr.bf16.mxu0 0
      %1550 = vmatmul.mubr.bf16.gmra.mrb[0].mxu0 %v1512
      %v1551 = vpop.f32.mrb[0].mxu0
      %v1552 = vadd.f32 0.0, %v1551
      %v1553 = vpop.f32.mrb[0].mxu0
      %v1554 = vpop.f32.mrb[0].mxu0
      %v1555 = vadd.f32 0.0, %v1554
      %v1556 = vpop.f32.mrb[0].mxu0
      %1557 = vmatprep.mubr.bf16.mxu0 0
      %1558 = vmatmul.mubr.bf16.gmra.mrb[0].mxu0 %v1515
      %v1559 = vpop.f32.mrb[0].mxu0
      %v1560 = vadd.f32 0.0, %v1559
      %v1561 = vpop.f32.mrb[0].mxu0
      %v1562 = vpop.f32.mrb[0].mxu0
      %v1563 = vpop.f32.mrb[0].mxu0
      %1564 = vdwg.mxu0
      %v1565 = vadd.f32 %v627, %v1552
      %v1566 = vadd.f32 %v630, %v1555
      %v1567 = vadd.f32 %v635, %v1560
      %v1568 = vld [vmem:[%s8] sm:$0x1]
      %v1570 = vlaneseq
      %v1571 = vshrl.u32 %v1570, 7
      %v1572 = vsub.s32 0, %v1571
      %v1573 = vrot.slane %v1568, %v1572
      %v1575 = vadd.f32 %v1565, %v1573
      %v1576 = vadd.f32 %v1566, %v1573
      %v1577 = vadd.f32 %v1567, %v1573
      %v1578 = vld [vmem:[%s9] sm:$0x1]
      %v1579 = vld [vmem:[%s10] sm:$0x1]
      %v1580 = vsel %vm646, %v1575, 0.0
      %1581 = vadd.xlane.f32.xlu0 %v1580
      %v1582 = vpop.xlane.xlu0 %1581
      %v1583 = vsel %vm646, %v1576, 0.0
      %1584 = vadd.xlane.f32.xlu0 %v1583
      %v1585 = vpop.xlane.xlu0 %1584
      %v1586 = vsel %vm646, %v1577, 0.0
      %1587 = vadd.xlane.f32.xlu0 %v1586
      %v1588 = vpop.xlane.xlu0 %1587
      %v1589 = vmul.f32 %v1582, %v656
      %v1590 = vmul.f32 %v1585, %v656
      %v1591 = vmul.f32 %v1588, %v656
      %v1592 = vsub.f32 %v1575, %v1589
      %v1593 = vsub.f32 %v1576, %v1590
      %v1594 = vsub.f32 %v1577, %v1591
      %v1595 = vmul.f32 %v1592, %v1592
      %v1596 = vmul.f32 %v1593, %v1593
      %v1597 = vmul.f32 %v1594, %v1594
      %v1598 = vsel %vm646, %v1595, 0.0
      %1599 = vadd.xlane.f32.xlu0 %v1598
      %v1600 = vpop.xlane.xlu0 %1599
      %v1601 = vsel %vm646, %v1596, 0.0
      %1602 = vadd.xlane.f32.xlu0 %v1601
      %v1603 = vpop.xlane.xlu0 %1602
      %v1604 = vsel %vm646, %v1597, 0.0
      %1605 = vadd.xlane.f32.xlu0 %v1604
      %v1606 = vpop.xlane.xlu0 %1605
      %v1607 = vmul.f32 %v1600, %v656
      %v1608 = vmul.f32 %v1603, %v656
      %v1609 = vmul.f32 %v1606, %v656
      %v1610 = vadd.f32 %v1607, 1e-06
      %v1611 = vadd.f32 %v1608, 1e-06
      %v1612 = vadd.f32 %v1609, 1e-06
      %v1613 = vrsqrt.pop %v1610
      %v1614 = vrsqrt.pop %v1611
      %v1615 = vrsqrt.pop %v1612
      %v1616 = vmul.f32 %v1592, %v1613
      %v1617 = vmul.f32 %v1593, %v1614
      %v1618 = vmul.f32 %v1594, %v1615
      %v1620 = vlaneseq
      %v1621 = vshrl.u32 %v1620, 7
      %v1622 = vsub.s32 0, %v1621
      %v1623 = vrot.slane %v1578, %v1622
      %v1625 = vmul.f32 %v1616, %v1623
      %v1626 = vmul.f32 %v1617, %v1623
      %v1627 = vmul.f32 %v1618, %v1623
      %v1629 = vlaneseq
      %v1630 = vshrl.u32 %v1629, 7
      %v1631 = vsub.s32 0, %v1630
      %v1632 = vrot.slane %v1579, %v1631
      %v1634 = vadd.f32 %v1625, %v1632
      %v1635 = vadd.f32 %v1626, %v1632
      %v1636 = vadd.f32 %v1627, %v1632
      %v1637 = vpack.c.bf16 %v1635, %v1634
      %v1638 = vpack.c.bf16 %v1636, %v1636
      %v1639 = vld [vmem:[%s11] sm:$0xf]
      %v1640 = vld [vmem:[%s11 + $0x4] sm:$0xf]
      %v1641 = vld [vmem:[%s11 + $0x8] sm:$0xf]
      %v1642 = vld [vmem:[%s11 + $0xc] sm:$0xf]
      %v1643 = vld [vmem:[%s12] sm:$0x1]
      %v1645 = vlaneseq
      %v1646 = vshrl.u32 %v1645, 7
      %v1647 = vsub.s32 0, %v1646
      %v1648 = vrot.slane %v1643, %v1647
      %v1654 = vunpack.c.l.b16 %v1639
      %v1655 = vunpack.c.l.b16 %v1640
      %v1656 = vunpack.c.l.b16 %v1641
      %v1657 = vunpack.c.l.b16 %v1642
      %v1658 = vpack.c.b16 %v1655, %v1654
      %v1659 = vpack.c.b16 %v1657, %v1656
      %v1663 = vsel %vm646, %v1637, 0
      %v1666 = vsel %vm646, %v1638, 0
      %1668 = vmatprep.subr.bf16.mxu0 0
      %1669 = vmatpush1.bf16.msra.mxu0 %v1658
      %1670 = vmatprep.subr.bf16.mxu0 0
      %1671 = vmatpush1.bf16.msra.mxu0 %v1659
      %1672 = vmatprep.subr.bf16.mxu0 0
      %1673 = vmatpush1.bf16.msra.mxu0 0
      %1674 = vmatprep.subr.bf16.mxu0 0
      %1675 = vmatpush1.bf16.msra.mxu0 0
      %1676 = vmatprep.subr.bf16.mxu0 0
      %1677 = vmatpush1.bf16.msra.mxu0 0
      %1678 = vmatprep.subr.bf16.mxu0 0
      %1679 = vmatpush1.bf16.msra.mxu0 0
      %1680 = vmatprep.subr.bf16.mxu0 0
      %1681 = vmatpush1.bf16.msra.mxu0 0
      %1682 = vmatprep.subr.bf16.mxu0 0
      %1683 = vmatpush1.bf16.msra.mxu0 0
      %1684 = vmatprep.subr.bf16.mxu0 0
      %1685 = vmatpush1.bf16.msra.mxu0 0
      %1686 = vmatprep.subr.bf16.mxu0 0
      %1687 = vmatpush1.bf16.msra.mxu0 0
      %1688 = vmatprep.subr.bf16.mxu0 0
      %1689 = vmatpush1.bf16.msra.mxu0 0
      %1690 = vmatprep.subr.bf16.mxu0 0
      %1691 = vmatpush1.bf16.msra.mxu0 0
      %1692 = vmatprep.subr.bf16.mxu0 0
      %1693 = vmatpush1.bf16.msra.mxu0 0
      %1694 = vmatprep.subr.bf16.mxu0 0
      %1695 = vmatpush1.bf16.msra.mxu0 0
      %1696 = vmatprep.subr.bf16.mxu0 0
      %1697 = vmatpush1.bf16.msra.mxu0 0
      %1698 = vmatprep.subr.bf16.mxu0 0
      %1699 = vmatpush1.bf16.msra.mxu0 0
      %1700 = vmatprep.mubr.bf16.mxu0 0
      %1701 = vmatmul.mubr.bf16.gmra.mrb[0].mxu0 %v1663
      %v1702 = vpop.f32.mrb[0].mxu0
      %v1703 = vadd.f32 %v1648, %v1702
      %v1704 = vpop.f32.mrb[0].mxu0
      %v1705 = vpop.f32.mrb[0].mxu0
      %v1706 = vadd.f32 %v1648, %v1705
      %v1707 = vpop.f32.mrb[0].mxu0
      %1708 = vmatprep.mubr.bf16.mxu0 0
      %1709 = vmatmul.mubr.bf16.gmra.mrb[0].mxu0 %v1666
      %v1710 = vpop.f32.mrb[0].mxu0
      %v1711 = vadd.f32 %v1648, %v1710
      %v1712 = vpop.f32.mrb[0].mxu0
      %v1713 = vpop.f32.mrb[0].mxu0
      %v1714 = vpop.f32.mrb[0].mxu0
      %1715 = vdwg.mxu0
      %v1716 = vmul.f32 %v1703, 0.5
      %v1717 = vmul.f32 %v1706, 0.5
      %v1718 = vmul.f32 %v1711, 0.5
      %v1719 = vmul.f32 %v1703, 0.70710677
      %v1720 = vmul.f32 %v1706, 0.70710677
      %v1721 = vmul.f32 %v1711, 0.70710677
      %v1722 = vand.u32 2147483647, %v1719
      %v1723 = vand.u32 2147483647, %v1720
      %v1724 = vand.u32 2147483647, %v1721
      %v1725 = vmul.f32 %v1722, 0.3275911
      %v1726 = vmul.f32 %v1723, 0.3275911
      %v1727 = vmul.f32 %v1724, 0.3275911
      %v1728 = vadd.f32 %v1725, 1.0
      %v1729 = vadd.f32 %v1726, 1.0
      %v1730 = vadd.f32 %v1727, 1.0
      %v1731 = vrcp.pop %v1728
      %v1732 = vmul.f32 1.0, %v1731
      %v1733 = vrcp.pop %v1729
      %v1734 = vmul.f32 1.0, %v1733
      %v1735 = vrcp.pop %v1730
      %v1736 = vmul.f32 1.0, %v1735
      %v1737 = vmul.f32 %v1732, 1.0614054
      %v1738 = vmul.f32 %v1734, 1.0614054
      %v1739 = vmul.f32 %v1736, 1.0614054
      %v1740 = vadd.f32 %v1737, -1.4531521
      %v1741 = vadd.f32 %v1738, -1.4531521
      %v1742 = vadd.f32 %v1739, -1.4531521
      %v1743 = vmul.f32 %v1740, %v1732
      %v1744 = vmul.f32 %v1741, %v1734
      %v1745 = vmul.f32 %v1742, %v1736
      %v1746 = vadd.f32 %v1743, 1.4214138
      %v1747 = vadd.f32 %v1744, 1.4214138
      %v1748 = vadd.f32 %v1745, 1.4214138
      %v1749 = vmul.f32 %v1746, %v1732
      %v1750 = vmul.f32 %v1747, %v1734
      %v1751 = vmul.f32 %v1748, %v1736
      %v1752 = vadd.f32 %v1749, -0.28449672
      %v1753 = vadd.f32 %v1750, -0.28449672
      %v1754 = vadd.f32 %v1751, -0.28449672
      %v1755 = vmul.f32 %v1752, %v1732
      %v1756 = vmul.f32 %v1753, %v1734
      %v1757 = vmul.f32 %v1754, %v1736
      %v1758 = vadd.f32 %v1755, 0.2548296
      %v1759 = vadd.f32 %v1756, 0.2548296
      %v1760 = vadd.f32 %v1757, 0.2548296
      %v1761 = vmul.f32 %v1758, %v1732
      %v1762 = vmul.f32 %v1759, %v1734
      %v1763 = vmul.f32 %v1760, %v1736
      %v1764 = vsub.f32 0.0, %v1722
      %v1765 = vsub.f32 0.0, %v1723
      %v1766 = vsub.f32 0.0, %v1724
      %v1767 = vmul.f32 %v1764, %v1722
      %v1768 = vmul.f32 %v1765, %v1723
      %v1769 = vmul.f32 %v1766, %v1724
      %v1770 = vmul.f32 %v1767, 1.442695
      %v1771 = vpow.pop %v1770
      %v1772 = vmul.f32 %v1768, 1.442695
      %v1773 = vpow.pop %v1772
      %v1774 = vmul.f32 %v1769, 1.442695
      %v1775 = vpow.pop %v1774
      %v1776 = vmul.f32 %v1761, %v1771
      %v1777 = vmul.f32 %v1762, %v1773
      %v1778 = vmul.f32 %v1763, %v1775
      %v1779 = vsub.f32 1.0, %v1776
      %v1780 = vsub.f32 1.0, %v1777
      %v1781 = vsub.f32 1.0, %v1778
      %vm1782 = vcmp.ge.f32.partialorder %v1719, 0.0
      %vm1783 = vcmp.ge.f32.partialorder %v1720, 0.0
      %vm1784 = vcmp.ge.f32.partialorder %v1721, 0.0
      %v1785 = vsub.f32 0.0, %v1779
      %v1786 = vsub.f32 0.0, %v1780
      %v1787 = vsub.f32 0.0, %v1781
      %v1788 = vsel %vm1782, %v1779, %v1785
      %v1789 = vsel %vm1783, %v1780, %v1786
      %v1790 = vsel %vm1784, %v1781, %v1787
      %v1791 = vadd.f32 %v1788, 1.0
      %v1792 = vadd.f32 %v1789, 1.0
      %v1793 = vadd.f32 %v1790, 1.0
      %v1794 = vmul.f32 %v1716, %v1791
      %v1795 = vmul.f32 %v1717, %v1792
      %v1796 = vmul.f32 %v1718, %v1793
      %v1797 = vpack.c.bf16 %v1795, %v1794
      %v1798 = vpack.c.bf16 %v1796, %v1796
      %v1799 = vld [vmem:[%s13] sm:$0xf]
      %v1800 = vld [vmem:[%s13 + $0x4] sm:$0xf]
      %v1801 = vld [vmem:[%s13 + $0x8] sm:$0xf]
      %v1802 = vld [vmem:[%s13 + $0xc] sm:$0xf]
      %v1803 = vld [vmem:[%s13 + $0x10] sm:$0xf]
      %v1804 = vld [vmem:[%s13 + $0x14] sm:$0xf]
      %v1805 = vld [vmem:[%s13 + $0x18] sm:$0xf]
      %v1806 = vld [vmem:[%s13 + $0x1c] sm:$0xf]
      %v1807 = vld [vmem:[%s14] sm:$0x1]
      %v1809 = vlaneseq
      %v1810 = vshrl.u32 %v1809, 7
      %v1811 = vsub.s32 0, %v1810
      %v1812 = vrot.slane %v1807, %v1811
      %v1822 = vunpack.c.l.b16 %v1799
      %v1823 = vunpack.c.l.b16 %v1800
      %v1824 = vunpack.c.l.b16 %v1801
      %v1825 = vunpack.c.l.b16 %v1802
      %v1826 = vunpack.c.l.b16 %v1803
      %v1827 = vunpack.c.l.b16 %v1804
      %v1828 = vunpack.c.l.b16 %v1805
      %v1829 = vunpack.c.l.b16 %v1806
      %v1830 = vpack.c.b16 %v1823, %v1822
      %v1831 = vpack.c.b16 %v1825, %v1824
      %v1832 = vpack.c.b16 %v1827, %v1826
      %v1833 = vpack.c.b16 %v1829, %v1828
      %vm1838 = vcmask 523264
      %v1840 = vsel %vm1838, %v1797, 0
      %v1843 = vsel %vm1838, %v1798, 0
      %1845 = vmatprep.subr.bf16.mxu0 0
      %1846 = vmatpush1.bf16.msra.mxu0 %v1830
      %1847 = vmatprep.subr.bf16.mxu0 0
      %1848 = vmatpush1.bf16.msra.mxu0 %v1831
      %1849 = vmatprep.subr.bf16.mxu0 0
      %1850 = vmatpush1.bf16.msra.mxu0 %v1832
      %1851 = vmatprep.subr.bf16.mxu0 0
      %1852 = vmatpush1.bf16.msra.mxu0 %v1833
      %1853 = vmatprep.subr.bf16.mxu0 0
      %1854 = vmatpush1.bf16.msra.mxu0 0
      %1855 = vmatprep.subr.bf16.mxu0 0
      %1856 = vmatpush1.bf16.msra.mxu0 0
      %1857 = vmatprep.subr.bf16.mxu0 0
      %1858 = vmatpush1.bf16.msra.mxu0 0
      %1859 = vmatprep.subr.bf16.mxu0 0
      %1860 = vmatpush1.bf16.msra.mxu0 0
      %1861 = vmatprep.subr.bf16.mxu0 0
      %1862 = vmatpush1.bf16.msra.mxu0 0
      %1863 = vmatprep.subr.bf16.mxu0 0
      %1864 = vmatpush1.bf16.msra.mxu0 0
      %1865 = vmatprep.subr.bf16.mxu0 0
      %1866 = vmatpush1.bf16.msra.mxu0 0
      %1867 = vmatprep.subr.bf16.mxu0 0
      %1868 = vmatpush1.bf16.msra.mxu0 0
      %1869 = vmatprep.subr.bf16.mxu0 0
      %1870 = vmatpush1.bf16.msra.mxu0 0
      %1871 = vmatprep.subr.bf16.mxu0 0
      %1872 = vmatpush1.bf16.msra.mxu0 0
      %1873 = vmatprep.subr.bf16.mxu0 0
      %1874 = vmatpush1.bf16.msra.mxu0 0
      %1875 = vmatprep.subr.bf16.mxu0 0
      %1876 = vmatpush1.bf16.msra.mxu0 0
      %1877 = vmatprep.mubr.bf16.mxu0 0
      %1878 = vmatmul.mubr.bf16.gmra.mrb[0].mxu0 %v1840
      %v1879 = vpop.f32.mrb[0].mxu0
      %v1880 = vadd.f32 %v1812, %v1879
      %v1881 = vpop.f32.mrb[0].mxu0
      %v1882 = vpop.f32.mrb[0].mxu0
      %v1883 = vadd.f32 %v1812, %v1882
      %v1884 = vpop.f32.mrb[0].mxu0
      %1885 = vmatprep.mubr.bf16.mxu0 0
      %1886 = vmatmul.mubr.bf16.gmra.mrb[0].mxu0 %v1843
      %v1887 = vpop.f32.mrb[0].mxu0
      %v1888 = vadd.f32 %v1812, %v1887
      %v1889 = vpop.f32.mrb[0].mxu0
      %v1890 = vpop.f32.mrb[0].mxu0
      %v1891 = vpop.f32.mrb[0].mxu0
      %1892 = vdwg.mxu0
      %v1893 = vadd.f32 %v1575, %v1880
      %v1894 = vadd.f32 %v1576, %v1883
      %v1895 = vadd.f32 %v1577, %v1888
      %s1896 = scalar_lea.vmem %s3, 1
      %v1897 = vld [vmem:[%s1896] sm:$0x1]
      %s1898 = scalar_lea.vmem %s4, 1
      %v1899 = vld [vmem:[%s1898] sm:$0x1]
      %v1900 = vsel %vm646, %v1893, 0.0
      %1901 = vadd.xlane.f32.xlu0 %v1900
      %v1902 = vpop.xlane.xlu0 %1901
      %v1903 = vsel %vm646, %v1894, 0.0
      %1904 = vadd.xlane.f32.xlu0 %v1903
      %v1905 = vpop.xlane.xlu0 %1904
      %v1906 = vsel %vm646, %v1895, 0.0
      %1907 = vadd.xlane.f32.xlu0 %v1906
      %v1908 = vpop.xlane.xlu0 %1907
      %v1909 = vmul.f32 %v1902, %v656
      %v1910 = vmul.f32 %v1905, %v656
      %v1911 = vmul.f32 %v1908, %v656
      %v1912 = vsub.f32 %v1893, %v1909
      %v1913 = vsub.f32 %v1894, %v1910
      %v1914 = vsub.f32 %v1895, %v1911
      %v1915 = vmul.f32 %v1912, %v1912
      %v1916 = vmul.f32 %v1913, %v1913
      %v1917 = vmul.f32 %v1914, %v1914
      %v1918 = vsel %vm646, %v1915, 0.0
      %1919 = vadd.xlane.f32.xlu0 %v1918
      %v1920 = vpop.xlane.xlu0 %1919
      %v1921 = vsel %vm646, %v1916, 0.0
      %1922 = vadd.xlane.f32.xlu0 %v1921
      %v1923 = vpop.xlane.xlu0 %1922
      %v1924 = vsel %vm646, %v1917, 0.0
      %1925 = vadd.xlane.f32.xlu0 %v1924
      %v1926 = vpop.xlane.xlu0 %1925
      %v1927 = vmul.f32 %v1920, %v656
      %v1928 = vmul.f32 %v1923, %v656
      %v1929 = vmul.f32 %v1926, %v656
      %v1930 = vadd.f32 %v1927, 1e-06
      %v1931 = vadd.f32 %v1928, 1e-06
      %v1932 = vadd.f32 %v1929, 1e-06
      %v1933 = vrsqrt.pop %v1930
      %v1934 = vrsqrt.pop %v1931
      %v1935 = vrsqrt.pop %v1932
      %v1936 = vmul.f32 %v1912, %v1933
      %v1937 = vmul.f32 %v1913, %v1934
      %v1938 = vmul.f32 %v1914, %v1935
      %v1940 = vlaneseq
      %v1941 = vshrl.u32 %v1940, 7
      %v1942 = vsub.s32 0, %v1941
      %v1943 = vrot.slane %v1897, %v1942
      %v1945 = vmul.f32 %v1936, %v1943
      %v1946 = vmul.f32 %v1937, %v1943
      %v1947 = vmul.f32 %v1938, %v1943
      %v1949 = vlaneseq
      %v1950 = vshrl.u32 %v1949, 7
      %v1951 = vsub.s32 0, %v1950
      %v1952 = vrot.slane %v1899, %v1951
      %v1954 = vadd.f32 %v1945, %v1952
      %v1955 = vadd.f32 %v1946, %v1952
      %v1956 = vadd.f32 %v1947, %v1952
      %v1957 = vpack.c.bf16 %v1955, %v1954
      %v1958 = vpack.c.bf16 %v1956, %v1956
      %s1959 = scalar_lea.vmem %s5, 16
      %v1960 = vld [vmem:[%s1959] sm:$0xf]
      %v1961 = vld [vmem:[%s1959 + $0x4] sm:$0xf]
      %v1962 = vld [vmem:[%s1959 + $0x8] sm:$0xf]
      %v1963 = vld [vmem:[%s1959 + $0xc] sm:$0xf]
      %s1964 = scalar_lea.vmem %s6, 1
      %v1965 = vld [vmem:[%s1964] sm:$0x1]
      %v1967 = vlaneseq
      %v1968 = vshrl.u32 %v1967, 7
      %v1969 = vsub.s32 0, %v1968
      %v1970 = vrot.slane %v1965, %v1969
      %v1976 = vunpack.c.l.b16 %v1960
      %v1977 = vunpack.c.l.b16 %v1961
      %v1978 = vunpack.c.l.b16 %v1962
      %v1979 = vunpack.c.l.b16 %v1963
      %v1980 = vpack.c.b16 %v1977, %v1976
      %v1981 = vpack.c.b16 %v1979, %v1978
      %v1985 = vsel %vm646, %v1957, 0
      %v1988 = vsel %vm646, %v1958, 0
      %1990 = vmatprep.subr.bf16.mxu0 0
      %1991 = vmatpush1.bf16.msra.mxu0 %v1980
      %1992 = vmatprep.subr.bf16.mxu0 0
      %1993 = vmatpush1.bf16.msra.mxu0 %v1981
      %1994 = vmatprep.subr.bf16.mxu0 0
      %1995 = vmatpush1.bf16.msra.mxu0 0
      %1996 = vmatprep.subr.bf16.mxu0 0
      %1997 = vmatpush1.bf16.msra.mxu0 0
      %1998 = vmatprep.subr.bf16.mxu0 0
      %1999 = vmatpush1.bf16.msra.mxu0 0
      %2000 = vmatprep.subr.bf16.mxu0 0
      %2001 = vmatpush1.bf16.msra.mxu0 0
      %2002 = vmatprep.subr.bf16.mxu0 0
      %2003 = vmatpush1.bf16.msra.mxu0 0
      %2004 = vmatprep.subr.bf16.mxu0 0
      %2005 = vmatpush1.bf16.msra.mxu0 0
      %2006 = vmatprep.subr.bf16.mxu0 0
      %2007 = vmatpush1.bf16.msra.mxu0 0
      %2008 = vmatprep.subr.bf16.mxu0 0
      %2009 = vmatpush1.bf16.msra.mxu0 0
      %2010 = vmatprep.subr.bf16.mxu0 0
      %2011 = vmatpush1.bf16.msra.mxu0 0
      %2012 = vmatprep.subr.bf16.mxu0 0
      %2013 = vmatpush1.bf16.msra.mxu0 0
      %2014 = vmatprep.subr.bf16.mxu0 0
      %2015 = vmatpush1.bf16.msra.mxu0 0
      %2016 = vmatprep.subr.bf16.mxu0 0
      %2017 = vmatpush1.bf16.msra.mxu0 0
      %2018 = vmatprep.subr.bf16.mxu0 0
      %2019 = vmatpush1.bf16.msra.mxu0 0
      %2020 = vmatprep.subr.bf16.mxu0 0
      %2021 = vmatpush1.bf16.msra.mxu0 0
      %2022 = vmatprep.mubr.bf16.mxu0 0
      %2023 = vmatmul.mubr.bf16.gmra.mrb[0].mxu0 %v1985
      %v2024 = vpop.f32.mrb[0].mxu0
      %v2025 = vadd.f32 %v1970, %v2024
      %v2026 = vpop.f32.mrb[0].mxu0
      %v2027 = vpop.f32.mrb[0].mxu0
      %v2028 = vadd.f32 %v1970, %v2027
      %v2029 = vpop.f32.mrb[0].mxu0
      %2030 = vmatprep.mubr.bf16.mxu0 0
      %2031 = vmatmul.mubr.bf16.gmra.mrb[0].mxu0 %v1988
      %v2032 = vpop.f32.mrb[0].mxu0
      %v2033 = vadd.f32 %v1970, %v2032
      %v2034 = vpop.f32.mrb[0].mxu0
      %v2035 = vpop.f32.mrb[0].mxu0
      %v2036 = vpop.f32.mrb[0].mxu0
      %2037 = vdwg.mxu0
      %v2038 = vpack.c.bf16 %v2028, %v2025
      %v2039 = vpack.c.bf16 %v2033, %v2033
      %2042 = vrot.lane.b32.xlu0 %v2038, 96
      %v2043 = vpop.permute.xlu0 %2042
      %2044 = vrot.lane.b32.xlu0 %v2039, 96
      %v2045 = vpop.permute.xlu0 %2044
      %v2047 = vsel %vm792, %v2038, 0
      %v2050 = vsel %vm792, %v2039, 0
      %v2053 = vsel %vm792, %v2043, 0
      %v2056 = vsel %vm792, %v2045, 0
      %2058 = vmatprep.subr.bf16.mxu0 0
      %2059 = vmatpush1.bf16.xpose.msra.mxu0 %v2053
      %2060 = vmatprep.subr.bf16.mxu0 0
      %2061 = vmatpush1.bf16.xpose.msra.mxu0 %v2056
      %2062 = vmatprep.subr.bf16.mxu0 0
      %2063 = vmatpush1.bf16.xpose.msra.mxu0 0
      %2064 = vmatprep.subr.bf16.mxu0 0
      %2065 = vmatpush1.bf16.xpose.msra.mxu0 0
      %2066 = vmatprep.subr.bf16.mxu0 0
      %2067 = vmatpush1.bf16.xpose.msra.mxu0 0
      %2068 = vmatprep.subr.bf16.mxu0 0
      %2069 = vmatpush1.bf16.xpose.msra.mxu0 0
      %2070 = vmatprep.subr.bf16.mxu0 0
      %2071 = vmatpush1.bf16.xpose.msra.mxu0 0
      %2072 = vmatprep.subr.bf16.mxu0 0
      %2073 = vmatpush1.bf16.xpose.msra.mxu0 0
      %2074 = vmatprep.subr.bf16.mxu0 0
      %2075 = vmatpush1.bf16.xpose.msra.mxu0 0
      %2076 = vmatprep.subr.bf16.mxu0 0
      %2077 = vmatpush1.bf16.xpose.msra.mxu0 0
      %2078 = vmatprep.subr.bf16.mxu0 0
      %2079 = vmatpush1.bf16.xpose.msra.mxu0 0
      %2080 = vmatprep.subr.bf16.mxu0 0
      %2081 = vmatpush1.bf16.xpose.msra.mxu0 0
      %2082 = vmatprep.subr.bf16.mxu0 0
      %2083 = vmatpush1.bf16.xpose.msra.mxu0 0
      %2084 = vmatprep.subr.bf16.mxu0 0
      %2085 = vmatpush1.bf16.xpose.msra.mxu0 0
      %2086 = vmatprep.subr.bf16.mxu0 0
      %2087 = vmatpush1.bf16.xpose.msra.mxu0 0
      %2088 = vmatprep.subr.bf16.mxu0 0
      %2089 = vmatpush1.bf16.xpose.msra.mxu0 0
      %2090 = vmatprep.mubr.bf16.mxu0 0
      %2091 = vmatmul.mubr.bf16.gmra.mrb[0].mxu0 %v2047
      %v2092 = vpop.f32.mrb[0].mxu0
      %v2093 = vadd.f32 %v643, %v2092
      %v2094 = vpop.f32.mrb[0].mxu0
      %v2095 = vpop.f32.mrb[0].mxu0
      %v2096 = vadd.f32 %v643, %v2095
      %v2097 = vpop.f32.mrb[0].mxu0
      %2098 = vmatprep.mubr.bf16.mxu0 0
      %2099 = vmatmul.mubr.bf16.gmra.mrb[0].mxu0 %v2050
      %v2100 = vpop.f32.mrb[0].mxu0
      %v2101 = vadd.f32 %v643, %v2100
      %v2102 = vpop.f32.mrb[0].mxu0
      %v2103 = vpop.f32.mrb[0].mxu0
      %v2104 = vpop.f32.mrb[0].mxu0
      %2105 = vdwg.mxu0
      %v2106 = vsel %vm853, %v2093, -inf
      %2107 = vmax.xlane.f32.xlu0 %v2106
      %v2108 = vpop.xlane.xlu0 %2107
      %v2109 = vsel %vm853, %v2096, -inf
      %2110 = vmax.xlane.f32.xlu0 %v2109
      %v2111 = vpop.xlane.xlu0 %2110
      %v2112 = vsel %vm853, %v2101, -inf
      %2113 = vmax.xlane.f32.xlu0 %v2112
      %v2114 = vpop.xlane.xlu0 %2113
      %v2115 = vsub.f32 %v2093, %v2108
      %v2116 = vsub.f32 %v2096, %v2111
      %v2117 = vsub.f32 %v2101, %v2114
      %v2118 = vmul.f32 %v2115, 1.442695
      %v2119 = vpow.pop %v2118
      %v2120 = vmul.f32 %v2116, 1.442695
      %v2121 = vpow.pop %v2120
      %v2122 = vmul.f32 %v2117, 1.442695
      %v2123 = vpow.pop %v2122
      %v2124 = vsel %vm853, %v2119, 0.0
      %2125 = vadd.xlane.f32.xlu0 %v2124
      %v2126 = vpop.xlane.xlu0 %2125
      %v2127 = vsel %vm853, %v2121, 0.0
      %2128 = vadd.xlane.f32.xlu0 %v2127
      %v2129 = vpop.xlane.xlu0 %2128
      %v2130 = vsel %vm853, %v2123, 0.0
      %2131 = vadd.xlane.f32.xlu0 %v2130
      %v2132 = vpop.xlane.xlu0 %2131
      %v2133 = vrcp.pop %v2126
      %v2134 = vrcp.pop %v2129
      %v2135 = vrcp.pop %v2132
      %v2136 = vmul.f32 %v2119, %v2133
      %v2137 = vmul.f32 %v2121, %v2134
      %v2138 = vmul.f32 %v2123, %v2135
      %v2139 = vpack.c.bf16 %v2137, %v2136
      %v2140 = vpack.c.bf16 %v2138, %v2138
      %2141 = vrot.lane.b32.xlu0 %v2038, 64
      %v2142 = vpop.permute.xlu0 %2141
      %2143 = vrot.lane.b32.xlu0 %v2039, 64
      %v2144 = vpop.permute.xlu0 %2143
      %v2147 = vsel %vm853, %v2139, 0
      %v2150 = vsel %vm853, %v2140, 0
      %v2153 = vsel %vm900, %v2144, 0
      %2155 = vmatprep.subr.bf16.mxu0 0
      %2156 = vmatpush1.bf16.msra.mxu0 %v2142
      %2157 = vmatprep.subr.bf16.mxu0 0
      %2158 = vmatpush1.bf16.msra.mxu0 %v2153
      %2159 = vmatprep.subr.bf16.mxu0 0
      %2160 = vmatpush1.bf16.msra.mxu0 0
      %2161 = vmatprep.subr.bf16.mxu0 0
      %2162 = vmatpush1.bf16.msra.mxu0 0
      %2163 = vmatprep.subr.bf16.mxu0 0
      %2164 = vmatpush1.bf16.msra.mxu0 0
      %2165 = vmatprep.subr.bf16.mxu0 0
      %2166 = vmatpush1.bf16.msra.mxu0 0
      %2167 = vmatprep.subr.bf16.mxu0 0
      %2168 = vmatpush1.bf16.msra.mxu0 0
      %2169 = vmatprep.subr.bf16.mxu0 0
      %2170 = vmatpush1.bf16.msra.mxu0 0
      %2171 = vmatprep.subr.bf16.mxu0 0
      %2172 = vmatpush1.bf16.msra.mxu0 0
      %2173 = vmatprep.subr.bf16.mxu0 0
      %2174 = vmatpush1.bf16.msra.mxu0 0
      %2175 = vmatprep.subr.bf16.mxu0 0
      %2176 = vmatpush1.bf16.msra.mxu0 0
      %2177 = vmatprep.subr.bf16.mxu0 0
      %2178 = vmatpush1.bf16.msra.mxu0 0
      %2179 = vmatprep.subr.bf16.mxu0 0
      %2180 = vmatpush1.bf16.msra.mxu0 0
      %2181 = vmatprep.subr.bf16.mxu0 0
      %2182 = vmatpush1.bf16.msra.mxu0 0
      %2183 = vmatprep.subr.bf16.mxu0 0
      %2184 = vmatpush1.bf16.msra.mxu0 0
      %2185 = vmatprep.subr.bf16.mxu0 0
      %2186 = vmatpush1.bf16.msra.mxu0 0
      %2187 = vmatprep.mubr.bf16.mxu0 0
      %2188 = vmatmul.mubr.bf16.gmra.mrb[0].mxu0 %v2147
      %v2189 = vpop.f32.mrb[0].mxu0
      %v2190 = vadd.f32 0.0, %v2189
      %v2191 = vpop.f32.mrb[0].mxu0
      %v2192 = vpop.f32.mrb[0].mxu0
      %v2193 = vadd.f32 0.0, %v2192
      %v2194 = vpop.f32.mrb[0].mxu0
      %2195 = vmatprep.mubr.bf16.mxu0 0
      %2196 = vmatmul.mubr.bf16.gmra.mrb[0].mxu0 %v2150
      %v2197 = vpop.f32.mrb[0].mxu0
      %v2198 = vadd.f32 0.0, %v2197
      %v2199 = vpop.f32.mrb[0].mxu0
      %v2200 = vpop.f32.mrb[0].mxu0
      %v2201 = vpop.f32.mrb[0].mxu0
      %2202 = vdwg.mxu0
      %2203 = vrot.lane.b32.xlu0 %v2038, 120
      %v2204 = vpop.permute.xlu0 %2203
      %2205 = vrot.lane.b32.xlu0 %v2039, 120
      %v2206 = vpop.permute.xlu0 %2205
      %2207 = vrot.lane.b32.xlu0 %v2038, 88
      %v2208 = vpop.permute.xlu0 %2207
      %2209 = vrot.lane.b32.xlu0 %v2039, 88
      %v2210 = vpop.permute.xlu0 %2209
      %v2212 = vsel %vm792, %v2204, 0
      %v2215 = vsel %vm792, %v2206, 0
      %v2218 = vsel %vm792, %v2208, 0
      %v2221 = vsel %vm792, %v2210, 0
      %2223 = vmatprep.subr.bf16.mxu0 0
      %2224 = vmatpush1.bf16.xpose.msra.mxu0 %v2218
      %2225 = vmatprep.subr.bf16.mxu0 0
      %2226 = vmatpush1.bf16.xpose.msra.mxu0 %v2221
      %2227 = vmatprep.subr.bf16.mxu0 0
      %2228 = vmatpush1.bf16.xpose.msra.mxu0 0
      %2229 = vmatprep.subr.bf16.mxu0 0
      %2230 = vmatpush1.bf16.xpose.msra.mxu0 0
      %2231 = vmatprep.subr.bf16.mxu0 0
      %2232 = vmatpush1.bf16.xpose.msra.mxu0 0
      %2233 = vmatprep.subr.bf16.mxu0 0
      %2234 = vmatpush1.bf16.xpose.msra.mxu0 0
      %2235 = vmatprep.subr.bf16.mxu0 0
      %2236 = vmatpush1.bf16.xpose.msra.mxu0 0
      %2237 = vmatprep.subr.bf16.mxu0 0
      %2238 = vmatpush1.bf16.xpose.msra.mxu0 0
      %2239 = vmatprep.subr.bf16.mxu0 0
      %2240 = vmatpush1.bf16.xpose.msra.mxu0 0
      %2241 = vmatprep.subr.bf16.mxu0 0
      %2242 = vmatpush1.bf16.xpose.msra.mxu0 0
      %2243 = vmatprep.subr.bf16.mxu0 0
      %2244 = vmatpush1.bf16.xpose.msra.mxu0 0
      %2245 = vmatprep.subr.bf16.mxu0 0
      %2246 = vmatpush1.bf16.xpose.msra.mxu0 0
      %2247 = vmatprep.subr.bf16.mxu0 0
      %2248 = vmatpush1.bf16.xpose.msra.mxu0 0
      %2249 = vmatprep.subr.bf16.mxu0 0
      %2250 = vmatpush1.bf16.xpose.msra.mxu0 0
      %2251 = vmatprep.subr.bf16.mxu0 0
      %2252 = vmatpush1.bf16.xpose.msra.mxu0 0
      %2253 = vmatprep.subr.bf16.mxu0 0
      %2254 = vmatpush1.bf16.xpose.msra.mxu0 0
      %2255 = vmatprep.mubr.bf16.mxu0 0
      %2256 = vmatmul.mubr.bf16.gmra.mrb[0].mxu0 %v2212
      %v2257 = vpop.f32.mrb[0].mxu0
      %v2258 = vadd.f32 %v643, %v2257
      %v2259 = vpop.f32.mrb[0].mxu0
      %v2260 = vpop.f32.mrb[0].mxu0
      %v2261 = vadd.f32 %v643, %v2260
      %v2262 = vpop.f32.mrb[0].mxu0
      %2263 = vmatprep.mubr.bf16.mxu0 0
      %2264 = vmatmul.mubr.bf16.gmra.mrb[0].mxu0 %v2215
      %v2265 = vpop.f32.mrb[0].mxu0
      %v2266 = vadd.f32 %v643, %v2265
      %v2267 = vpop.f32.mrb[0].mxu0
      %v2268 = vpop.f32.mrb[0].mxu0
      %v2269 = vpop.f32.mrb[0].mxu0
      %2270 = vdwg.mxu0
      %v2271 = vsel %vm853, %v2258, -inf
      %2272 = vmax.xlane.f32.xlu0 %v2271
      %v2273 = vpop.xlane.xlu0 %2272
      %v2274 = vsel %vm853, %v2261, -inf
      %2275 = vmax.xlane.f32.xlu0 %v2274
      %v2276 = vpop.xlane.xlu0 %2275
      %v2277 = vsel %vm853, %v2266, -inf
      %2278 = vmax.xlane.f32.xlu0 %v2277
      %v2279 = vpop.xlane.xlu0 %2278
      %v2280 = vsub.f32 %v2258, %v2273
      %v2281 = vsub.f32 %v2261, %v2276
      %v2282 = vsub.f32 %v2266, %v2279
      %v2283 = vmul.f32 %v2280, 1.442695
      %v2284 = vpow.pop %v2283
      %v2285 = vmul.f32 %v2281, 1.442695
      %v2286 = vpow.pop %v2285
      %v2287 = vmul.f32 %v2282, 1.442695
      %v2288 = vpow.pop %v2287
      %v2289 = vsel %vm853, %v2284, 0.0
      %2290 = vadd.xlane.f32.xlu0 %v2289
      %v2291 = vpop.xlane.xlu0 %2290
      %v2292 = vsel %vm853, %v2286, 0.0
      %2293 = vadd.xlane.f32.xlu0 %v2292
      %v2294 = vpop.xlane.xlu0 %2293
      %v2295 = vsel %vm853, %v2288, 0.0
      %2296 = vadd.xlane.f32.xlu0 %v2295
      %v2297 = vpop.xlane.xlu0 %2296
      %v2298 = vrcp.pop %v2291
      %v2299 = vrcp.pop %v2294
      %v2300 = vrcp.pop %v2297
      %v2301 = vmul.f32 %v2284, %v2298
      %v2302 = vmul.f32 %v2286, %v2299
      %v2303 = vmul.f32 %v2288, %v2300
      %v2304 = vpack.c.bf16 %v2302, %v2301
      %v2305 = vpack.c.bf16 %v2303, %v2303
      %2306 = vrot.lane.b32.xlu0 %v2038, 56
      %v2307 = vpop.permute.xlu0 %2306
      %2308 = vrot.lane.b32.xlu0 %v2039, 56
      %v2309 = vpop.permute.xlu0 %2308
      %v2312 = vsel %vm853, %v2304, 0
      %v2315 = vsel %vm853, %v2305, 0
      %v2318 = vsel %vm900, %v2309, 0
      %2320 = vmatprep.subr.bf16.mxu0 0
      %2321 = vmatpush1.bf16.msra.mxu0 %v2307
      %2322 = vmatprep.subr.bf16.mxu0 0
      %2323 = vmatpush1.bf16.msra.mxu0 %v2318
      %2324 = vmatprep.subr.bf16.mxu0 0
      %2325 = vmatpush1.bf16.msra.mxu0 0
      %2326 = vmatprep.subr.bf16.mxu0 0
      %2327 = vmatpush1.bf16.msra.mxu0 0
      %2328 = vmatprep.subr.bf16.mxu0 0
      %2329 = vmatpush1.bf16.msra.mxu0 0
      %2330 = vmatprep.subr.bf16.mxu0 0
      %2331 = vmatpush1.bf16.msra.mxu0 0
      %2332 = vmatprep.subr.bf16.mxu0 0
      %2333 = vmatpush1.bf16.msra.mxu0 0
      %2334 = vmatprep.subr.bf16.mxu0 0
      %2335 = vmatpush1.bf16.msra.mxu0 0
      %2336 = vmatprep.subr.bf16.mxu0 0
      %2337 = vmatpush1.bf16.msra.mxu0 0
      %2338 = vmatprep.subr.bf16.mxu0 0
      %2339 = vmatpush1.bf16.msra.mxu0 0
      %2340 = vmatprep.subr.bf16.mxu0 0
      %2341 = vmatpush1.bf16.msra.mxu0 0
      %2342 = vmatprep.subr.bf16.mxu0 0
      %2343 = vmatpush1.bf16.msra.mxu0 0
      %2344 = vmatprep.subr.bf16.mxu0 0
      %2345 = vmatpush1.bf16.msra.mxu0 0
      %2346 = vmatprep.subr.bf16.mxu0 0
      %2347 = vmatpush1.bf16.msra.mxu0 0
      %2348 = vmatprep.subr.bf16.mxu0 0
      %2349 = vmatpush1.bf16.msra.mxu0 0
      %2350 = vmatprep.subr.bf16.mxu0 0
      %2351 = vmatpush1.bf16.msra.mxu0 0
      %2352 = vmatprep.mubr.bf16.mxu0 0
      %2353 = vmatmul.mubr.bf16.gmra.mrb[0].mxu0 %v2312
      %v2354 = vpop.f32.mrb[0].mxu0
      %v2355 = vadd.f32 0.0, %v2354
      %v2356 = vpop.f32.mrb[0].mxu0
      %v2357 = vpop.f32.mrb[0].mxu0
      %v2358 = vadd.f32 0.0, %v2357
      %v2359 = vpop.f32.mrb[0].mxu0
      %2360 = vmatprep.mubr.bf16.mxu0 0
      %2361 = vmatmul.mubr.bf16.gmra.mrb[0].mxu0 %v2315
      %v2362 = vpop.f32.mrb[0].mxu0
      %v2363 = vadd.f32 0.0, %v2362
      %v2364 = vpop.f32.mrb[0].mxu0
      %v2365 = vpop.f32.mrb[0].mxu0
      %v2366 = vpop.f32.mrb[0].mxu0
      %2367 = vdwg.mxu0
      %2368 = vrot.lane.b32.xlu0 %v2038, 112
      %v2369 = vpop.permute.xlu0 %2368
      %2370 = vrot.lane.b32.xlu0 %v2039, 112
      %v2371 = vpop.permute.xlu0 %2370
      %2372 = vrot.lane.b32.xlu0 %v2038, 80
      %v2373 = vpop.permute.xlu0 %2372
      %2374 = vrot.lane.b32.xlu0 %v2039, 80
      %v2375 = vpop.permute.xlu0 %2374
      %v2377 = vsel %vm792, %v2369, 0
      %v2380 = vsel %vm792, %v2371, 0
      %v2383 = vsel %vm792, %v2373, 0
      %v2386 = vsel %vm792, %v2375, 0
      %2388 = vmatprep.subr.bf16.mxu0 0
      %2389 = vmatpush1.bf16.xpose.msra.mxu0 %v2383
      %2390 = vmatprep.subr.bf16.mxu0 0
      %2391 = vmatpush1.bf16.xpose.msra.mxu0 %v2386
      %2392 = vmatprep.subr.bf16.mxu0 0
      %2393 = vmatpush1.bf16.xpose.msra.mxu0 0
      %2394 = vmatprep.subr.bf16.mxu0 0
      %2395 = vmatpush1.bf16.xpose.msra.mxu0 0
      %2396 = vmatprep.subr.bf16.mxu0 0
      %2397 = vmatpush1.bf16.xpose.msra.mxu0 0
      %2398 = vmatprep.subr.bf16.mxu0 0
      %2399 = vmatpush1.bf16.xpose.msra.mxu0 0
      %2400 = vmatprep.subr.bf16.mxu0 0
      %2401 = vmatpush1.bf16.xpose.msra.mxu0 0
      %2402 = vmatprep.subr.bf16.mxu0 0
      %2403 = vmatpush1.bf16.xpose.msra.mxu0 0
      %2404 = vmatprep.subr.bf16.mxu0 0
      %2405 = vmatpush1.bf16.xpose.msra.mxu0 0
      %2406 = vmatprep.subr.bf16.mxu0 0
      %2407 = vmatpush1.bf16.xpose.msra.mxu0 0
      %2408 = vmatprep.subr.bf16.mxu0 0
      %2409 = vmatpush1.bf16.xpose.msra.mxu0 0
      %2410 = vmatprep.subr.bf16.mxu0 0
      %2411 = vmatpush1.bf16.xpose.msra.mxu0 0
      %2412 = vmatprep.subr.bf16.mxu0 0
      %2413 = vmatpush1.bf16.xpose.msra.mxu0 0
      %2414 = vmatprep.subr.bf16.mxu0 0
      %2415 = vmatpush1.bf16.xpose.msra.mxu0 0
      %2416 = vmatprep.subr.bf16.mxu0 0
      %2417 = vmatpush1.bf16.xpose.msra.mxu0 0
      %2418 = vmatprep.subr.bf16.mxu0 0
      %2419 = vmatpush1.bf16.xpose.msra.mxu0 0
      %2420 = vmatprep.mubr.bf16.mxu0 0
      %2421 = vmatmul.mubr.bf16.gmra.mrb[0].mxu0 %v2377
      %v2422 = vpop.f32.mrb[0].mxu0
      %v2423 = vadd.f32 %v643, %v2422
      %v2424 = vpop.f32.mrb[0].mxu0
      %v2425 = vpop.f32.mrb[0].mxu0
      %v2426 = vadd.f32 %v643, %v2425
      %v2427 = vpop.f32.mrb[0].mxu0
      %2428 = vmatprep.mubr.bf16.mxu0 0
      %2429 = vmatmul.mubr.bf16.gmra.mrb[0].mxu0 %v2380
      %v2430 = vpop.f32.mrb[0].mxu0
      %v2431 = vadd.f32 %v643, %v2430
      %v2432 = vpop.f32.mrb[0].mxu0
      %v2433 = vpop.f32.mrb[0].mxu0
      %v2434 = vpop.f32.mrb[0].mxu0
      %2435 = vdwg.mxu0
      %v2436 = vsel %vm853, %v2423, -inf
      %2437 = vmax.xlane.f32.xlu0 %v2436
      %v2438 = vpop.xlane.xlu0 %2437
      %v2439 = vsel %vm853, %v2426, -inf
      %2440 = vmax.xlane.f32.xlu0 %v2439
      %v2441 = vpop.xlane.xlu0 %2440
      %v2442 = vsel %vm853, %v2431, -inf
      %2443 = vmax.xlane.f32.xlu0 %v2442
      %v2444 = vpop.xlane.xlu0 %2443
      %v2445 = vsub.f32 %v2423, %v2438
      %v2446 = vsub.f32 %v2426, %v2441
      %v2447 = vsub.f32 %v2431, %v2444
      %v2448 = vmul.f32 %v2445, 1.442695
      %v2449 = vpow.pop %v2448
      %v2450 = vmul.f32 %v2446, 1.442695
      %v2451 = vpow.pop %v2450
      %v2452 = vmul.f32 %v2447, 1.442695
      %v2453 = vpow.pop %v2452
      %v2454 = vsel %vm853, %v2449, 0.0
      %2455 = vadd.xlane.f32.xlu0 %v2454
      %v2456 = vpop.xlane.xlu0 %2455
      %v2457 = vsel %vm853, %v2451, 0.0
      %2458 = vadd.xlane.f32.xlu0 %v2457
      %v2459 = vpop.xlane.xlu0 %2458
      %v2460 = vsel %vm853, %v2453, 0.0
      %2461 = vadd.xlane.f32.xlu0 %v2460
      %v2462 = vpop.xlane.xlu0 %2461
      %v2463 = vrcp.pop %v2456
      %v2464 = vrcp.pop %v2459
      %v2465 = vrcp.pop %v2462
      %v2466 = vmul.f32 %v2449, %v2463
      %v2467 = vmul.f32 %v2451, %v2464
      %v2468 = vmul.f32 %v2453, %v2465
      %v2469 = vpack.c.bf16 %v2467, %v2466
      %v2470 = vpack.c.bf16 %v2468, %v2468
      %2471 = vrot.lane.b32.xlu0 %v2038, 48
      %v2472 = vpop.permute.xlu0 %2471
      %2473 = vrot.lane.b32.xlu0 %v2039, 48
      %v2474 = vpop.permute.xlu0 %2473
      %v2477 = vsel %vm853, %v2469, 0
      %v2480 = vsel %vm853, %v2470, 0
      %v2483 = vsel %vm900, %v2474, 0
      %2485 = vmatprep.subr.bf16.mxu0 0
      %2486 = vmatpush1.bf16.msra.mxu0 %v2472
      %2487 = vmatprep.subr.bf16.mxu0 0
      %2488 = vmatpush1.bf16.msra.mxu0 %v2483
      %2489 = vmatprep.subr.bf16.mxu0 0
      %2490 = vmatpush1.bf16.msra.mxu0 0
      %2491 = vmatprep.subr.bf16.mxu0 0
      %2492 = vmatpush1.bf16.msra.mxu0 0
      %2493 = vmatprep.subr.bf16.mxu0 0
      %2494 = vmatpush1.bf16.msra.mxu0 0
      %2495 = vmatprep.subr.bf16.mxu0 0
      %2496 = vmatpush1.bf16.msra.mxu0 0
      %2497 = vmatprep.subr.bf16.mxu0 0
      %2498 = vmatpush1.bf16.msra.mxu0 0
      %2499 = vmatprep.subr.bf16.mxu0 0
      %2500 = vmatpush1.bf16.msra.mxu0 0
      %2501 = vmatprep.subr.bf16.mxu0 0
      %2502 = vmatpush1.bf16.msra.mxu0 0
      %2503 = vmatprep.subr.bf16.mxu0 0
      %2504 = vmatpush1.bf16.msra.mxu0 0
      %2505 = vmatprep.subr.bf16.mxu0 0
      %2506 = vmatpush1.bf16.msra.mxu0 0
      %2507 = vmatprep.subr.bf16.mxu0 0
      %2508 = vmatpush1.bf16.msra.mxu0 0
      %2509 = vmatprep.subr.bf16.mxu0 0
      %2510 = vmatpush1.bf16.msra.mxu0 0
      %2511 = vmatprep.subr.bf16.mxu0 0
      %2512 = vmatpush1.bf16.msra.mxu0 0
      %2513 = vmatprep.subr.bf16.mxu0 0
      %2514 = vmatpush1.bf16.msra.mxu0 0
      %2515 = vmatprep.subr.bf16.mxu0 0
      %2516 = vmatpush1.bf16.msra.mxu0 0
      %2517 = vmatprep.mubr.bf16.mxu0 0
      %2518 = vmatmul.mubr.bf16.gmra.mrb[0].mxu0 %v2477
      %v2519 = vpop.f32.mrb[0].mxu0
      %v2520 = vadd.f32 0.0, %v2519
      %v2521 = vpop.f32.mrb[0].mxu0
      %v2522 = vpop.f32.mrb[0].mxu0
      %v2523 = vadd.f32 0.0, %v2522
      %v2524 = vpop.f32.mrb[0].mxu0
      %2525 = vmatprep.mubr.bf16.mxu0 0
      %2526 = vmatmul.mubr.bf16.gmra.mrb[0].mxu0 %v2480
      %v2527 = vpop.f32.mrb[0].mxu0
      %v2528 = vadd.f32 0.0, %v2527
      %v2529 = vpop.f32.mrb[0].mxu0
      %v2530 = vpop.f32.mrb[0].mxu0
      %v2531 = vpop.f32.mrb[0].mxu0
      %2532 = vdwg.mxu0
      %2533 = vrot.lane.b32.xlu0 %v2038, 104
      %v2534 = vpop.permute.xlu0 %2533
      %2535 = vrot.lane.b32.xlu0 %v2039, 104
      %v2536 = vpop.permute.xlu0 %2535
      %2537 = vrot.lane.b32.xlu0 %v2038, 72
      %v2538 = vpop.permute.xlu0 %2537
      %2539 = vrot.lane.b32.xlu0 %v2039, 72
      %v2540 = vpop.permute.xlu0 %2539
      %v2542 = vsel %vm792, %v2534, 0
      %v2545 = vsel %vm792, %v2536, 0
      %v2548 = vsel %vm792, %v2538, 0
      %v2551 = vsel %vm792, %v2540, 0
      %2553 = vmatprep.subr.bf16.mxu0 0
      %2554 = vmatpush1.bf16.xpose.msra.mxu0 %v2548
      %2555 = vmatprep.subr.bf16.mxu0 0
      %2556 = vmatpush1.bf16.xpose.msra.mxu0 %v2551
      %2557 = vmatprep.subr.bf16.mxu0 0
      %2558 = vmatpush1.bf16.xpose.msra.mxu0 0
      %2559 = vmatprep.subr.bf16.mxu0 0
      %2560 = vmatpush1.bf16.xpose.msra.mxu0 0
      %2561 = vmatprep.subr.bf16.mxu0 0
      %2562 = vmatpush1.bf16.xpose.msra.mxu0 0
      %2563 = vmatprep.subr.bf16.mxu0 0
      %2564 = vmatpush1.bf16.xpose.msra.mxu0 0
      %2565 = vmatprep.subr.bf16.mxu0 0
      %2566 = vmatpush1.bf16.xpose.msra.mxu0 0
      %2567 = vmatprep.subr.bf16.mxu0 0
      %2568 = vmatpush1.bf16.xpose.msra.mxu0 0
      %2569 = vmatprep.subr.bf16.mxu0 0
      %2570 = vmatpush1.bf16.xpose.msra.mxu0 0
      %2571 = vmatprep.subr.bf16.mxu0 0
      %2572 = vmatpush1.bf16.xpose.msra.mxu0 0
      %2573 = vmatprep.subr.bf16.mxu0 0
      %2574 = vmatpush1.bf16.xpose.msra.mxu0 0
      %2575 = vmatprep.subr.bf16.mxu0 0
      %2576 = vmatpush1.bf16.xpose.msra.mxu0 0
      %2577 = vmatprep.subr.bf16.mxu0 0
      %2578 = vmatpush1.bf16.xpose.msra.mxu0 0
      %2579 = vmatprep.subr.bf16.mxu0 0
      %2580 = vmatpush1.bf16.xpose.msra.mxu0 0
      %2581 = vmatprep.subr.bf16.mxu0 0
      %2582 = vmatpush1.bf16.xpose.msra.mxu0 0
      %2583 = vmatprep.subr.bf16.mxu0 0
      %2584 = vmatpush1.bf16.xpose.msra.mxu0 0
      %2585 = vmatprep.mubr.bf16.mxu0 0
      %2586 = vmatmul.mubr.bf16.gmra.mrb[0].mxu0 %v2542
      %v2587 = vpop.f32.mrb[0].mxu0
      %v2588 = vadd.f32 %v643, %v2587
      %v2589 = vpop.f32.mrb[0].mxu0
      %v2590 = vpop.f32.mrb[0].mxu0
      %v2591 = vadd.f32 %v643, %v2590
      %v2592 = vpop.f32.mrb[0].mxu0
      %2593 = vmatprep.mubr.bf16.mxu0 0
      %2594 = vmatmul.mubr.bf16.gmra.mrb[0].mxu0 %v2545
      %v2595 = vpop.f32.mrb[0].mxu0
      %v2596 = vadd.f32 %v643, %v2595
      %v2597 = vpop.f32.mrb[0].mxu0
      %v2598 = vpop.f32.mrb[0].mxu0
      %v2599 = vpop.f32.mrb[0].mxu0
      %2600 = vdwg.mxu0
      %v2601 = vsel %vm853, %v2588, -inf
      %2602 = vmax.xlane.f32.xlu0 %v2601
      %v2603 = vpop.xlane.xlu0 %2602
      %v2604 = vsel %vm853, %v2591, -inf
      %2605 = vmax.xlane.f32.xlu0 %v2604
      %v2606 = vpop.xlane.xlu0 %2605
      %v2607 = vsel %vm853, %v2596, -inf
      %2608 = vmax.xlane.f32.xlu0 %v2607
      %v2609 = vpop.xlane.xlu0 %2608
      %v2610 = vsub.f32 %v2588, %v2603
      %v2611 = vsub.f32 %v2591, %v2606
      %v2612 = vsub.f32 %v2596, %v2609
      %v2613 = vmul.f32 %v2610, 1.442695
      %v2614 = vpow.pop %v2613
      %v2615 = vmul.f32 %v2611, 1.442695
      %v2616 = vpow.pop %v2615
      %v2617 = vmul.f32 %v2612, 1.442695
      %v2618 = vpow.pop %v2617
      %v2619 = vsel %vm853, %v2614, 0.0
      %2620 = vadd.xlane.f32.xlu0 %v2619
      %v2621 = vpop.xlane.xlu0 %2620
      %v2622 = vsel %vm853, %v2616, 0.0
      %2623 = vadd.xlane.f32.xlu0 %v2622
      %v2624 = vpop.xlane.xlu0 %2623
      %v2625 = vsel %vm853, %v2618, 0.0
      %2626 = vadd.xlane.f32.xlu0 %v2625
      %v2627 = vpop.xlane.xlu0 %2626
      %v2628 = vrcp.pop %v2621
      %v2629 = vrcp.pop %v2624
      %v2630 = vrcp.pop %v2627
      %v2631 = vmul.f32 %v2614, %v2628
      %v2632 = vmul.f32 %v2616, %v2629
      %v2633 = vmul.f32 %v2618, %v2630
      %v2634 = vpack.c.bf16 %v2632, %v2631
      %v2635 = vpack.c.bf16 %v2633, %v2633
      %2636 = vrot.lane.b32.xlu0 %v2038, 40
      %v2637 = vpop.permute.xlu0 %2636
      %2638 = vrot.lane.b32.xlu0 %v2039, 40
      %v2639 = vpop.permute.xlu0 %2638
      %v2642 = vsel %vm853, %v2634, 0
      %v2645 = vsel %vm853, %v2635, 0
      %v2648 = vsel %vm900, %v2639, 0
      %2650 = vmatprep.subr.bf16.mxu0 0
      %2651 = vmatpush1.bf16.msra.mxu0 %v2637
      %2652 = vmatprep.subr.bf16.mxu0 0
      %2653 = vmatpush1.bf16.msra.mxu0 %v2648
      %2654 = vmatprep.subr.bf16.mxu0 0
      %2655 = vmatpush1.bf16.msra.mxu0 0
      %2656 = vmatprep.subr.bf16.mxu0 0
      %2657 = vmatpush1.bf16.msra.mxu0 0
      %2658 = vmatprep.subr.bf16.mxu0 0
      %2659 = vmatpush1.bf16.msra.mxu0 0
      %2660 = vmatprep.subr.bf16.mxu0 0
      %2661 = vmatpush1.bf16.msra.mxu0 0
      %2662 = vmatprep.subr.bf16.mxu0 0
      %2663 = vmatpush1.bf16.msra.mxu0 0
      %2664 = vmatprep.subr.bf16.mxu0 0
      %2665 = vmatpush1.bf16.msra.mxu0 0
      %2666 = vmatprep.subr.bf16.mxu0 0
      %2667 = vmatpush1.bf16.msra.mxu0 0
      %2668 = vmatprep.subr.bf16.mxu0 0
      %2669 = vmatpush1.bf16.msra.mxu0 0
      %2670 = vmatprep.subr.bf16.mxu0 0
      %2671 = vmatpush1.bf16.msra.mxu0 0
      %2672 = vmatprep.subr.bf16.mxu0 0
      %2673 = vmatpush1.bf16.msra.mxu0 0
      %2674 = vmatprep.subr.bf16.mxu0 0
      %2675 = vmatpush1.bf16.msra.mxu0 0
      %2676 = vmatprep.subr.bf16.mxu0 0
      %2677 = vmatpush1.bf16.msra.mxu0 0
      %2678 = vmatprep.subr.bf16.mxu0 0
      %2679 = vmatpush1.bf16.msra.mxu0 0
      %2680 = vmatprep.subr.bf16.mxu0 0
      %2681 = vmatpush1.bf16.msra.mxu0 0
      %2682 = vmatprep.mubr.bf16.mxu0 0
      %2683 = vmatmul.mubr.bf16.gmra.mrb[0].mxu0 %v2642
      %v2684 = vpop.f32.mrb[0].mxu0
      %v2685 = vadd.f32 0.0, %v2684
      %v2686 = vpop.f32.mrb[0].mxu0
      %v2687 = vpop.f32.mrb[0].mxu0
      %v2688 = vadd.f32 0.0, %v2687
      %v2689 = vpop.f32.mrb[0].mxu0
      %2690 = vmatprep.mubr.bf16.mxu0 0
      %2691 = vmatmul.mubr.bf16.gmra.mrb[0].mxu0 %v2645
      %v2692 = vpop.f32.mrb[0].mxu0
      %v2693 = vadd.f32 0.0, %v2692
      %v2694 = vpop.f32.mrb[0].mxu0
      %v2695 = vpop.f32.mrb[0].mxu0
      %v2696 = vpop.f32.mrb[0].mxu0
      %2697 = vdwg.mxu0
      %2701 = vrot.lane.b32.xlu0 %v2355, 8
      %v2702 = vpop.permute.xlu0 %2701
      %2703 = vrot.lane.b32.xlu0 %v2358, 8
      %v2704 = vpop.permute.xlu0 %2703
      %2705 = vrot.lane.b32.xlu0 %v2363, 8
      %v2706 = vpop.permute.xlu0 %2705
      %2713 = vrot.lane.b32.xlu0 %v2520, 16
      %v2714 = vpop.permute.xlu0 %2713
      %2715 = vrot.lane.b32.xlu0 %v2523, 16
      %v2716 = vpop.permute.xlu0 %2715
      %2717 = vrot.lane.b32.xlu0 %v2528, 16
      %v2718 = vpop.permute.xlu0 %2717
      %2725 = vrot.lane.b32.xlu0 %v2685, 24
      %v2726 = vpop.permute.xlu0 %2725
      %2727 = vrot.lane.b32.xlu0 %v2688, 24
      %v2728 = vpop.permute.xlu0 %2727
      %2729 = vrot.lane.b32.xlu0 %v2693, 24
      %v2730 = vpop.permute.xlu0 %2729
      %v2734 = vsel %vm792, %v2190, %v2702
      %v2735 = vsel %vm792, %v2193, %v2704
      %v2736 = vsel %vm792, %v2198, %v2706
      %v2737 = vsel %vm1486, %v2734, %v2714
      %v2738 = vsel %vm1486, %v2735, %v2716
      %v2739 = vsel %vm1486, %v2736, %v2718
      %v2740 = vsel %vm853, %v2737, %v2726
      %v2741 = vsel %vm853, %v2738, %v2728
      %v2742 = vsel %vm853, %v2739, %v2730
      %v2743 = vpack.c.bf16 %v2741, %v2740
      %v2744 = vpack.c.bf16 %v2742, %v2742
      %s2745 = scalar_lea.vmem %s7, 16
      %v2746 = vld [vmem:[%s2745] sm:$0xf]
      %v2747 = vld [vmem:[%s2745 + $0x4] sm:$0xf]
      %v2748 = vld [vmem:[%s2745 + $0x8] sm:$0xf]
      %v2749 = vld [vmem:[%s2745 + $0xc] sm:$0xf]
      %v2754 = vunpack.c.l.b16 %v2746
      %v2755 = vunpack.c.l.b16 %v2747
      %v2756 = vunpack.c.l.b16 %v2748
      %v2757 = vunpack.c.l.b16 %v2749
      %v2758 = vpack.c.b16 %v2755, %v2754
      %v2759 = vpack.c.b16 %v2757, %v2756
      %v2763 = vsel %vm646, %v2743, 0
      %v2766 = vsel %vm646, %v2744, 0
      %2768 = vmatprep.subr.bf16.mxu0 0
      %2769 = vmatpush1.bf16.msra.mxu0 %v2758
      %2770 = vmatprep.subr.bf16.mxu0 0
      %2771 = vmatpush1.bf16.msra.mxu0 %v2759
      %2772 = vmatprep.subr.bf16.mxu0 0
      %2773 = vmatpush1.bf16.msra.mxu0 0
      %2774 = vmatprep.subr.bf16.mxu0 0
      %2775 = vmatpush1.bf16.msra.mxu0 0
      %2776 = vmatprep.subr.bf16.mxu0 0
      %2777 = vmatpush1.bf16.msra.mxu0 0
      %2778 = vmatprep.subr.bf16.mxu0 0
      %2779 = vmatpush1.bf16.msra.mxu0 0
      %2780 = vmatprep.subr.bf16.mxu0 0
      %2781 = vmatpush1.bf16.msra.mxu0 0
      %2782 = vmatprep.subr.bf16.mxu0 0
      %2783 = vmatpush1.bf16.msra.mxu0 0
      %2784 = vmatprep.subr.bf16.mxu0 0
      %2785 = vmatpush1.bf16.msra.mxu0 0
      %2786 = vmatprep.subr.bf16.mxu0 0
      %2787 = vmatpush1.bf16.msra.mxu0 0
      %2788 = vmatprep.subr.bf16.mxu0 0
      %2789 = vmatpush1.bf16.msra.mxu0 0
      %2790 = vmatprep.subr.bf16.mxu0 0
      %2791 = vmatpush1.bf16.msra.mxu0 0
      %2792 = vmatprep.subr.bf16.mxu0 0
      %2793 = vmatpush1.bf16.msra.mxu0 0
      %2794 = vmatprep.subr.bf16.mxu0 0
      %2795 = vmatpush1.bf16.msra.mxu0 0
      %2796 = vmatprep.subr.bf16.mxu0 0
      %2797 = vmatpush1.bf16.msra.mxu0 0
      %2798 = vmatprep.subr.bf16.mxu0 0
      %2799 = vmatpush1.bf16.msra.mxu0 0
      %2800 = vmatprep.mubr.bf16.mxu0 0
      %2801 = vmatmul.mubr.bf16.gmra.mrb[0].mxu0 %v2763
      %v2802 = vpop.f32.mrb[0].mxu0
      %v2803 = vadd.f32 0.0, %v2802
      %v2804 = vpop.f32.mrb[0].mxu0
      %v2805 = vpop.f32.mrb[0].mxu0
      %v2806 = vadd.f32 0.0, %v2805
      %v2807 = vpop.f32.mrb[0].mxu0
      %2808 = vmatprep.mubr.bf16.mxu0 0
      %2809 = vmatmul.mubr.bf16.gmra.mrb[0].mxu0 %v2766
      %v2810 = vpop.f32.mrb[0].mxu0
      %v2811 = vadd.f32 0.0, %v2810
      %v2812 = vpop.f32.mrb[0].mxu0
      %v2813 = vpop.f32.mrb[0].mxu0
      %v2814 = vpop.f32.mrb[0].mxu0
      %2815 = vdwg.mxu0
      %v2816 = vadd.f32 %v1893, %v2803
      %v2817 = vadd.f32 %v1894, %v2806
      %v2818 = vadd.f32 %v1895, %v2811
      %s2819 = scalar_lea.vmem %s8, 1
      %v2820 = vld [vmem:[%s2819] sm:$0x1]
      %v2822 = vlaneseq
      %v2823 = vshrl.u32 %v2822, 7
      %v2824 = vsub.s32 0, %v2823
      %v2825 = vrot.slane %v2820, %v2824
      %v2827 = vadd.f32 %v2816, %v2825
      %v2828 = vadd.f32 %v2817, %v2825
      %v2829 = vadd.f32 %v2818, %v2825
      %s2830 = scalar_lea.vmem %s9, 1
      %v2831 = vld [vmem:[%s2830] sm:$0x1]
      %s2832 = scalar_lea.vmem %s10, 1
      %v2833 = vld [vmem:[%s2832] sm:$0x1]
      %v2834 = vsel %vm646, %v2827, 0.0
      %2835 = vadd.xlane.f32.xlu0 %v2834
      %v2836 = vpop.xlane.xlu0 %2835
      %v2837 = vsel %vm646, %v2828, 0.0
      %2838 = vadd.xlane.f32.xlu0 %v2837
      %v2839 = vpop.xlane.xlu0 %2838
      %v2840 = vsel %vm646, %v2829, 0.0
      %2841 = vadd.xlane.f32.xlu0 %v2840
      %v2842 = vpop.xlane.xlu0 %2841
      %v2843 = vmul.f32 %v2836, %v656
      %v2844 = vmul.f32 %v2839, %v656
      %v2845 = vmul.f32 %v2842, %v656
      %v2846 = vsub.f32 %v2827, %v2843
      %v2847 = vsub.f32 %v2828, %v2844
      %v2848 = vsub.f32 %v2829, %v2845
      %v2849 = vmul.f32 %v2846, %v2846
      %v2850 = vmul.f32 %v2847, %v2847
      %v2851 = vmul.f32 %v2848, %v2848
      %v2852 = vsel %vm646, %v2849, 0.0
      %2853 = vadd.xlane.f32.xlu0 %v2852
      %v2854 = vpop.xlane.xlu0 %2853
      %v2855 = vsel %vm646, %v2850, 0.0
      %2856 = vadd.xlane.f32.xlu0 %v2855
      %v2857 = vpop.xlane.xlu0 %2856
      %v2858 = vsel %vm646, %v2851, 0.0
      %2859 = vadd.xlane.f32.xlu0 %v2858
      %v2860 = vpop.xlane.xlu0 %2859
      %v2861 = vmul.f32 %v2854, %v656
      %v2862 = vmul.f32 %v2857, %v656
      %v2863 = vmul.f32 %v2860, %v656
      %v2864 = vadd.f32 %v2861, 1e-06
      %v2865 = vadd.f32 %v2862, 1e-06
      %v2866 = vadd.f32 %v2863, 1e-06
      %v2867 = vrsqrt.pop %v2864
      %v2868 = vrsqrt.pop %v2865
      %v2869 = vrsqrt.pop %v2866
      %v2870 = vmul.f32 %v2846, %v2867
      %v2871 = vmul.f32 %v2847, %v2868
      %v2872 = vmul.f32 %v2848, %v2869
      %v2874 = vlaneseq
      %v2875 = vshrl.u32 %v2874, 7
      %v2876 = vsub.s32 0, %v2875
      %v2877 = vrot.slane %v2831, %v2876
      %v2879 = vmul.f32 %v2870, %v2877
      %v2880 = vmul.f32 %v2871, %v2877
      %v2881 = vmul.f32 %v2872, %v2877
      %v2883 = vlaneseq
      %v2884 = vshrl.u32 %v2883, 7
      %v2885 = vsub.s32 0, %v2884
      %v2886 = vrot.slane %v2833, %v2885
      %v2888 = vadd.f32 %v2879, %v2886
      %v2889 = vadd.f32 %v2880, %v2886
      %v2890 = vadd.f32 %v2881, %v2886
      %v2891 = vpack.c.bf16 %v2889, %v2888
      %v2892 = vpack.c.bf16 %v2890, %v2890
      %s2893 = scalar_lea.vmem %s11, 16
      %v2894 = vld [vmem:[%s2893] sm:$0xf]
      %v2895 = vld [vmem:[%s2893 + $0x4] sm:$0xf]
      %v2896 = vld [vmem:[%s2893 + $0x8] sm:$0xf]
      %v2897 = vld [vmem:[%s2893 + $0xc] sm:$0xf]
      %s2898 = scalar_lea.vmem %s12, 1
      %v2899 = vld [vmem:[%s2898] sm:$0x1]
      %v2901 = vlaneseq
      %v2902 = vshrl.u32 %v2901, 7
      %v2903 = vsub.s32 0, %v2902
      %v2904 = vrot.slane %v2899, %v2903
      %v2910 = vunpack.c.l.b16 %v2894
      %v2911 = vunpack.c.l.b16 %v2895
      %v2912 = vunpack.c.l.b16 %v2896
      %v2913 = vunpack.c.l.b16 %v2897
      %v2914 = vpack.c.b16 %v2911, %v2910
      %v2915 = vpack.c.b16 %v2913, %v2912
      %v2919 = vsel %vm646, %v2891, 0
      %v2922 = vsel %vm646, %v2892, 0
      %2924 = vmatprep.subr.bf16.mxu0 0
      %2925 = vmatpush1.bf16.msra.mxu0 %v2914
      %2926 = vmatprep.subr.bf16.mxu0 0
      %2927 = vmatpush1.bf16.msra.mxu0 %v2915
      %2928 = vmatprep.subr.bf16.mxu0 0
      %2929 = vmatpush1.bf16.msra.mxu0 0
      %2930 = vmatprep.subr.bf16.mxu0 0
      %2931 = vmatpush1.bf16.msra.mxu0 0
      %2932 = vmatprep.subr.bf16.mxu0 0
      %2933 = vmatpush1.bf16.msra.mxu0 0
      %2934 = vmatprep.subr.bf16.mxu0 0
      %2935 = vmatpush1.bf16.msra.mxu0 0
      %2936 = vmatprep.subr.bf16.mxu0 0
      %2937 = vmatpush1.bf16.msra.mxu0 0
      %2938 = vmatprep.subr.bf16.mxu0 0
      %2939 = vmatpush1.bf16.msra.mxu0 0
      %2940 = vmatprep.subr.bf16.mxu0 0
      %2941 = vmatpush1.bf16.msra.mxu0 0
      %2942 = vmatprep.subr.bf16.mxu0 0
      %2943 = vmatpush1.bf16.msra.mxu0 0
      %2944 = vmatprep.subr.bf16.mxu0 0
      %2945 = vmatpush1.bf16.msra.mxu0 0
      %2946 = vmatprep.subr.bf16.mxu0 0
      %2947 = vmatpush1.bf16.msra.mxu0 0
      %2948 = vmatprep.subr.bf16.mxu0 0
      %2949 = vmatpush1.bf16.msra.mxu0 0
      %2950 = vmatprep.subr.bf16.mxu0 0
      %2951 = vmatpush1.bf16.msra.mxu0 0
      %2952 = vmatprep.subr.bf16.mxu0 0
      %2953 = vmatpush1.bf16.msra.mxu0 0
      %2954 = vmatprep.subr.bf16.mxu0 0
      %2955 = vmatpush1.bf16.msra.mxu0 0
      %2956 = vmatprep.mubr.bf16.mxu0 0
      %2957 = vmatmul.mubr.bf16.gmra.mrb[0].mxu0 %v2919
      %v2958 = vpop.f32.mrb[0].mxu0
      %v2959 = vadd.f32 %v2904, %v2958
      %v2960 = vpop.f32.mrb[0].mxu0
      %v2961 = vpop.f32.mrb[0].mxu0
      %v2962 = vadd.f32 %v2904, %v2961
      %v2963 = vpop.f32.mrb[0].mxu0
      %2964 = vmatprep.mubr.bf16.mxu0 0
      %2965 = vmatmul.mubr.bf16.gmra.mrb[0].mxu0 %v2922
      %v2966 = vpop.f32.mrb[0].mxu0
      %v2967 = vadd.f32 %v2904, %v2966
      %v2968 = vpop.f32.mrb[0].mxu0
      %v2969 = vpop.f32.mrb[0].mxu0
      %v2970 = vpop.f32.mrb[0].mxu0
      %2971 = vdwg.mxu0
      %v2972 = vmul.f32 %v2959, 0.5
      %v2973 = vmul.f32 %v2962, 0.5
      %v2974 = vmul.f32 %v2967, 0.5
      %v2975 = vmul.f32 %v2959, 0.70710677
      %v2976 = vmul.f32 %v2962, 0.70710677
      %v2977 = vmul.f32 %v2967, 0.70710677
      %v2978 = vand.u32 2147483647, %v2975
      %v2979 = vand.u32 2147483647, %v2976
      %v2980 = vand.u32 2147483647, %v2977
      %v2981 = vmul.f32 %v2978, 0.3275911
      %v2982 = vmul.f32 %v2979, 0.3275911
      %v2983 = vmul.f32 %v2980, 0.3275911
      %v2984 = vadd.f32 %v2981, 1.0
      %v2985 = vadd.f32 %v2982, 1.0
      %v2986 = vadd.f32 %v2983, 1.0
      %v2987 = vrcp.pop %v2984
      %v2988 = vmul.f32 1.0, %v2987
      %v2989 = vrcp.pop %v2985
      %v2990 = vmul.f32 1.0, %v2989
      %v2991 = vrcp.pop %v2986
      %v2992 = vmul.f32 1.0, %v2991
      %v2993 = vmul.f32 %v2988, 1.0614054
      %v2994 = vmul.f32 %v2990, 1.0614054
      %v2995 = vmul.f32 %v2992, 1.0614054
      %v2996 = vadd.f32 %v2993, -1.4531521
      %v2997 = vadd.f32 %v2994, -1.4531521
      %v2998 = vadd.f32 %v2995, -1.4531521
      %v2999 = vmul.f32 %v2996, %v2988
      %v3000 = vmul.f32 %v2997, %v2990
      %v3001 = vmul.f32 %v2998, %v2992
      %v3002 = vadd.f32 %v2999, 1.4214138
      %v3003 = vadd.f32 %v3000, 1.4214138
      %v3004 = vadd.f32 %v3001, 1.4214138
      %v3005 = vmul.f32 %v3002, %v2988
      %v3006 = vmul.f32 %v3003, %v2990
      %v3007 = vmul.f32 %v3004, %v2992
      %v3008 = vadd.f32 %v3005, -0.28449672
      %v3009 = vadd.f32 %v3006, -0.28449672
      %v3010 = vadd.f32 %v3007, -0.28449672
      %v3011 = vmul.f32 %v3008, %v2988
      %v3012 = vmul.f32 %v3009, %v2990
      %v3013 = vmul.f32 %v3010, %v2992
      %v3014 = vadd.f32 %v3011, 0.2548296
      %v3015 = vadd.f32 %v3012, 0.2548296
      %v3016 = vadd.f32 %v3013, 0.2548296
      %v3017 = vmul.f32 %v3014, %v2988
      %v3018 = vmul.f32 %v3015, %v2990
      %v3019 = vmul.f32 %v3016, %v2992
      %v3020 = vsub.f32 0.0, %v2978
      %v3021 = vsub.f32 0.0, %v2979
      %v3022 = vsub.f32 0.0, %v2980
      %v3023 = vmul.f32 %v3020, %v2978
      %v3024 = vmul.f32 %v3021, %v2979
      %v3025 = vmul.f32 %v3022, %v2980
      %v3026 = vmul.f32 %v3023, 1.442695
      %v3027 = vpow.pop %v3026
      %v3028 = vmul.f32 %v3024, 1.442695
      %v3029 = vpow.pop %v3028
      %v3030 = vmul.f32 %v3025, 1.442695
      %v3031 = vpow.pop %v3030
      %v3032 = vmul.f32 %v3017, %v3027
      %v3033 = vmul.f32 %v3018, %v3029
      %v3034 = vmul.f32 %v3019, %v3031
      %v3035 = vsub.f32 1.0, %v3032
      %v3036 = vsub.f32 1.0, %v3033
      %v3037 = vsub.f32 1.0, %v3034
      %vm3038 = vcmp.ge.f32.partialorder %v2975, 0.0
      %vm3039 = vcmp.ge.f32.partialorder %v2976, 0.0
      %vm3040 = vcmp.ge.f32.partialorder %v2977, 0.0
      %v3041 = vsub.f32 0.0, %v3035
      %v3042 = vsub.f32 0.0, %v3036
      %v3043 = vsub.f32 0.0, %v3037
      %v3044 = vsel %vm3038, %v3035, %v3041
      %v3045 = vsel %vm3039, %v3036, %v3042
      %v3046 = vsel %vm3040, %v3037, %v3043
      %v3047 = vadd.f32 %v3044, 1.0
      %v3048 = vadd.f32 %v3045, 1.0
      %v3049 = vadd.f32 %v3046, 1.0
      %v3050 = vmul.f32 %v2972, %v3047
      %v3051 = vmul.f32 %v2973, %v3048
      %v3052 = vmul.f32 %v2974, %v3049
      %v3053 = vpack.c.bf16 %v3051, %v3050
      %v3054 = vpack.c.bf16 %v3052, %v3052
      %s3055 = scalar_lea.vmem %s13, 32
      %v3056 = vld [vmem:[%s3055] sm:$0xf]
      %v3057 = vld [vmem:[%s3055 + $0x4] sm:$0xf]
      %v3058 = vld [vmem:[%s3055 + $0x8] sm:$0xf]
      %v3059 = vld [vmem:[%s3055 + $0xc] sm:$0xf]
      %v3060 = vld [vmem:[%s3055 + $0x10] sm:$0xf]
      %v3061 = vld [vmem:[%s3055 + $0x14] sm:$0xf]
      %v3062 = vld [vmem:[%s3055 + $0x18] sm:$0xf]
      %v3063 = vld [vmem:[%s3055 + $0x1c] sm:$0xf]
      %s3064 = scalar_lea.vmem %s14, 1
      %v3065 = vld [vmem:[%s3064] sm:$0x1]
      %v3067 = vlaneseq
      %v3068 = vshrl.u32 %v3067, 7
      %v3069 = vsub.s32 0, %v3068
      %v3070 = vrot.slane %v3065, %v3069
      %v3080 = vunpack.c.l.b16 %v3056
      %v3081 = vunpack.c.l.b16 %v3057
      %v3082 = vunpack.c.l.b16 %v3058
      %v3083 = vunpack.c.l.b16 %v3059
      %v3084 = vunpack.c.l.b16 %v3060
      %v3085 = vunpack.c.l.b16 %v3061
      %v3086 = vunpack.c.l.b16 %v3062
      %v3087 = vunpack.c.l.b16 %v3063
      %v3088 = vpack.c.b16 %v3081, %v3080
      %v3089 = vpack.c.b16 %v3083, %v3082
      %v3090 = vpack.c.b16 %v3085, %v3084
      %v3091 = vpack.c.b16 %v3087, %v3086
      %v3097 = vsel %vm1838, %v3053, 0
      %v3100 = vsel %vm1838, %v3054, 0
      %3102 = vmatprep.subr.bf16.mxu0 0
      %3103 = vmatpush1.bf16.msra.mxu0 %v3088
      %3104 = vmatprep.subr.bf16.mxu0 0
      %3105 = vmatpush1.bf16.msra.mxu0 %v3089
      %3106 = vmatprep.subr.bf16.mxu0 0
      %3107 = vmatpush1.bf16.msra.mxu0 %v3090
      %3108 = vmatprep.subr.bf16.mxu0 0
      %3109 = vmatpush1.bf16.msra.mxu0 %v3091
      %3110 = vmatprep.subr.bf16.mxu0 0
      %3111 = vmatpush1.bf16.msra.mxu0 0
      %3112 = vmatprep.subr.bf16.mxu0 0
      %3113 = vmatpush1.bf16.msra.mxu0 0
      %3114 = vmatprep.subr.bf16.mxu0 0
      %3115 = vmatpush1.bf16.msra.mxu0 0
      %3116 = vmatprep.subr.bf16.mxu0 0
      %3117 = vmatpush1.bf16.msra.mxu0 0
      %3118 = vmatprep.subr.bf16.mxu0 0
      %3119 = vmatpush1.bf16.msra.mxu0 0
      %3120 = vmatprep.subr.bf16.mxu0 0
      %3121 = vmatpush1.bf16.msra.mxu0 0
      %3122 = vmatprep.subr.bf16.mxu0 0
      %3123 = vmatpush1.bf16.msra.mxu0 0
      %3124 = vmatprep.subr.bf16.mxu0 0
      %3125 = vmatpush1.bf16.msra.mxu0 0
      %3126 = vmatprep.subr.bf16.mxu0 0
      %3127 = vmatpush1.bf16.msra.mxu0 0
      %3128 = vmatprep.subr.bf16.mxu0 0
      %3129 = vmatpush1.bf16.msra.mxu0 0
      %3130 = vmatprep.subr.bf16.mxu0 0
      %3131 = vmatpush1.bf16.msra.mxu0 0
      %3132 = vmatprep.subr.bf16.mxu0 0
      %3133 = vmatpush1.bf16.msra.mxu0 0
      %3134 = vmatprep.mubr.bf16.mxu0 0
      %3135 = vmatmul.mubr.bf16.gmra.mrb[0].mxu0 %v3097
      %v3136 = vpop.f32.mrb[0].mxu0
      %v3137 = vadd.f32 %v3070, %v3136
      %v3138 = vpop.f32.mrb[0].mxu0
      %v3139 = vpop.f32.mrb[0].mxu0
      %v3140 = vadd.f32 %v3070, %v3139
      %v3141 = vpop.f32.mrb[0].mxu0
      %3142 = vmatprep.mubr.bf16.mxu0 0
      %3143 = vmatmul.mubr.bf16.gmra.mrb[0].mxu0 %v3100
      %v3144 = vpop.f32.mrb[0].mxu0
      %v3145 = vadd.f32 %v3070, %v3144
      %v3146 = vpop.f32.mrb[0].mxu0
      %v3147 = vpop.f32.mrb[0].mxu0
      %v3148 = vpop.f32.mrb[0].mxu0
      %3149 = vdwg.mxu0
      %v3150 = vadd.f32 %v2827, %v3137
      %v3151 = vadd.f32 %v2828, %v3140
      %v3152 = vadd.f32 %v2829, %v3145
      %v3153 = vld [vmem:[%s15] sm:$0x1]
      %v3154 = vld [vmem:[%s16] sm:$0x1]
      %v3155 = vsel %vm646, %v3150, 0.0
      %3156 = vadd.xlane.f32.xlu0 %v3155
      %v3157 = vpop.xlane.xlu0 %3156
      %v3158 = vsel %vm646, %v3151, 0.0
      %3159 = vadd.xlane.f32.xlu0 %v3158
      %v3160 = vpop.xlane.xlu0 %3159
      %v3161 = vsel %vm646, %v3152, 0.0
      %3162 = vadd.xlane.f32.xlu0 %v3161
      %v3163 = vpop.xlane.xlu0 %3162
      %v3164 = vmul.f32 %v3157, %v656
      %v3165 = vmul.f32 %v3160, %v656
      %v3166 = vmul.f32 %v3163, %v656
      %v3167 = vsub.f32 %v3150, %v3164
      %v3168 = vsub.f32 %v3151, %v3165
      %v3169 = vsub.f32 %v3152, %v3166
      %v3170 = vmul.f32 %v3167, %v3167
      %v3171 = vmul.f32 %v3168, %v3168
      %v3172 = vmul.f32 %v3169, %v3169
      %v3173 = vsel %vm646, %v3170, 0.0
      %3174 = vadd.xlane.f32.xlu0 %v3173
      %v3175 = vpop.xlane.xlu0 %3174
      %v3176 = vsel %vm646, %v3171, 0.0
      %3177 = vadd.xlane.f32.xlu0 %v3176
      %v3178 = vpop.xlane.xlu0 %3177
      %v3179 = vsel %vm646, %v3172, 0.0
      %3180 = vadd.xlane.f32.xlu0 %v3179
      %v3181 = vpop.xlane.xlu0 %3180
      %v3182 = vmul.f32 %v3175, %v656
      %v3183 = vmul.f32 %v3178, %v656
      %v3184 = vmul.f32 %v3181, %v656
      %v3185 = vadd.f32 %v3182, 1e-06
      %v3186 = vadd.f32 %v3183, 1e-06
      %v3187 = vadd.f32 %v3184, 1e-06
      %v3188 = vrsqrt.pop %v3185
      %v3189 = vrsqrt.pop %v3186
      %v3190 = vrsqrt.pop %v3187
      %v3191 = vmul.f32 %v3167, %v3188
      %v3192 = vmul.f32 %v3168, %v3189
      %v3193 = vmul.f32 %v3169, %v3190
      %v3195 = vlaneseq
      %v3196 = vshrl.u32 %v3195, 7
      %v3197 = vsub.s32 0, %v3196
      %v3198 = vrot.slane %v3153, %v3197
      %v3200 = vmul.f32 %v3191, %v3198
      %v3201 = vmul.f32 %v3192, %v3198
      %v3202 = vmul.f32 %v3193, %v3198
      %v3204 = vlaneseq
      %v3205 = vshrl.u32 %v3204, 7
      %v3206 = vsub.s32 0, %v3205
      %v3207 = vrot.slane %v3154, %v3206
      %v3209 = vadd.f32 %v3200, %v3207
      %v3210 = vadd.f32 %v3201, %v3207
      %v3211 = vadd.f32 %v3202, %v3207
      %3212 = vst.msk [vmem:[%s550] sm:$0xff] %vm646, %v3209
      %3213 = vst.msk [vmem:[%s550 + $0x8] sm:$0xff] %vm646, %v3210
      %3214 = vst.msk [vmem:[%s550 + $0x10] sm:$0xff] %vm646, %v3211
      %s3215 = smul.u32 3, %s28
      %p3216 = scmp.lt.s32.totalorder %s3215, 5
      %s3217 = scalar_select %p3216, %s3215, 5
      %s3218 = smul.addr %s3217, 8
      %s3219 = scalar_lea.vmem %s17, %s3218
      // Predicated region
      $region89: #{vit_backbone_forward.1} parent=87 // pred_check
        %p3220 = pneg %p408
      $region90: #{vit_backbone_forward.1} parent=87 // pred_check_branch
        %3222 = sbr.rel (%p3220) target = $region92
      $region91: #{vit_backbone_forward.1} parent=87 // pred_region
        %s3223 = smul.u32 3, %s28
      $region92: #{vit_backbone_forward.1} parent=87 // pred_fallthru
        _
    $region88: #{vit_backbone_forward.1} parent=5 // pred_fallthru
      _
    %p3224 = scmp.le.s32.totalorder 2, %s23
    // Predicated region
    $region93: #{vit_backbone_forward.1} parent=5 // pred_check
      %p3225 = pneg %p3224
    $region94: #{vit_backbone_forward.1} parent=5 // pred_check_branch
      %3227 = sbr.rel (%p3225) target = $region96
    $region95: #{vit_backbone_forward.1} parent=5 // pred_region
      %s3228 = ssub.s32 %s23, 2
      // Predicated region
      $region97: #{vit_backbone_forward.1} parent=95 // pred_check
        %p3229 = pneg %p414
      $region98: #{vit_backbone_forward.1} parent=95 // pred_check_branch
        %3231 = sbr.rel (%p3229) target = $region100
      $region99: #{vit_backbone_forward.1} parent=95 // pred_region
        %s3232 = smul.u32 3, %s29
        %p3233 = scmp.lt.s32.totalorder %s3232, 5
        %s3234 = scalar_select %p3233, %s3232, 5
        %s3235 = smul.addr %s3234, 8
        %s3236 = scalar_lea.vmem %s17, %s3235
      $region100: #{vit_backbone_forward.1} parent=95 // pred_fallthru
        _
    $region96: #{vit_backbone_forward.1} parent=5 // pred_fallthru
      _
  $region6: #{vit_backbone_forward.1} parent=0 // loop_footer
    %s27 = sadd.s32 1, %s23
  $region7: #{vit_backbone_forward.1} parent=0 // loop_footer_branch
    %22 = sbr.rel target = $region3
  $region8: #{vit_backbone_forward.1} parent=0 // loop_exit
    _

</llo_original>
